<compile_context>
chip_gen: v5e
topology: v5e:2x2
jax: 0.10.0
libtpu: 0.0.40
codegen_flags: <defaults>
</compile_context>

<pallas_src>
import functools

import jax
import jax.numpy as jnp
from jax.experimental import pallas as pl
from jax.experimental.pallas import tpu as pltpu

DILATIONS = (1, 6, 12)
PAD = 16                      # y-padding rows in the VMEM scratch (8-aligned)
ZPAD = max(DILATIONS)         # rows actually readable outside the valid image
MATMUL_DTYPE = jnp.bfloat16   # MXU-native operand dtype; accumulation stays f32


# ---------------------------------------------------------------------------
# Fused Pallas kernel (one grid step = one image of the batch)
# ---------------------------------------------------------------------------

def _msp_kernel(x_ref, w0_ref, wd_ref, wb_ref, wf_ref, sh_ref, o_ref, pad_ref,
                *, h, pad, zpad, dilations):
    """Fused msp forward for one image.

    x_ref  : (H, W*Cin)     f32   input rows, lane index = x*Cin + ci
    w0_ref : (W*Cin, LW)    bf16  c_0 block-diag kron(I_W, w), BN scale folded
    wd_ref : (3, 3*LW, LW)  bf16  per-dilation banded weights (ky blocks stacked)
    wb_ref : (4, LW, LW)    bf16  c5_0, c4_0, c_4, c_5 block-diag weights
    wf_ref : (4*LW, LW)     bf16  fd weights, rows = [fus1|fus2|fus3|x0] blocks,
                                  output lanes zero-padded W*Cout -> LW (=128)
    sh_ref : (9, LW)        f32   tiled BN shifts (row 8 = fd, zero-padded lanes)
    o_ref  : (H, LW)        f32   lane-dense 128-wide output slab
    pad_ref: (H+2*pad, LW)  f32   VMEM scratch: y-zero-padded copy of x0
    """
    f32 = jnp.float32
    mm = MATMUL_DTYPE
    lw = pad_ref.shape[1]                 # W * Cm (lane width of mid activations)

    def cbr(v_mm, w_mm, shift_row):       # bf16 matmul, f32 acc, + shift, ReLU
        y = jnp.dot(v_mm, w_mm, preferred_element_type=f32)
        return jnp.maximum(y + shift_row, 0.0)

    # ---- c_0 : 1x1 conv + BN + ReLU ---------------------------------------
    x0 = cbr(x_ref[...].astype(mm), w0_ref[...], sh_ref[0:1, :])    # (H, LW) f32

    # ---- y-zero-padded copy of x0 for the dilated convs --------------------
    # Only the zpad rows each side that the dilated taps can read are zeroed.
    # Re-written every grid step: under "parallel" semantics each core has its
    # own scratch instance, so a pl.when(program_id==0) guard would be unsafe.
    pad_ref[pad - zpad:pad, :] = jnp.zeros((zpad, lw), f32)
    pad_ref[pad + h:pad + h + zpad, :] = jnp.zeros((zpad, lw), f32)
    pad_ref[pad:pad + h, :] = x0

    x0_mm = x0.astype(mm)

    # ---- loop-invariant operands hoisted out of the unrolled dilation loop -
    wb_c5, wb_c4, wb_m, wb_s = wb_ref[0], wb_ref[1], wb_ref[2], wb_ref[3]
    sh_c5 = sh_ref[4:5, :]
    sh_c4 = sh_ref[5:6, :]
    sh_m = sh_ref[6:7, :]
    sh_s = sh_ref[7:8, :]

    # ---- fd accumulator: x0 row-block first (no [fus*, x0] lane concat) ----
    acc = jnp.dot(x0_mm, wf_ref[3 * lw:4 * lw, :], preferred_element_type=f32)

    # ---- three dilations + sin/cos branches --------------------------------
    for di, d in enumerate(dilations):
        wdi = wd_ref[di]                                   # (3*LW, LW) bf16
        # Dilated 3x3 conv as three accumulating (H,LW)@(LW,LW) dots: x taps and
        # x zero-padding are folded into the banded weights; y taps are read as
        # shifted rows of the padded scratch (no (H, 3*LW) concat materialised).
        xk = jnp.dot(pad_ref[pad - d:pad - d + h, :].astype(mm),
                     wdi[0 * lw:1 * lw, :], preferred_element_type=f32)
        xk = xk + jnp.dot(pad_ref[pad:pad + h, :].astype(mm),
                          wdi[1 * lw:2 * lw, :], preferred_element_type=f32)
        xk = xk + jnp.dot(pad_ref[pad + d:pad + d + h, :].astype(mm),
                          wdi[2 * lw:3 * lw, :], preferred_element_type=f32)
        xk = jnp.maximum(xk + sh_ref[1 + di:2 + di, :], 0.0)

        # TODO(synk): sin/cos lower to VPU polynomials (no EUP path); if bundle
        # dumps show VALU as the binding slot, share one range reduction between
        # sin and cos (cos(x) = sin(x + pi/2)).
        xc = (xk * jnp.cos(xk)).astype(mm)
        xs = (xk * jnp.sin(xk)).astype(mm)
        x_c = cbr(xc, wb_c5, sh_c5)                        # c5_0
        x_s = cbr(xs, wb_c4, sh_c4)                        # c4_0
        mu = cbr((x_s * x_c).astype(mm), wb_m, sh_m)       # c_4
        su = cbr((x_s + x_c).astype(mm), wb_s, sh_s)       # c_5

        # fd row-block for this branch; the branch tensors die right here.
        acc = acc + jnp.dot((su + mu).astype(mm),
                            wf_ref[di * lw:(di + 1) * lw, :],
                            preferred_element_type=f32)

    # ---- fd epilogue: full 128-lane unmasked store --------------------------
    o_ref[...] = jnp.maximum(acc + sh_ref[8:9, :], 0.0)


def msp_forward(x, prep):
    """x: (N, H, W, Cin) NHWC; prep: output of prepare_params()."""
    N, H, W, Cin = x.shape
    lw = prep["w0"].shape[1]              # W * Cm == padded output lane width
    cout = prep["cout"]

    x2d = x.reshape(N * H, W * Cin)       # (N*H, W*Cin) row slabs, image-major
    kernel = functools.partial(_msp_kernel, h=H, pad=PAD, zpad=ZPAD,
                               dilations=DILATIONS)

    grid_spec = pltpu.PrefetchScalarGridSpec(
        num_scalar_prefetch=0,
        grid=(N,),                                         # one image per step
        in_specs=[
            pl.BlockSpec((H, W * Cin), lambda i: (i, 0)),
            # weights: full-array blocks, constant index_map -> stay resident
            pl.BlockSpec(prep["w0"].shape, lambda i: (0, 0)),
            pl.BlockSpec(prep["wd"].shape, lambda i: (0, 0, 0)),
            pl.BlockSpec(prep["wb"].shape, lambda i: (0, 0, 0)),
            pl.BlockSpec(prep["wf"].shape, lambda i: (0, 0)),
            pl.BlockSpec(prep["sh"].shape, lambda i: (0, 0)),
        ],
        out_specs=pl.BlockSpec((H, lw), lambda i: (i, 0)),
        scratch_shapes=[pltpu.VMEM((H + 2 * PAD, lw), jnp.float32)],
    )
    out2d = pl.pallas_call(
        kernel,
        out_shape=jax.ShapeDtypeStruct((N * H, lw), jnp.float32),
        grid_spec=grid_spec,
        compiler_params=pltpu.CompilerParams(
            dimension_semantics=("parallel",)),
    )(x2d, prep["w0"], prep["wd"], prep["wb"], prep["wf"], prep["sh"])
    # slice off the zero-padded output lanes (kept only for unmasked stores)
    return out2d[:, :W * cout].reshape(N, H, W, cout)


# ---------------------------------------------------------------------------
# Parameter preparation (BN folding + lane-dense block-weight construction)
# ---------------------------------------------------------------------------

def fold_bn(gamma, beta, mean, var, eps=1e-5):
    scale = gamma / jnp.sqrt(var + eps)
    shift = beta - mean * scale
    return scale, shift


def prepare_params(params, W):
    """Fold BN scales into conv weights, expand to the lane-dense block layout,
    and cast matmul operands to MATMUL_DTYPE.  Runs entirely outside the kernel."""
    f32 = jnp.float32
    mm = MATMUL_DTYPE
    eye_w = jnp.eye(W, dtype=f32)

    def blk1(w, sc):                        # 1x1 conv -> block-diag, scale folded
        return jnp.kron(eye_w, (w * sc[None, :]).astype(f32)).astype(mm)

    def tshift(sh, width):                  # per-channel shift -> tiled lane row
        t = jnp.tile(sh, W)
        return jnp.pad(t, (0, width - t.shape[0])).astype(f32)

    w0, s0, b0 = params["c_0"]
    cm = w0.shape[1]
    lw = W * cm

    sh_rows = [tshift(b0, lw)]

    wd = []
    for name, d in zip(("dc_1", "dc_2", "dc_3"), DILATIONS):
        w9, sc, bb = params[name]           # (9, cin, cout), tap k = ky*3 + kx
        w9f = w9 * sc[None, None, :]
        ky_mats = []
        for ky in range(3):
            m = jnp.zeros((lw, lw), f32)
            for kx in range(3):
                dx = (kx - 1) * d
                # ones at [x+dx, x]: x-shift + x zero padding folded into the band
                p_dx = jnp.eye(W, k=-dx, dtype=f32)
                m = m + jnp.kron(p_dx, w9f[ky * 3 + kx])
            ky_mats.append(m)
        wd.append(jnp.concatenate(ky_mats, axis=0).astype(mm))   # (3*lw, lw)
        sh_rows.append(tshift(bb, lw))

    wb = []
    for name in ("c5_0", "c4_0", "c_4", "c_5"):
        w, sc, bb = params[name]
        wb.append(blk1(w, sc))
        sh_rows.append(tshift(bb, lw))

    wfd, sfd, bfd = params["fd"]            # (4*cm, cout)
    cout = wfd.shape[1]
    assert W * cout <= lw, "fd output lanes must fit in the padded lane width"
    wff = (wfd * sfd[None, :]).astype(f32)
    blocks = [jnp.kron(eye_w, wff[j * cm:(j + 1) * cm, :]) for j in range(4)]
    wf = jnp.concatenate(blocks, axis=0)                  # (4*lw, W*cout)
    # zero-pad fd output lanes up to lw (=128) -> unmasked 128-lane stores
    wf = jnp.pad(wf, ((0, 0), (0, lw - W * cout))).astype(mm)
    sh_rows.append(tshift(bfd, lw))         # zero-padded beyond W*cout lanes

    return {
        "w0": blk1(w0, s0),             # (W*cin, lw)   bf16
        "wd": jnp.stack(wd),            # (3, 3*lw, lw) bf16
        "wb": jnp.stack(wb),            # (4, lw, lw)   bf16
        "wf": wf,                       # (4*lw, lw)    bf16
        "sh": jnp.stack(sh_rows),       # (9, lw)       f32
        "cout": cout,
    }


# ---------------------------------------------------------------------------
# Synthetic parameter construction (deterministic)
# ---------------------------------------------------------------------------

def init_cbr(key, cin, cout):
    """1x1 conv (no bias) + BN, folded to (w, scale, shift)."""
    k1, k2, k3, k4, k5 = jax.random.split(key, 5)
    w = jax.random.normal(k1, (cin, cout), jnp.float32) * 0.2
    gamma = jax.random.uniform(k2, (cout,), jnp.float32, 0.8, 1.2)
    beta = jax.random.normal(k3, (cout,), jnp.float32) * 0.1
    mean = jax.random.normal(k4, (cout,), jnp.float32) * 0.1
    var = jax.random.uniform(k5, (cout,), jnp.float32, 0.8, 1.2)
    sc, sh = fold_bn(gamma, beta, mean, var)
    return w, sc, sh


def init_db3(key, cin, cout):
    """3x3 conv (no bias) + BN, folded; weight (9, cin, cout)."""
    k1, k2, k3, k4, k5 = jax.random.split(key, 5)
    w = jax.random.normal(k1, (9, cin, cout), jnp.float32) * 0.1
    gamma = jax.random.uniform(k2, (cout,), jnp.float32, 0.8, 1.2)
    beta = jax.random.normal(k3, (cout,), jnp.float32) * 0.1
    mean = jax.random.normal(k4, (cout,), jnp.float32) * 0.1
    var = jax.random.uniform(k5, (cout,), jnp.float32, 0.8, 1.2)
    sc, sh = fold_bn(gamma, beta, mean, var)
    return w, sc, sh


# ---------------------------------------------------------------------------
# Pure-JAX reference (f32 everywhere)
# ---------------------------------------------------------------------------

def _ref_cbr(x, w, sc, sh):
    y = jnp.einsum("nhwc,co->nhwo", x, w)
    return jnp.maximum(y * sc + sh, 0.0)


def _ref_db3(x, w9, sc, sh, d):
    N, H, W, C = x.shape
    xp = jnp.pad(x, ((0, 0), (d, d), (d, d), (0, 0)))
    acc = jnp.zeros((N, H, W, w9.shape[2]), jnp.float32)
    for k in range(9):
        ky, kx = k // 3, k % 3
        patch = xp[:, ky * d:ky * d + H, kx * d:kx * d + W, :]
        acc = acc + jnp.einsum("nhwc,co->nhwo", patch, w9[k])
    return jnp.maximum(acc * sc + sh, 0.0)


def msp_reference(x, params):
    x0 = _ref_cbr(x, *params["c_0"])
    xs = [_ref_db3(x0, *params["dc_1"], d=1),
          _ref_db3(x0, *params["dc_2"], d=6),
          _ref_db3(x0, *params["dc_3"], d=12)]
    fus = []
    for xi in xs:
        x_c = _ref_cbr(xi * jnp.cos(xi), *params["c5_0"])
        x_s = _ref_cbr(xi * jnp.sin(xi), *params["c4_0"])
        m = _ref_cbr(x_s * x_c, *params["c_4"])
        s = _ref_cbr(x_s + x_c, *params["c_5"])
        fus.append(s + m)
    oc = jnp.concatenate(fus + [x0], axis=-1)
    return _ref_cbr(oc, *params["fd"])


# ---------------------------------------------------------------------------

if __name__ == "__main__":
    in_channels = 4
    mid_channels = 8
    N, H, W = 2, 16, 16

    root = jax.random.PRNGKey(0)
    kx, *pkeys = jax.random.split(root, 11)

    params = {
        "c_0":  init_cbr(pkeys[0], in_channels, mid_channels),
        "dc_1": init_db3(pkeys[1], mid_channels, mid_channels),
        "dc_2": init_db3(pkeys[2], mid_channels, mid_channels),
        "dc_3": init_db3(pkeys[3], mid_channels, mid_channels),
        "c4_0": init_cbr(pkeys[4], mid_channels, mid_channels),
        "c5_0": init_cbr(pkeys[5], mid_channels, mid_channels),
        "c_4":  init_cbr(pkeys[6], mid_channels, mid_channels),
        "c_5":  init_cbr(pkeys[7], mid_channels, mid_channels),
        "fd":   init_cbr(pkeys[8], 4 * mid_channels, in_channels),
    }

    # layout: x is NHWC (N, H, W, C) == PyTorch NCHW (2, 4, 16, 16)
    x = jax.random.normal(kx, (N, H, W, in_channels), jnp.float32)

    prep = prepare_params(params, W=W)

    out = msp_forward(x, prep)
    out = jax.block_until_ready(out)

    ref = msp_reference(x, params)
    assert out.shape == (N, H, W, in_channels), out.shape
    # Tolerance loosened vs. the pure-f32 version because matmul operands are
    # bf16 (MXU-native) with f32 accumulation, per the performance review.
    assert jnp.allclose(out, ref, rtol=5e-2, atol=5e-2), (
        float(jnp.max(jnp.abs(out - ref))))

    print("KERNEL_OK")
</pallas_src>

<mosaic_0001>
module attributes {stable_mosaic.version = 11 : i64} {
  func.func @_msp_kernel(%arg0: i32, %arg1: memref<16x64xf32, #tpu.memory_space<vmem>>, %arg2: memref<64x128xbf16, #tpu.memory_space<vmem>>, %arg3: memref<3x384x128xbf16, #tpu.memory_space<vmem>>, %arg4: memref<4x128x128xbf16, #tpu.memory_space<vmem>>, %arg5: memref<512x128xbf16, #tpu.memory_space<vmem>>, %arg6: memref<9x128xf32, #tpu.memory_space<vmem>>, %arg7: memref<16x128xf32, #tpu.memory_space<vmem>>, %arg8: memref<48x128xf32, #tpu.memory_space<vmem>>) attributes {dimension_semantics = [#tpu.dimension_semantics<parallel>], iteration_bounds = array<i64: 2>, scalar_prefetch = 0 : i64, scratch_operands = 1 : i64, tpu.core_type = #tpu.core_type<tc>, window_params = [{transform_indices = @transform_0, window_bounds = array<i64: 16, 64>}, {pipeline_mode = #tpu.pipeline_mode<synchronous>, transform_indices = @transform_1, window_bounds = array<i64: 64, 128>}, {pipeline_mode = #tpu.pipeline_mode<synchronous>, transform_indices = @transform_2, window_bounds = array<i64: 3, 384, 128>}, {pipeline_mode = #tpu.pipeline_mode<synchronous>, transform_indices = @transform_3, window_bounds = array<i64: 4, 128, 128>}, {pipeline_mode = #tpu.pipeline_mode<synchronous>, transform_indices = @transform_4, window_bounds = array<i64: 512, 128>}, {pipeline_mode = #tpu.pipeline_mode<synchronous>, transform_indices = @transform_5, window_bounds = array<i64: 9, 128>}, {transform_indices = @transform_6, window_bounds = array<i64: 16, 128>}]} {
    %c0 = arith.constant 0 : index
    %c0_0 = arith.constant 0 : index
    %0 = vector.load %arg1[%c0, %c0_0] : memref<16x64xf32, #tpu.memory_space<vmem>>, vector<16x64xf32>
    %1 = arith.truncf %0 : vector<16x64xf32> to vector<16x64xbf16>
    %c0_1 = arith.constant 0 : index
    %c0_2 = arith.constant 0 : index
    %2 = vector.load %arg2[%c0_1, %c0_2] : memref<64x128xbf16, #tpu.memory_space<vmem>>, vector<64x128xbf16>
    %c0_3 = arith.constant 0 : index
    %c0_4 = arith.constant 0 : index
    %3 = vector.load %arg6[%c0_3, %c0_4] : memref<9x128xf32, #tpu.memory_space<vmem>>, vector<1x128xf32>
    %cst = arith.constant dense<0.000000e+00> : vector<16x128xf32>
    %4 = tpu.matmul %1, %2, %cst {dimension_numbers = #tpu.dot_dimension_numbers<[1], [0], [0], [1], [0, 0, 1, 1], [], []>} : vector<16x64xbf16>, vector<64x128xbf16>, vector<16x128xf32> -> vector<16x128xf32>
    %5 = vector.broadcast %3 : vector<1x128xf32> to vector<16x128xf32>
    %6 = arith.addf %4, %5 : vector<16x128xf32>
    %cst_5 = arith.constant 0.000000e+00 : f32
    %7 = vector.broadcast %cst_5 : f32 to vector<16x128xf32>
    %8 = arith.maximumf %6, %7 : vector<16x128xf32>
    %cst_6 = arith.constant 0.000000e+00 : f32
    %9 = vector.broadcast %cst_6 : f32 to vector<12x128xf32>
    %c4 = arith.constant 4 : index
    %c0_7 = arith.constant 0 : index
    %10 = vector.load %arg8[%c4, %c0_7] : memref<48x128xf32, #tpu.memory_space<vmem>>, vector<12x128xf32>
    tpu.vector_store %arg8[%c4, %c0_7], %9 {strides = array<i32>} : memref<48x128xf32, #tpu.memory_space<vmem>>, vector<12x128xf32>,
    %cst_8 = arith.constant 0.000000e+00 : f32
    %11 = vector.broadcast %cst_8 : f32 to vector<12x128xf32>
    %c32 = arith.constant 32 : index
    %c0_9 = arith.constant 0 : index
    %12 = vector.load %arg8[%c32, %c0_9] : memref<48x128xf32, #tpu.memory_space<vmem>>, vector<12x128xf32>
    tpu.vector_store %arg8[%c32, %c0_9], %11 {strides = array<i32>} : memref<48x128xf32, #tpu.memory_space<vmem>>, vector<12x128xf32>,
    %c16 = arith.constant 16 : index
    %c0_10 = arith.constant 0 : index
    %13 = vector.load %arg8[%c16, %c0_10] : memref<48x128xf32, #tpu.memory_space<vmem>>, vector<16x128xf32>
    tpu.vector_store %arg8[%c16, %c0_10], %8 {strides = array<i32>} : memref<48x128xf32, #tpu.memory_space<vmem>>, vector<16x128xf32>,
    %14 = arith.truncf %8 : vector<16x128xf32> to vector<16x128xbf16>
    %c0_11 = arith.constant 0 : index
    %c0_12 = arith.constant 0 : index
    %c0_13 = arith.constant 0 : index
    %15 = vector.load %arg4[%c0_11, %c0_12, %c0_13] : memref<4x128x128xbf16, #tpu.memory_space<vmem>>, vector<1x128x128xbf16>
    %16 = vector.shape_cast %15 : vector<1x128x128xbf16> to vector<128x128xbf16>
    %c1 = arith.constant 1 : index
    %c0_14 = arith.constant 0 : index
    %c0_15 = arith.constant 0 : index
    %17 = vector.load %arg4[%c1, %c0_14, %c0_15] : memref<4x128x128xbf16, #tpu.memory_space<vmem>>, vector<1x128x128xbf16>
    %18 = vector.shape_cast %17 : vector<1x128x128xbf16> to vector<128x128xbf16>
    %c2 = arith.constant 2 : index
    %c0_16 = arith.constant 0 : index
    %c0_17 = arith.constant 0 : index
    %19 = vector.load %arg4[%c2, %c0_16, %c0_17] : memref<4x128x128xbf16, #tpu.memory_space<vmem>>, vector<1x128x128xbf16>
    %20 = vector.shape_cast %19 : vector<1x128x128xbf16> to vector<128x128xbf16>
    %c3 = arith.constant 3 : index
    %c0_18 = arith.constant 0 : index
    %c0_19 = arith.constant 0 : index
    %21 = vector.load %arg4[%c3, %c0_18, %c0_19] : memref<4x128x128xbf16, #tpu.memory_space<vmem>>, vector<1x128x128xbf16>
    %22 = vector.shape_cast %21 : vector<1x128x128xbf16> to vector<128x128xbf16>
    %c4_20 = arith.constant 4 : index
    %c0_21 = arith.constant 0 : index
    %23 = vector.load %arg6[%c4_20, %c0_21] : memref<9x128xf32, #tpu.memory_space<vmem>>, vector<1x128xf32>
    %c5 = arith.constant 5 : index
    %c0_22 = arith.constant 0 : index
    %24 = vector.load %arg6[%c5, %c0_22] : memref<9x128xf32, #tpu.memory_space<vmem>>, vector<1x128xf32>
    %c6 = arith.constant 6 : index
    %c0_23 = arith.constant 0 : index
    %25 = vector.load %arg6[%c6, %c0_23] : memref<9x128xf32, #tpu.memory_space<vmem>>, vector<1x128xf32>
    %c7 = arith.constant 7 : index
    %c0_24 = arith.constant 0 : index
    %26 = vector.load %arg6[%c7, %c0_24] : memref<9x128xf32, #tpu.memory_space<vmem>>, vector<1x128xf32>
    %c384 = arith.constant 384 : index
    %c0_25 = arith.constant 0 : index
    %27 = vector.load %arg5[%c384, %c0_25] : memref<512x128xbf16, #tpu.memory_space<vmem>>, vector<128x128xbf16>
    %cst_26 = arith.constant dense<0.000000e+00> : vector<16x128xf32>
    %28 = tpu.matmul %14, %27, %cst_26 {dimension_numbers = #tpu.dot_dimension_numbers<[1], [0], [0], [1], [0, 0, 1, 1], [], []>} : vector<16x128xbf16>, vector<128x128xbf16>, vector<16x128xf32> -> vector<16x128xf32>
    %c0_27 = arith.constant 0 : index
    %c0_28 = arith.constant 0 : index
    %c0_29 = arith.constant 0 : index
    %29 = vector.load %arg3[%c0_27, %c0_28, %c0_29] : memref<3x384x128xbf16, #tpu.memory_space<vmem>>, vector<1x384x128xbf16>
    %30 = vector.shape_cast %29 : vector<1x384x128xbf16> to vector<384x128xbf16>
    %c15 = arith.constant 15 : index
    %c0_30 = arith.constant 0 : index
    %31 = vector.load %arg8[%c15, %c0_30] : memref<48x128xf32, #tpu.memory_space<vmem>>, vector<16x128xf32>
    %32 = arith.truncf %31 : vector<16x128xf32> to vector<16x128xbf16>
    %33 = vector.extract_strided_slice %30 {offsets = [0, 0], sizes = [128, 128], strides = [1, 1]} : vector<384x128xbf16> to vector<128x128xbf16>
    %cst_31 = arith.constant dense<0.000000e+00> : vector<16x128xf32>
    %34 = tpu.matmul %32, %33, %cst_31 {dimension_numbers = #tpu.dot_dimension_numbers<[1], [0], [0], [1], [0, 0, 1, 1], [], []>} : vector<16x128xbf16>, vector<128x128xbf16>, vector<16x128xf32> -> vector<16x128xf32>
    %c16_32 = arith.constant 16 : index
    %c0_33 = arith.constant 0 : index
    %35 = vector.load %arg8[%c16_32, %c0_33] : memref<48x128xf32, #tpu.memory_space<vmem>>, vector<16x128xf32>
    %36 = arith.truncf %35 : vector<16x128xf32> to vector<16x128xbf16>
    %37 = vector.extract_strided_slice %30 {offsets = [128, 0], sizes = [128, 128], strides = [1, 1]} : vector<384x128xbf16> to vector<128x128xbf16>
    %cst_34 = arith.constant dense<0.000000e+00> : vector<16x128xf32>
    %38 = tpu.matmul %36, %37, %cst_34 {dimension_numbers = #tpu.dot_dimension_numbers<[1], [0], [0], [1], [0, 0, 1, 1], [], []>} : vector<16x128xbf16>, vector<128x128xbf16>, vector<16x128xf32> -> vector<16x128xf32>
    %39 = arith.addf %34, %38 : vector<16x128xf32>
    %c17 = arith.constant 17 : index
    %c0_35 = arith.constant 0 : index
    %40 = vector.load %arg8[%c17, %c0_35] : memref<48x128xf32, #tpu.memory_space<vmem>>, vector<16x128xf32>
    %41 = arith.truncf %40 : vector<16x128xf32> to vector<16x128xbf16>
    %42 = vector.extract_strided_slice %30 {offsets = [256, 0], sizes = [128, 128], strides = [1, 1]} : vector<384x128xbf16> to vector<128x128xbf16>
    %cst_36 = arith.constant dense<0.000000e+00> : vector<16x128xf32>
    %43 = tpu.matmul %41, %42, %cst_36 {dimension_numbers = #tpu.dot_dimension_numbers<[1], [0], [0], [1], [0, 0, 1, 1], [], []>} : vector<16x128xbf16>, vector<128x128xbf16>, vector<16x128xf32> -> vector<16x128xf32>
    %44 = arith.addf %39, %43 : vector<16x128xf32>
    %c1_37 = arith.constant 1 : index
    %c0_38 = arith.constant 0 : index
    %45 = vector.load %arg6[%c1_37, %c0_38] : memref<9x128xf32, #tpu.memory_space<vmem>>, vector<1x128xf32>
    %46 = vector.broadcast %45 : vector<1x128xf32> to vector<16x128xf32>
    %47 = arith.addf %44, %46 : vector<16x128xf32>
    %cst_39 = arith.constant 0.000000e+00 : f32
    %48 = vector.broadcast %cst_39 : f32 to vector<16x128xf32>
    %49 = arith.maximumf %47, %48 : vector<16x128xf32>
    %50 = math.cos %49 : vector<16x128xf32>
    %51 = arith.mulf %49, %50 : vector<16x128xf32>
    %52 = arith.truncf %51 : vector<16x128xf32> to vector<16x128xbf16>
    %53 = math.sin %49 : vector<16x128xf32>
    %54 = arith.mulf %49, %53 : vector<16x128xf32>
    %55 = arith.truncf %54 : vector<16x128xf32> to vector<16x128xbf16>
    %cst_40 = arith.constant dense<0.000000e+00> : vector<16x128xf32>
    %56 = tpu.matmul %52, %16, %cst_40 {dimension_numbers = #tpu.dot_dimension_numbers<[1], [0], [0], [1], [0, 0, 1, 1], [], []>} : vector<16x128xbf16>, vector<128x128xbf16>, vector<16x128xf32> -> vector<16x128xf32>
    %57 = vector.broadcast %23 : vector<1x128xf32> to vector<16x128xf32>
    %58 = arith.addf %56, %57 : vector<16x128xf32>
    %cst_41 = arith.constant 0.000000e+00 : f32
    %59 = vector.broadcast %cst_41 : f32 to vector<16x128xf32>
    %60 = arith.maximumf %58, %59 : vector<16x128xf32>
    %cst_42 = arith.constant dense<0.000000e+00> : vector<16x128xf32>
    %61 = tpu.matmul %55, %18, %cst_42 {dimension_numbers = #tpu.dot_dimension_numbers<[1], [0], [0], [1], [0, 0, 1, 1], [], []>} : vector<16x128xbf16>, vector<128x128xbf16>, vector<16x128xf32> -> vector<16x128xf32>
    %62 = vector.broadcast %24 : vector<1x128xf32> to vector<16x128xf32>
    %63 = arith.addf %61, %62 : vector<16x128xf32>
    %cst_43 = arith.constant 0.000000e+00 : f32
    %64 = vector.broadcast %cst_43 : f32 to vector<16x128xf32>
    %65 = arith.maximumf %63, %64 : vector<16x128xf32>
    %66 = arith.mulf %65, %60 : vector<16x128xf32>
    %67 = arith.truncf %66 : vector<16x128xf32> to vector<16x128xbf16>
    %cst_44 = arith.constant dense<0.000000e+00> : vector<16x128xf32>
    %68 = tpu.matmul %67, %20, %cst_44 {dimension_numbers = #tpu.dot_dimension_numbers<[1], [0], [0], [1], [0, 0, 1, 1], [], []>} : vector<16x128xbf16>, vector<128x128xbf16>, vector<16x128xf32> -> vector<16x128xf32>
    %69 = vector.broadcast %25 : vector<1x128xf32> to vector<16x128xf32>
    %70 = arith.addf %68, %69 : vector<16x128xf32>
    %cst_45 = arith.constant 0.000000e+00 : f32
    %71 = vector.broadcast %cst_45 : f32 to vector<16x128xf32>
    %72 = arith.maximumf %70, %71 : vector<16x128xf32>
    %73 = arith.addf %65, %60 : vector<16x128xf32>
    %74 = arith.truncf %73 : vector<16x128xf32> to vector<16x128xbf16>
    %cst_46 = arith.constant dense<0.000000e+00> : vector<16x128xf32>
    %75 = tpu.matmul %74, %22, %cst_46 {dimension_numbers = #tpu.dot_dimension_numbers<[1], [0], [0], [1], [0, 0, 1, 1], [], []>} : vector<16x128xbf16>, vector<128x128xbf16>, vector<16x128xf32> -> vector<16x128xf32>
    %76 = vector.broadcast %26 : vector<1x128xf32> to vector<16x128xf32>
    %77 = arith.addf %75, %76 : vector<16x128xf32>
    %cst_47 = arith.constant 0.000000e+00 : f32
    %78 = vector.broadcast %cst_47 : f32 to vector<16x128xf32>
    %79 = arith.maximumf %77, %78 : vector<16x128xf32>
    %80 = arith.addf %79, %72 : vector<16x128xf32>
    %81 = arith.truncf %80 : vector<16x128xf32> to vector<16x128xbf16>
    %c0_48 = arith.constant 0 : index
    %c0_49 = arith.constant 0 : index
    %82 = vector.load %arg5[%c0_48, %c0_49] : memref<512x128xbf16, #tpu.memory_space<vmem>>, vector<128x128xbf16>
    %cst_50 = arith.constant dense<0.000000e+00> : vector<16x128xf32>
    %83 = tpu.matmul %81, %82, %cst_50 {dimension_numbers = #tpu.dot_dimension_numbers<[1], [0], [0], [1], [0, 0, 1, 1], [], []>} : vector<16x128xbf16>, vector<128x128xbf16>, vector<16x128xf32> -> vector<16x128xf32>
    %84 = arith.addf %28, %83 : vector<16x128xf32>
    %c1_51 = arith.constant 1 : index
    %c0_52 = arith.constant 0 : index
    %c0_53 = arith.constant 0 : index
    %85 = vector.load %arg3[%c1_51, %c0_52, %c0_53] : memref<3x384x128xbf16, #tpu.memory_space<vmem>>, vector<1x384x128xbf16>
    %86 = vector.shape_cast %85 : vector<1x384x128xbf16> to vector<384x128xbf16>
    %c10 = arith.constant 10 : index
    %c0_54 = arith.constant 0 : index
    %87 = vector.load %arg8[%c10, %c0_54] : memref<48x128xf32, #tpu.memory_space<vmem>>, vector<16x128xf32>
    %88 = arith.truncf %87 : vector<16x128xf32> to vector<16x128xbf16>
    %89 = vector.extract_strided_slice %86 {offsets = [0, 0], sizes = [128, 128], strides = [1, 1]} : vector<384x128xbf16> to vector<128x128xbf16>
    %cst_55 = arith.constant dense<0.000000e+00> : vector<16x128xf32>
    %90 = tpu.matmul %88, %89, %cst_55 {dimension_numbers = #tpu.dot_dimension_numbers<[1], [0], [0], [1], [0, 0, 1, 1], [], []>} : vector<16x128xbf16>, vector<128x128xbf16>, vector<16x128xf32> -> vector<16x128xf32>
    %c16_56 = arith.constant 16 : index
    %c0_57 = arith.constant 0 : index
    %91 = vector.load %arg8[%c16_56, %c0_57] : memref<48x128xf32, #tpu.memory_space<vmem>>, vector<16x128xf32>
    %92 = arith.truncf %91 : vector<16x128xf32> to vector<16x128xbf16>
    %93 = vector.extract_strided_slice %86 {offsets = [128, 0], sizes = [128, 128], strides = [1, 1]} : vector<384x128xbf16> to vector<128x128xbf16>
    %cst_58 = arith.constant dense<0.000000e+00> : vector<16x128xf32>
    %94 = tpu.matmul %92, %93, %cst_58 {dimension_numbers = #tpu.dot_dimension_numbers<[1], [0], [0], [1], [0, 0, 1, 1], [], []>} : vector<16x128xbf16>, vector<128x128xbf16>, vector<16x128xf32> -> vector<16x128xf32>
    %95 = arith.addf %90, %94 : vector<16x128xf32>
    %c22 = arith.constant 22 : index
    %c0_59 = arith.constant 0 : index
    %96 = vector.load %arg8[%c22, %c0_59] : memref<48x128xf32, #tpu.memory_space<vmem>>, vector<16x128xf32>
    %97 = arith.truncf %96 : vector<16x128xf32> to vector<16x128xbf16>
    %98 = vector.extract_strided_slice %86 {offsets = [256, 0], sizes = [128, 128], strides = [1, 1]} : vector<384x128xbf16> to vector<128x128xbf16>
    %cst_60 = arith.constant dense<0.000000e+00> : vector<16x128xf32>
    %99 = tpu.matmul %97, %98, %cst_60 {dimension_numbers = #tpu.dot_dimension_numbers<[1], [0], [0], [1], [0, 0, 1, 1], [], []>} : vector<16x128xbf16>, vector<128x128xbf16>, vector<16x128xf32> -> vector<16x128xf32>
    %100 = arith.addf %95, %99 : vector<16x128xf32>
    %c2_61 = arith.constant 2 : index
    %c0_62 = arith.constant 0 : index
    %101 = vector.load %arg6[%c2_61, %c0_62] : memref<9x128xf32, #tpu.memory_space<vmem>>, vector<1x128xf32>
    %102 = vector.broadcast %101 : vector<1x128xf32> to vector<16x128xf32>
    %103 = arith.addf %100, %102 : vector<16x128xf32>
    %cst_63 = arith.constant 0.000000e+00 : f32
    %104 = vector.broadcast %cst_63 : f32 to vector<16x128xf32>
    %105 = arith.maximumf %103, %104 : vector<16x128xf32>
    %106 = math.cos %105 : vector<16x128xf32>
    %107 = arith.mulf %105, %106 : vector<16x128xf32>
    %108 = arith.truncf %107 : vector<16x128xf32> to vector<16x128xbf16>
    %109 = math.sin %105 : vector<16x128xf32>
    %110 = arith.mulf %105, %109 : vector<16x128xf32>
    %111 = arith.truncf %110 : vector<16x128xf32> to vector<16x128xbf16>
    %cst_64 = arith.constant dense<0.000000e+00> : vector<16x128xf32>
    %112 = tpu.matmul %108, %16, %cst_64 {dimension_numbers = #tpu.dot_dimension_numbers<[1], [0], [0], [1], [0, 0, 1, 1], [], []>} : vector<16x128xbf16>, vector<128x128xbf16>, vector<16x128xf32> -> vector<16x128xf32>
    %113 = vector.broadcast %23 : vector<1x128xf32> to vector<16x128xf32>
    %114 = arith.addf %112, %113 : vector<16x128xf32>
    %cst_65 = arith.constant 0.000000e+00 : f32
    %115 = vector.broadcast %cst_65 : f32 to vector<16x128xf32>
    %116 = arith.maximumf %114, %115 : vector<16x128xf32>
    %cst_66 = arith.constant dense<0.000000e+00> : vector<16x128xf32>
    %117 = tpu.matmul %111, %18, %cst_66 {dimension_numbers = #tpu.dot_dimension_numbers<[1], [0], [0], [1], [0, 0, 1, 1], [], []>} : vector<16x128xbf16>, vector<128x128xbf16>, vector<16x128xf32> -> vector<16x128xf32>
    %118 = vector.broadcast %24 : vector<1x128xf32> to vector<16x128xf32>
    %119 = arith.addf %117, %118 : vector<16x128xf32>
    %cst_67 = arith.constant 0.000000e+00 : f32
    %120 = vector.broadcast %cst_67 : f32 to vector<16x128xf32>
    %121 = arith.maximumf %119, %120 : vector<16x128xf32>
    %122 = arith.mulf %121, %116 : vector<16x128xf32>
    %123 = arith.truncf %122 : vector<16x128xf32> to vector<16x128xbf16>
    %cst_68 = arith.constant dense<0.000000e+00> : vector<16x128xf32>
    %124 = tpu.matmul %123, %20, %cst_68 {dimension_numbers = #tpu.dot_dimension_numbers<[1], [0], [0], [1], [0, 0, 1, 1], [], []>} : vector<16x128xbf16>, vector<128x128xbf16>, vector<16x128xf32> -> vector<16x128xf32>
    %125 = vector.broadcast %25 : vector<1x128xf32> to vector<16x128xf32>
    %126 = arith.addf %124, %125 : vector<16x128xf32>
    %cst_69 = arith.constant 0.000000e+00 : f32
    %127 = vector.broadcast %cst_69 : f32 to vector<16x128xf32>
    %128 = arith.maximumf %126, %127 : vector<16x128xf32>
    %129 = arith.addf %121, %116 : vector<16x128xf32>
    %130 = arith.truncf %129 : vector<16x128xf32> to vector<16x128xbf16>
    %cst_70 = arith.constant dense<0.000000e+00> : vector<16x128xf32>
    %131 = tpu.matmul %130, %22, %cst_70 {dimension_numbers = #tpu.dot_dimension_numbers<[1], [0], [0], [1], [0, 0, 1, 1], [], []>} : vector<16x128xbf16>, vector<128x128xbf16>, vector<16x128xf32> -> vector<16x128xf32>
    %132 = vector.broadcast %26 : vector<1x128xf32> to vector<16x128xf32>
    %133 = arith.addf %131, %132 : vector<16x128xf32>
    %cst_71 = arith.constant 0.000000e+00 : f32
    %134 = vector.broadcast %cst_71 : f32 to vector<16x128xf32>
    %135 = arith.maximumf %133, %134 : vector<16x128xf32>
    %136 = arith.addf %135, %128 : vector<16x128xf32>
    %137 = arith.truncf %136 : vector<16x128xf32> to vector<16x128xbf16>
    %c128 = arith.constant 128 : index
    %c0_72 = arith.constant 0 : index
    %138 = vector.load %arg5[%c128, %c0_72] : memref<512x128xbf16, #tpu.memory_space<vmem>>, vector<128x128xbf16>
    %cst_73 = arith.constant dense<0.000000e+00> : vector<16x128xf32>
    %139 = tpu.matmul %137, %138, %cst_73 {dimension_numbers = #tpu.dot_dimension_numbers<[1], [0], [0], [1], [0, 0, 1, 1], [], []>} : vector<16x128xbf16>, vector<128x128xbf16>, vector<16x128xf32> -> vector<16x128xf32>
    %140 = arith.addf %84, %139 : vector<16x128xf32>
    %c2_74 = arith.constant 2 : index
    %c0_75 = arith.constant 0 : index
    %c0_76 = arith.constant 0 : index
    %141 = vector.load %arg3[%c2_74, %c0_75, %c0_76] : memref<3x384x128xbf16, #tpu.memory_space<vmem>>, vector<1x384x128xbf16>
    %142 = vector.shape_cast %141 : vector<1x384x128xbf16> to vector<384x128xbf16>
    %c4_77 = arith.constant 4 : index
    %c0_78 = arith.constant 0 : index
    %143 = vector.load %arg8[%c4_77, %c0_78] : memref<48x128xf32, #tpu.memory_space<vmem>>, vector<16x128xf32>
    %144 = arith.truncf %143 : vector<16x128xf32> to vector<16x128xbf16>
    %145 = vector.extract_strided_slice %142 {offsets = [0, 0], sizes = [128, 128], strides = [1, 1]} : vector<384x128xbf16> to vector<128x128xbf16>
    %cst_79 = arith.constant dense<0.000000e+00> : vector<16x128xf32>
    %146 = tpu.matmul %144, %145, %cst_79 {dimension_numbers = #tpu.dot_dimension_numbers<[1], [0], [0], [1], [0, 0, 1, 1], [], []>} : vector<16x128xbf16>, vector<128x128xbf16>, vector<16x128xf32> -> vector<16x128xf32>
    %c16_80 = arith.constant 16 : index
    %c0_81 = arith.constant 0 : index
    %147 = vector.load %arg8[%c16_80, %c0_81] : memref<48x128xf32, #tpu.memory_space<vmem>>, vector<16x128xf32>
    %148 = arith.truncf %147 : vector<16x128xf32> to vector<16x128xbf16>
    %149 = vector.extract_strided_slice %142 {offsets = [128, 0], sizes = [128, 128], strides = [1, 1]} : vector<384x128xbf16> to vector<128x128xbf16>
    %cst_82 = arith.constant dense<0.000000e+00> : vector<16x128xf32>
    %150 = tpu.matmul %148, %149, %cst_82 {dimension_numbers = #tpu.dot_dimension_numbers<[1], [0], [0], [1], [0, 0, 1, 1], [], []>} : vector<16x128xbf16>, vector<128x128xbf16>, vector<16x128xf32> -> vector<16x128xf32>
    %151 = arith.addf %146, %150 : vector<16x128xf32>
    %c28 = arith.constant 28 : index
    %c0_83 = arith.constant 0 : index
    %152 = vector.load %arg8[%c28, %c0_83] : memref<48x128xf32, #tpu.memory_space<vmem>>, vector<16x128xf32>
    %153 = arith.truncf %152 : vector<16x128xf32> to vector<16x128xbf16>
    %154 = vector.extract_strided_slice %142 {offsets = [256, 0], sizes = [128, 128], strides = [1, 1]} : vector<384x128xbf16> to vector<128x128xbf16>
    %cst_84 = arith.constant dense<0.000000e+00> : vector<16x128xf32>
    %155 = tpu.matmul %153, %154, %cst_84 {dimension_numbers = #tpu.dot_dimension_numbers<[1], [0], [0], [1], [0, 0, 1, 1], [], []>} : vector<16x128xbf16>, vector<128x128xbf16>, vector<16x128xf32> -> vector<16x128xf32>
    %156 = arith.addf %151, %155 : vector<16x128xf32>
    %c3_85 = arith.constant 3 : index
    %c0_86 = arith.constant 0 : index
    %157 = vector.load %arg6[%c3_85, %c0_86] : memref<9x128xf32, #tpu.memory_space<vmem>>, vector<1x128xf32>
    %158 = vector.broadcast %157 : vector<1x128xf32> to vector<16x128xf32>
    %159 = arith.addf %156, %158 : vector<16x128xf32>
    %cst_87 = arith.constant 0.000000e+00 : f32
    %160 = vector.broadcast %cst_87 : f32 to vector<16x128xf32>
    %161 = arith.maximumf %159, %160 : vector<16x128xf32>
    %162 = math.cos %161 : vector<16x128xf32>
    %163 = arith.mulf %161, %162 : vector<16x128xf32>
    %164 = arith.truncf %163 : vector<16x128xf32> to vector<16x128xbf16>
    %165 = math.sin %161 : vector<16x128xf32>
    %166 = arith.mulf %161, %165 : vector<16x128xf32>
    %167 = arith.truncf %166 : vector<16x128xf32> to vector<16x128xbf16>
    %cst_88 = arith.constant dense<0.000000e+00> : vector<16x128xf32>
    %168 = tpu.matmul %164, %16, %cst_88 {dimension_numbers = #tpu.dot_dimension_numbers<[1], [0], [0], [1], [0, 0, 1, 1], [], []>} : vector<16x128xbf16>, vector<128x128xbf16>, vector<16x128xf32> -> vector<16x128xf32>
    %169 = vector.broadcast %23 : vector<1x128xf32> to vector<16x128xf32>
    %170 = arith.addf %168, %169 : vector<16x128xf32>
    %cst_89 = arith.constant 0.000000e+00 : f32
    %171 = vector.broadcast %cst_89 : f32 to vector<16x128xf32>
    %172 = arith.maximumf %170, %171 : vector<16x128xf32>
    %cst_90 = arith.constant dense<0.000000e+00> : vector<16x128xf32>
    %173 = tpu.matmul %167, %18, %cst_90 {dimension_numbers = #tpu.dot_dimension_numbers<[1], [0], [0], [1], [0, 0, 1, 1], [], []>} : vector<16x128xbf16>, vector<128x128xbf16>, vector<16x128xf32> -> vector<16x128xf32>
    %174 = vector.broadcast %24 : vector<1x128xf32> to vector<16x128xf32>
    %175 = arith.addf %173, %174 : vector<16x128xf32>
    %cst_91 = arith.constant 0.000000e+00 : f32
    %176 = vector.broadcast %cst_91 : f32 to vector<16x128xf32>
    %177 = arith.maximumf %175, %176 : vector<16x128xf32>
    %178 = arith.mulf %177, %172 : vector<16x128xf32>
    %179 = arith.truncf %178 : vector<16x128xf32> to vector<16x128xbf16>
    %cst_92 = arith.constant dense<0.000000e+00> : vector<16x128xf32>
    %180 = tpu.matmul %179, %20, %cst_92 {dimension_numbers = #tpu.dot_dimension_numbers<[1], [0], [0], [1], [0, 0, 1, 1], [], []>} : vector<16x128xbf16>, vector<128x128xbf16>, vector<16x128xf32> -> vector<16x128xf32>
    %181 = vector.broadcast %25 : vector<1x128xf32> to vector<16x128xf32>
    %182 = arith.addf %180, %181 : vector<16x128xf32>
    %cst_93 = arith.constant 0.000000e+00 : f32
    %183 = vector.broadcast %cst_93 : f32 to vector<16x128xf32>
    %184 = arith.maximumf %182, %183 : vector<16x128xf32>
    %185 = arith.addf %177, %172 : vector<16x128xf32>
    %186 = arith.truncf %185 : vector<16x128xf32> to vector<16x128xbf16>
    %cst_94 = arith.constant dense<0.000000e+00> : vector<16x128xf32>
    %187 = tpu.matmul %186, %22, %cst_94 {dimension_numbers = #tpu.dot_dimension_numbers<[1], [0], [0], [1], [0, 0, 1, 1], [], []>} : vector<16x128xbf16>, vector<128x128xbf16>, vector<16x128xf32> -> vector<16x128xf32>
    %188 = vector.broadcast %26 : vector<1x128xf32> to vector<16x128xf32>
    %189 = arith.addf %187, %188 : vector<16x128xf32>
    %cst_95 = arith.constant 0.000000e+00 : f32
    %190 = vector.broadcast %cst_95 : f32 to vector<16x128xf32>
    %191 = arith.maximumf %189, %190 : vector<16x128xf32>
    %192 = arith.addf %191, %184 : vector<16x128xf32>
    %193 = arith.truncf %192 : vector<16x128xf32> to vector<16x128xbf16>
    %c256 = arith.constant 256 : index
    %c0_96 = arith.constant 0 : index
    %194 = vector.load %arg5[%c256, %c0_96] : memref<512x128xbf16, #tpu.memory_space<vmem>>, vector<128x128xbf16>
    %cst_97 = arith.constant dense<0.000000e+00> : vector<16x128xf32>
    %195 = tpu.matmul %193, %194, %cst_97 {dimension_numbers = #tpu.dot_dimension_numbers<[1], [0], [0], [1], [0, 0, 1, 1], [], []>} : vector<16x128xbf16>, vector<128x128xbf16>, vector<16x128xf32> -> vector<16x128xf32>
    %196 = arith.addf %140, %195 : vector<16x128xf32>
    %c8 = arith.constant 8 : index
    %c0_98 = arith.constant 0 : index
    %197 = vector.load %arg6[%c8, %c0_98] : memref<9x128xf32, #tpu.memory_space<vmem>>, vector<1x128xf32>
    %198 = vector.broadcast %197 : vector<1x128xf32> to vector<16x128xf32>
    %199 = arith.addf %196, %198 : vector<16x128xf32>
    %cst_99 = arith.constant 0.000000e+00 : f32
    %200 = vector.broadcast %cst_99 : f32 to vector<16x128xf32>
    %201 = arith.maximumf %199, %200 : vector<16x128xf32>
    %c0_100 = arith.constant 0 : index
    %c0_101 = arith.constant 0 : index
    %202 = vector.load %arg7[%c0_100, %c0_101] : memref<16x128xf32, #tpu.memory_space<vmem>>, vector<16x128xf32>
    tpu.vector_store %arg7[%c0_100, %c0_101], %201 {strides = array<i32>} : memref<16x128xf32, #tpu.memory_space<vmem>>, vector<16x128xf32>,
    return
  }
  func.func @transform_0(%arg0: i32) -> (i32, i32) {
    %c0_i32 = arith.constant 0 : i32
    %c0_i32_0 = arith.constant 0 : i32
    return %arg0, %c0_i32 : i32, i32
  }
  func.func @transform_1(%arg0: i32) -> (i32, i32) {
    %c0_i32 = arith.constant 0 : i32
    %c0_i32_0 = arith.constant 0 : i32
    %c0_i32_1 = arith.constant 0 : i32
    return %c0_i32, %c0_i32_0 : i32, i32
  }
  func.func @transform_2(%arg0: i32) -> (i32, i32, i32) {
    %c0_i32 = arith.constant 0 : i32
    %c0_i32_0 = arith.constant 0 : i32
    %c0_i32_1 = arith.constant 0 : i32
    %c0_i32_2 = arith.constant 0 : i32
    return %c0_i32, %c0_i32_0, %c0_i32_1 : i32, i32, i32
  }
  func.func @transform_3(%arg0: i32) -> (i32, i32, i32) {
    %c0_i32 = arith.constant 0 : i32
    %c0_i32_0 = arith.constant 0 : i32
    %c0_i32_1 = arith.constant 0 : i32
    %c0_i32_2 = arith.constant 0 : i32
    return %c0_i32, %c0_i32_0, %c0_i32_1 : i32, i32, i32
  }
  func.func @transform_4(%arg0: i32) -> (i32, i32) {
    %c0_i32 = arith.constant 0 : i32
    %c0_i32_0 = arith.constant 0 : i32
    %c0_i32_1 = arith.constant 0 : i32
    return %c0_i32, %c0_i32_0 : i32, i32
  }
  func.func @transform_5(%arg0: i32) -> (i32, i32) {
    %c0_i32 = arith.constant 0 : i32
    %c0_i32_0 = arith.constant 0 : i32
    %c0_i32_1 = arith.constant 0 : i32
    return %c0_i32, %c0_i32_0 : i32, i32
  }
  func.func @transform_6(%arg0: i32) -> (i32, i32) {
    %c0_i32 = arith.constant 0 : i32
    %c0_i32_0 = arith.constant 0 : i32
    return %arg0, %c0_i32 : i32, i32
  }
}

</mosaic_0001>

<llo_original>
// kernel: tpu_custom_call.1
$region0: #{tpu_custom_call.1}
  #allocation0 [shape = 'u32[]', space=smem, size = 0x4, offset = 0x4, fixed_abs, tag = 'smem constant byte address 0x4 - core index']
  #allocation1 [shape = 'u32[72,128]{1,0:T(1,128)}', space=vmem, size = 0x9000, scoped, tag = 'internal scratch']
  #allocation2 [shape = 'f32[48,128]{1,0:T(8,128)}', space=vmem, size = 0x6000, scoped, tag = 'scratch operand']
  %s0 = inlined_call_operand.hbm [shape: f32[32,64], index: 0, kind: input, shape index: {}]
  %s1 = inlined_call_operand.hbm [shape: bf16[64,128], index: 1, kind: input, shape index: {}]
  %s2 = inlined_call_operand.hbm [shape: bf16[3,384,128], index: 2, kind: input, shape index: {}]
  %s3 = inlined_call_operand.hbm [shape: bf16[4,128,128], index: 3, kind: input, shape index: {}]
  %s4 = inlined_call_operand.hbm [shape: bf16[512,128], index: 4, kind: input, shape index: {}]
  %s5 = inlined_call_operand.hbm [shape: f32[9,128], index: 5, kind: input, shape index: {}]
  %s6 = inlined_call_operand.hbm [shape: f32[32,128], index: 6, kind: output, shape index: {}]
  %s7 = sld [smem:[#allocation0]]
  $region81: #{tpu_custom_call.1} parent=0
    _
  %s9 = ssub.s32 1, %s7
  %s10 = scalar_select 0, %s9, %s7
  $region1: #{tpu_custom_call.1} parent=0
    #allocation3 [shape = 'u8[16384]{0}', space=vmem, size = 0x4000, scoped, tag = 'input window, operand 0']
    #allocation4 [shape = 's32[2]{0}', space=sflag, size = 0x8, scoped, tag = 'scoped memory for tpu_custom_call.1']
    #allocation5 [shape = 's32[2]{0}', space=sflag, size = 0x8, scoped, tag = 'scoped memory for tpu_custom_call.1']
    #allocation6 [shape = 'u8[16384]{0}', space=vmem, size = 0x4000, scoped, tag = 'input window, operand 1, single buffered']
    #allocation7 [shape = 's32[1]{0}', space=sflag, size = 0x4, scoped, tag = 'scoped memory for tpu_custom_call.1']
    #allocation8 [shape = 'u8[294912]{0}', space=vmem, size = 0x48000, scoped, tag = 'input window, operand 2, single buffered']
    #allocation9 [shape = 'u8[131072]{0}', space=vmem, size = 0x20000, scoped, tag = 'input window, operand 3, single buffered']
    #allocation10 [shape = 's32[1]{0}', space=sflag, size = 0x4, scoped, tag = 'scoped memory for tpu_custom_call.1']
    #allocation11 [shape = 'u8[131072]{0}', space=vmem, size = 0x20000, scoped, tag = 'input window, operand 4, single buffered']
    #allocation12 [shape = 'u8[8192]{0}', space=vmem, size = 0x2000, scoped, tag = 'input window, operand 5, single buffered']
    #allocation13 [shape = 's32[1]{0}', space=sflag, size = 0x4, scoped, tag = 'scoped memory for tpu_custom_call.1']
    #allocation14 [shape = 'u8[16384]{0}', space=vmem, size = 0x4000, scoped, tag = 'output window, operand 0']
    %11 = vsyncpa [#allocation4], 0
    %s12 = scalar_lea.sflag [#allocation4], 1
    %13 = vsyncpa %s12, 0
    %14 = vsyncpa [#allocation7], 0
    %15 = vsyncpa [#allocation10], 0
    %16 = vsyncpa [#allocation13], 0
    %17 = vsyncpa [#allocation5], 0
    %s18 = scalar_lea.sflag [#allocation5], 1
    %19 = vsyncpa %s18, 0
    loop: start=0, step=1, limit=4
    $region2: #{tpu_custom_call.1} parent=1 // loop_pre_header
      _
    $region3: #{tpu_custom_call.1} parent=1 // loop_header
      %s21 = sphi 0, %s25
      %p22 = scmp.ge.s32.totalorder %s21, 4
      %s31 = sphi 0, %s33
      %s34 = sphi 0, %s31
      %s35 = sphi 0, %s34
      %s51 = sphi 0, %s35
      %s55 = sphi 0, %s55
      %s57 = sphi 0, %s55
      %s58 = sphi 0, %s57
      %s72 = sphi 0, %s58
      %s76 = sphi 0, %s76
      %s78 = sphi 0, %s76
      %s79 = sphi 0, %s78
      %s93 = sphi 0, %s79
      %s97 = sphi 0, %s97
      %s99 = sphi 0, %s97
      %s100 = sphi 0, %s99
      %s114 = sphi 0, %s100
      %s118 = sphi 0, %s118
      %s120 = sphi 0, %s118
      %s121 = sphi 0, %s120
      %s135 = sphi 0, %s121
      %s139 = sphi 0, %s139
      %s141 = sphi 0, %s139
      %s142 = sphi 0, %s141
      %s156 = sphi 0, %s142
      %s162 = sphi 0, %s164
      %s165 = sphi 0, %s162
      %s166 = sphi 0, %s165
      %s182 = sphi 0, %s166
    $region4: #{tpu_custom_call.1} parent=1 // loop_header_branch
      %24 = sbr.rel (%p22) target = $region8
    $region5: #{tpu_custom_call.1} parent=1 // loop_body
      %s26 = ssub.s32 %s21, 1
      %s27 = ssub.s32 %s21, 2
      %s28 = sadd.s32 %s21, 1
      %s29 = ssub.s32 %s21, %s28
      %p30 = scmp.eq.s32.totalorder %s29, 0
      %s32 = sadd.s32 %s31, 1
      %s33 = scalar_select %p30, %s31, %s32
      %p36 = pneg %p30
      %p37 = scmp.eq.s32.totalorder %s21, 1
      %p38 = por %p36, %p37
      %p39 = scmp.ne.s32.totalorder %s31, %s34
      %p40 = scmp.eq.s32.totalorder %s21, 0
      %p41 = por %p39, %p40
      %p42 = scmp.ne.s32.totalorder %s31, %s34
      %p43 = scmp.eq.s32.totalorder %s26, 1
      %p44 = por %p42, %p43
      %p45 = scmp.ne.s32.totalorder %s34, %s35
      %p46 = scmp.eq.s32.totalorder %s26, 0
      %p47 = por %p45, %p46
      %p48 = scmp.ne.s32.totalorder %s34, %s35
      %p49 = scmp.eq.s32.totalorder %s27, 1
      %p50 = por %p48, %p49
      %p52 = scmp.ne.s32.totalorder %s35, %s51
      %p53 = scmp.eq.s32.totalorder %s27, 0
      %p54 = por %p52, %p53
      %s56 = sadd.s32 %s55, 1
      %p59 = scmp.eq.s32.totalorder %s21, 1
      %p60 = scmp.ne.s32.totalorder %s55, %s57
      %p61 = scmp.eq.s32.totalorder %s21, 0
      %p62 = por %p60, %p61
      %p63 = scmp.ne.s32.totalorder %s55, %s57
      %p64 = scmp.eq.s32.totalorder %s26, 1
      %p65 = por %p63, %p64
      %p66 = scmp.ne.s32.totalorder %s57, %s58
      %p67 = scmp.eq.s32.totalorder %s26, 0
      %p68 = por %p66, %p67
      %p69 = scmp.ne.s32.totalorder %s57, %s58
      %p70 = scmp.eq.s32.totalorder %s27, 1
      %p71 = por %p69, %p70
      %p73 = scmp.ne.s32.totalorder %s58, %s72
      %p74 = scmp.eq.s32.totalorder %s27, 0
      %p75 = por %p73, %p74
      %s77 = sadd.s32 %s76, 1
      %p80 = scmp.eq.s32.totalorder %s21, 1
      %p81 = scmp.ne.s32.totalorder %s76, %s78
      %p82 = scmp.eq.s32.totalorder %s21, 0
      %p83 = por %p81, %p82
      %p84 = scmp.ne.s32.totalorder %s76, %s78
      %p85 = scmp.eq.s32.totalorder %s26, 1
      %p86 = por %p84, %p85
      %p87 = scmp.ne.s32.totalorder %s78, %s79
      %p88 = scmp.eq.s32.totalorder %s26, 0
      %p89 = por %p87, %p88
      %p90 = scmp.ne.s32.totalorder %s78, %s79
      %p91 = scmp.eq.s32.totalorder %s27, 1
      %p92 = por %p90, %p91
      %p94 = scmp.ne.s32.totalorder %s79, %s93
      %p95 = scmp.eq.s32.totalorder %s27, 0
      %p96 = por %p94, %p95
      %s98 = sadd.s32 %s97, 1
      %p101 = scmp.eq.s32.totalorder %s21, 1
      %p102 = scmp.ne.s32.totalorder %s97, %s99
      %p103 = scmp.eq.s32.totalorder %s21, 0
      %p104 = por %p102, %p103
      %p105 = scmp.ne.s32.totalorder %s97, %s99
      %p106 = scmp.eq.s32.totalorder %s26, 1
      %p107 = por %p105, %p106
      %p108 = scmp.ne.s32.totalorder %s99, %s100
      %p109 = scmp.eq.s32.totalorder %s26, 0
      %p110 = por %p108, %p109
      %p111 = scmp.ne.s32.totalorder %s99, %s100
      %p112 = scmp.eq.s32.totalorder %s27, 1
      %p113 = por %p111, %p112
      %p115 = scmp.ne.s32.totalorder %s100, %s114
      %p116 = scmp.eq.s32.totalorder %s27, 0
      %p117 = por %p115, %p116
      %s119 = sadd.s32 %s118, 1
      %p122 = scmp.eq.s32.totalorder %s21, 1
      %p123 = scmp.ne.s32.totalorder %s118, %s120
      %p124 = scmp.eq.s32.totalorder %s21, 0
      %p125 = por %p123, %p124
      %p126 = scmp.ne.s32.totalorder %s118, %s120
      %p127 = scmp.eq.s32.totalorder %s26, 1
      %p128 = por %p126, %p127
      %p129 = scmp.ne.s32.totalorder %s120, %s121
      %p130 = scmp.eq.s32.totalorder %s26, 0
      %p131 = por %p129, %p130
      %p132 = scmp.ne.s32.totalorder %s120, %s121
      %p133 = scmp.eq.s32.totalorder %s27, 1
      %p134 = por %p132, %p133
      %p136 = scmp.ne.s32.totalorder %s121, %s135
      %p137 = scmp.eq.s32.totalorder %s27, 0
      %p138 = por %p136, %p137
      %s140 = sadd.s32 %s139, 1
      %p143 = scmp.eq.s32.totalorder %s21, 1
      %p144 = scmp.ne.s32.totalorder %s139, %s141
      %p145 = scmp.eq.s32.totalorder %s21, 0
      %p146 = por %p144, %p145
      %p147 = scmp.ne.s32.totalorder %s139, %s141
      %p148 = scmp.eq.s32.totalorder %s26, 1
      %p149 = por %p147, %p148
      %p150 = scmp.ne.s32.totalorder %s141, %s142
      %p151 = scmp.eq.s32.totalorder %s26, 0
      %p152 = por %p150, %p151
      %p153 = scmp.ne.s32.totalorder %s141, %s142
      %p154 = scmp.eq.s32.totalorder %s27, 1
      %p155 = por %p153, %p154
      %p157 = scmp.ne.s32.totalorder %s142, %s156
      %p158 = scmp.eq.s32.totalorder %s27, 0
      %p159 = por %p157, %p158
      %s160 = ssub.s32 %s21, %s28
      %p161 = scmp.eq.s32.totalorder %s160, 0
      %s163 = sadd.s32 %s162, 1
      %s164 = scalar_select %p161, %s162, %s163
      %p167 = pneg %p161
      %p168 = scmp.eq.s32.totalorder %s21, 1
      %p169 = por %p167, %p168
      %p170 = scmp.ne.s32.totalorder %s162, %s165
      %p171 = scmp.eq.s32.totalorder %s21, 0
      %p172 = por %p170, %p171
      %p173 = scmp.ne.s32.totalorder %s162, %s165
      %p174 = scmp.eq.s32.totalorder %s26, 1
      %p175 = por %p173, %p174
      %p176 = scmp.ne.s32.totalorder %s165, %s166
      %p177 = scmp.eq.s32.totalorder %s26, 0
      %p178 = por %p176, %p177
      %p179 = scmp.ne.s32.totalorder %s165, %s166
      %p180 = scmp.eq.s32.totalorder %s27, 1
      %p181 = por %p179, %p180
      %p183 = scmp.ne.s32.totalorder %s166, %s182
      %p184 = scmp.eq.s32.totalorder %s27, 0
      %p185 = por %p183, %p184
      %p186 = scmp.le.s32.totalorder 1, %s21
      %p187 = scmp.lt.s32.totalorder %s21, 3
      %p188 = pnand %p186, %p187
      %p189 = pneg %p188
      // Predicated region
      $region9: #{tpu_custom_call.1} parent=5 // pred_check
        _
      $region10: #{tpu_custom_call.1} parent=5 // pred_check_branch
        %191 = sbr.rel (%p188) target = $region12
      $region11: #{tpu_custom_call.1} parent=5 // pred_region
        %s192 = ssub.s32 %s21, 1
        // Predicated region
        $region13: #{tpu_custom_call.1} parent=11 // pred_check
          %p193 = pneg %p68
        $region14: #{tpu_custom_call.1} parent=11 // pred_check_branch
          %195 = sbr.rel (%p193) target = $region16
        $region15: #{tpu_custom_call.1} parent=11 // pred_region
          %197 = vsyncadd [#allocation7], 0
          %s198 = sshll.u32 %s1, 4
          %s199 = int_to_ptr.hbm [resolvable:$true] %s198
          %s200 = sshll.u32 [#allocation6], 4
          %s201 = int_to_ptr.vmem [resolvable:$true] %s200
          %206 = dma.hbm_to_vmem [thread:$0]  %s199, 512, %s201, [#allocation7], 64, 64, 4
        $region16: #{tpu_custom_call.1} parent=11 // pred_fallthru
          _
        // Predicated region
        $region17: #{tpu_custom_call.1} parent=11 // pred_check
          %p207 = pneg %p89
        $region18: #{tpu_custom_call.1} parent=11 // pred_check_branch
          %209 = sbr.rel (%p207) target = $region20
        $region19: #{tpu_custom_call.1} parent=11 // pred_region
          %211 = vsyncadd [#allocation7], 0
          %s212 = sshll.u32 %s2, 4
          %s213 = int_to_ptr.hbm [resolvable:$true] %s212
          %s214 = sshll.u32 [#allocation8], 4
          %s215 = int_to_ptr.vmem [resolvable:$true] %s214
          %220 = dma.hbm_to_vmem [thread:$0]  %s213, 9216, %s215, [#allocation7], 64, 64, 4
        $region20: #{tpu_custom_call.1} parent=11 // pred_fallthru
          _
        // Predicated region
        $region21: #{tpu_custom_call.1} parent=11 // pred_check
          %p221 = pneg %p110
        $region22: #{tpu_custom_call.1} parent=11 // pred_check_branch
          %223 = sbr.rel (%p221) target = $region24
        $region23: #{tpu_custom_call.1} parent=11 // pred_region
          %225 = vsyncadd [#allocation10], 0
          %s226 = sshll.u32 %s3, 4
          %s227 = int_to_ptr.hbm [resolvable:$true] %s226
          %s228 = sshll.u32 [#allocation9], 4
          %s229 = int_to_ptr.vmem [resolvable:$true] %s228
          %234 = dma.hbm_to_vmem [thread:$0]  %s227, 4096, %s229, [#allocation10], 64, 64, 4
        $region24: #{tpu_custom_call.1} parent=11 // pred_fallthru
          _
        // Predicated region
        $region25: #{tpu_custom_call.1} parent=11 // pred_check
          %p235 = pneg %p131
        $region26: #{tpu_custom_call.1} parent=11 // pred_check_branch
          %237 = sbr.rel (%p235) target = $region28
        $region27: #{tpu_custom_call.1} parent=11 // pred_region
          %239 = vsyncadd [#allocation10], 0
          %s240 = sshll.u32 %s4, 4
          %s241 = int_to_ptr.hbm [resolvable:$true] %s240
          %s242 = sshll.u32 [#allocation11], 4
          %s243 = int_to_ptr.vmem [resolvable:$true] %s242
          %248 = dma.hbm_to_vmem [thread:$0]  %s241, 4096, %s243, [#allocation10], 64, 64, 4
        $region28: #{tpu_custom_call.1} parent=11 // pred_fallthru
          _
        // Predicated region
        $region29: #{tpu_custom_call.1} parent=11 // pred_check
          %p249 = pneg %p152
        $region30: #{tpu_custom_call.1} parent=11 // pred_check_branch
          %251 = sbr.rel (%p249) target = $region32
        $region31: #{tpu_custom_call.1} parent=11 // pred_region
          %253 = vsyncadd [#allocation13], 0
          %s254 = sshll.u32 %s5, 4
          %s255 = int_to_ptr.hbm [resolvable:$true] %s254
          %s256 = sshll.u32 [#allocation12], 4
          %s257 = int_to_ptr.vmem [resolvable:$true] %s256
          %262 = dma.hbm_to_vmem [thread:$0]  %s255, 256, %s257, [#allocation13], 128, 128, 8
        $region32: #{tpu_custom_call.1} parent=11 // pred_fallthru
          _
      $region12: #{tpu_custom_call.1} parent=5 // pred_fallthru
        _
      %p263 = scmp.lt.s32.totalorder %s21, 2
      // Predicated region
      $region33: #{tpu_custom_call.1} parent=5 // pred_check
        %p264 = pneg %p263
      $region34: #{tpu_custom_call.1} parent=5 // pred_check_branch
        %266 = sbr.rel (%p264) target = $region36
      $region35: #{tpu_custom_call.1} parent=5 // pred_region
        // Predicated region
        $region37: #{tpu_custom_call.1} parent=35 // pred_check
          %p267 = pneg %p41
        $region38: #{tpu_custom_call.1} parent=35 // pred_check_branch
          %269 = sbr.rel (%p267) target = $region40
        $region39: #{tpu_custom_call.1} parent=35 // pred_region
          %s270 = sand.u32 %s31, 1
          %s271 = scalar_lea.sflag [#allocation4], %s270
          %s272 = sand.u32 %s31, 1
          %s273 = smul.addr %s272, 16
          %s274 = scalar_lea.vmem [#allocation3], %s273
          %s275 = smul.u32 2, %s21
          %277 = vsyncadd %s271, 0
          %s278 = smul.addr %s275, 8
          %s279 = scalar_lea.hbm %s0, %s278
          %s280 = sshll.u32 %s279, 4
          %s281 = int_to_ptr.hbm [resolvable:$true] %s280
          %s282 = sshll.u32 %s274, 4
          %s283 = int_to_ptr.vmem [resolvable:$true] %s282
          %288 = dma.hbm_to_vmem [thread:$0]  %s281, 256, %s283, %s271, 128, 128, 8
        $region40: #{tpu_custom_call.1} parent=35 // pred_fallthru
          _
      $region36: #{tpu_custom_call.1} parent=5 // pred_fallthru
        _
      %p289 = scmp.le.s32.totalorder 1, %s21
      %p290 = scmp.lt.s32.totalorder %s21, 3
      %p291 = pnand %p289, %p290
      %p292 = pneg %p291
      // Predicated region
      $region41: #{tpu_custom_call.1} parent=5 // pred_check
        _
      $region42: #{tpu_custom_call.1} parent=5 // pred_check_branch
        %294 = sbr.rel (%p291) target = $region44
      $region43: #{tpu_custom_call.1} parent=5 // pred_region
        %s295 = ssub.s32 %s21, 1
        %s296 = sand.u32 %s34, 1
        %s297 = scalar_lea.sflag [#allocation4], %s296
        %s298 = sand.u32 %s34, 1
        %s299 = smul.addr %s298, 16
        %s300 = scalar_lea.vmem [#allocation3], %s299
        // Predicated region
        $region45: #{tpu_custom_call.1} parent=43 // pred_check
          %p301 = pneg %p47
        $region46: #{tpu_custom_call.1} parent=43 // pred_check_branch
          %303 = sbr.rel (%p301) target = $region48
        $region47: #{tpu_custom_call.1} parent=43 // pred_region
          %305 = dma.done %s297, 256
        $region48: #{tpu_custom_call.1} parent=43 // pred_fallthru
          _
        // Predicated region
        $region49: #{tpu_custom_call.1} parent=43 // pred_check
          %p306 = pneg %p68
        $region50: #{tpu_custom_call.1} parent=43 // pred_check_branch
          %308 = sbr.rel (%p306) target = $region52
        $region51: #{tpu_custom_call.1} parent=43 // pred_region
          %310 = dma.done [#allocation7], 512
        $region52: #{tpu_custom_call.1} parent=43 // pred_fallthru
          _
        // Predicated region
        $region53: #{tpu_custom_call.1} parent=43 // pred_check
          %p311 = pneg %p89
        $region54: #{tpu_custom_call.1} parent=43 // pred_check_branch
          %313 = sbr.rel (%p311) target = $region56
        $region55: #{tpu_custom_call.1} parent=43 // pred_region
          %315 = dma.done [#allocation7], 9216
        $region56: #{tpu_custom_call.1} parent=43 // pred_fallthru
          _
        // Predicated region
        $region57: #{tpu_custom_call.1} parent=43 // pred_check
          %p316 = pneg %p110
        $region58: #{tpu_custom_call.1} parent=43 // pred_check_branch
          %318 = sbr.rel (%p316) target = $region60
        $region59: #{tpu_custom_call.1} parent=43 // pred_region
          %320 = dma.done [#allocation10], 4096
        $region60: #{tpu_custom_call.1} parent=43 // pred_fallthru
          _
        // Predicated region
        $region61: #{tpu_custom_call.1} parent=43 // pred_check
          %p321 = pneg %p131
        $region62: #{tpu_custom_call.1} parent=43 // pred_check_branch
          %323 = sbr.rel (%p321) target = $region64
        $region63: #{tpu_custom_call.1} parent=43 // pred_region
          %325 = dma.done [#allocation10], 4096
        $region64: #{tpu_custom_call.1} parent=43 // pred_fallthru
          _
        // Predicated region
        $region65: #{tpu_custom_call.1} parent=43 // pred_check
          %p326 = pneg %p152
        $region66: #{tpu_custom_call.1} parent=43 // pred_check_branch
          %328 = sbr.rel (%p326) target = $region68
        $region67: #{tpu_custom_call.1} parent=43 // pred_region
          %330 = dma.done [#allocation13], 256
        $region68: #{tpu_custom_call.1} parent=43 // pred_fallthru
          _
        %s331 = sand.u32 %s34, 1
        %s332 = scalar_lea.sflag [#allocation4], %s331
        %s333 = sand.u32 %s34, 1
        %s334 = smul.addr %s333, 16
        %s335 = scalar_lea.vmem [#allocation3], %s334
        %p336 = pneg %p47
        %p337 = pneg %p44
        %p338 = pneg %p68
        %p339 = pneg %p65
        %p340 = pneg %p89
        %p341 = pneg %p86
        %p342 = pneg %p110
        %p343 = pneg %p107
        %p344 = pneg %p131
        %p345 = pneg %p128
        %p346 = pneg %p152
        %p347 = pneg %p149
        %p348 = pneg %p178
        %p349 = pneg %p175
        %s350 = sand.u32 %s165, 1
        %s351 = scalar_lea.sflag [#allocation5], %s350
        %s352 = sand.u32 %s165, 1
        %s353 = smul.addr %s352, 16
        %s354 = scalar_lea.vmem [#allocation14], %s353
        %s355 = smul.u32 2, %s26
        %s356 = smul.u32 2, %s26
        %v358 = vld [vmem:[%s300] sm:$0xff]
        %v359 = vld [vmem:[%s300 + $0x8] sm:$0xff]
        %v360 = vpack.c.bf16 %v359, %v358
        %v361 = vld [vmem:[#allocation6] sm:$0xf]
        %v362 = vld [vmem:[#allocation6 + $0x4] sm:$0xf]
        %v363 = vld [vmem:[#allocation6 + $0x8] sm:$0xf]
        %v364 = vld [vmem:[#allocation6 + $0xc] sm:$0xf]
        %v365 = vld [vmem:[#allocation6 + $0x10] sm:$0xf]
        %v366 = vld [vmem:[#allocation6 + $0x14] sm:$0xf]
        %v367 = vld [vmem:[#allocation6 + $0x18] sm:$0xf]
        %v368 = vld [vmem:[#allocation6 + $0x1c] sm:$0xf]
        %v369 = vld [vmem:[#allocation12] sm:$0x1]
        %v370 = vperm.slane %v369, 0
        %v379 = vunpack.c.l.b16 %v361
        %v380 = vunpack.c.l.b16 %v362
        %v381 = vunpack.c.l.b16 %v363
        %v382 = vunpack.c.l.b16 %v364
        %v383 = vunpack.c.l.b16 %v365
        %v384 = vunpack.c.l.b16 %v366
        %v385 = vunpack.c.l.b16 %v367
        %v386 = vunpack.c.l.b16 %v368
        %v387 = vpack.c.b16 %v380, %v379
        %v388 = vpack.c.b16 %v382, %v381
        %v389 = vpack.c.b16 %v384, %v383
        %v390 = vpack.c.b16 %v386, %v385
        %vm395 = vcmask 523264
        %v397 = vsel %vm395, %v360, 0
        %399 = vmatpush.bf16.msra.mxu0 0
        %400 = vmatpush.bf16.msra.mxu0 0
        %401 = vmatpush.bf16.msra.mxu0 0
        %402 = vmatpush.bf16.msra.mxu0 0
        %403 = vmatpush.bf16.msra.mxu0 %v390
        %404 = vmatpush.bf16.msra.mxu0 %v389
        %405 = vmatpush.bf16.msra.mxu0 %v388
        %406 = vmatpush.bf16.msra.mxu0 %v387
        %407 = vmatmul.bf16.gmra.mxu0 %v397
        %v408 = vpop.f32.mrf.mxu0
        %v409 = vadd.f32 %v370, %v408
        %v410 = vpop.f32.mrf.mxu0
        %v411 = vadd.f32 %v370, %v410
        %412 = vdwg.mxu0
        %v413 = vmax.f32 %v409, 0.0
        %v414 = vmax.f32 %v411, 0.0
        %415 = vst [vmem:[#allocation2 + $0x4] sm:$0xff] 0.0
        %416 = vst [vmem:[#allocation2 + $0xc] sm:$0xf] 0.0
        %417 = vst [vmem:[#allocation2 + $0x20] sm:$0xff] 0.0
        %418 = vst [vmem:[#allocation2 + $0x28] sm:$0xf] 0.0
        %419 = vst [vmem:[#allocation2 + $0x10] sm:$0xff] %v413
        %420 = vst [vmem:[#allocation2 + $0x18] sm:$0xff] %v414
        %v421 = vpack.c.bf16 %v414, %v413
        %v422 = vld [vmem:[#allocation9] sm:$0xf]
        %v423 = vld [vmem:[#allocation9 + $0x4] sm:$0xf]
        %v424 = vld [vmem:[#allocation9 + $0x8] sm:$0xf]
        %v425 = vld [vmem:[#allocation9 + $0xc] sm:$0xf]
        %v426 = vld [vmem:[#allocation9 + $0x10] sm:$0xf]
        %v427 = vld [vmem:[#allocation9 + $0x14] sm:$0xf]
        %v428 = vld [vmem:[#allocation9 + $0x18] sm:$0xf]
        %v429 = vld [vmem:[#allocation9 + $0x1c] sm:$0xf]
        %v430 = vld [vmem:[#allocation9 + $0x20] sm:$0xf]
        %v431 = vld [vmem:[#allocation9 + $0x24] sm:$0xf]
        %v432 = vld [vmem:[#allocation9 + $0x28] sm:$0xf]
        %v433 = vld [vmem:[#allocation9 + $0x2c] sm:$0xf]
        %v434 = vld [vmem:[#allocation9 + $0x30] sm:$0xf]
        %v435 = vld [vmem:[#allocation9 + $0x34] sm:$0xf]
        %v436 = vld [vmem:[#allocation9 + $0x38] sm:$0xf]
        %v437 = vld [vmem:[#allocation9 + $0x3c] sm:$0xf]
        %s438 = scalar_lea.vmem [#allocation9], 64
        %v439 = vld [vmem:[%s438] sm:$0xf]
        %v440 = vld [vmem:[%s438 + $0x4] sm:$0xf]
        %v441 = vld [vmem:[%s438 + $0x8] sm:$0xf]
        %v442 = vld [vmem:[%s438 + $0xc] sm:$0xf]
        %v443 = vld [vmem:[%s438 + $0x10] sm:$0xf]
        %v444 = vld [vmem:[%s438 + $0x14] sm:$0xf]
        %v445 = vld [vmem:[%s438 + $0x18] sm:$0xf]
        %v446 = vld [vmem:[%s438 + $0x1c] sm:$0xf]
        %v447 = vld [vmem:[%s438 + $0x20] sm:$0xf]
        %v448 = vld [vmem:[%s438 + $0x24] sm:$0xf]
        %v449 = vld [vmem:[%s438 + $0x28] sm:$0xf]
        %v450 = vld [vmem:[%s438 + $0x2c] sm:$0xf]
        %v451 = vld [vmem:[%s438 + $0x30] sm:$0xf]
        %v452 = vld [vmem:[%s438 + $0x34] sm:$0xf]
        %v453 = vld [vmem:[%s438 + $0x38] sm:$0xf]
        %v454 = vld [vmem:[%s438 + $0x3c] sm:$0xf]
        %s455 = scalar_lea.vmem [#allocation9], 128
        %v456 = vld [vmem:[%s455] sm:$0xf]
        %v457 = vld [vmem:[%s455 + $0x4] sm:$0xf]
        %v458 = vld [vmem:[%s455 + $0x8] sm:$0xf]
        %v459 = vld [vmem:[%s455 + $0xc] sm:$0xf]
        %v460 = vld [vmem:[%s455 + $0x10] sm:$0xf]
        %v461 = vld [vmem:[%s455 + $0x14] sm:$0xf]
        %v462 = vld [vmem:[%s455 + $0x18] sm:$0xf]
        %v463 = vld [vmem:[%s455 + $0x1c] sm:$0xf]
        %v464 = vld [vmem:[%s455 + $0x20] sm:$0xf]
        %v465 = vld [vmem:[%s455 + $0x24] sm:$0xf]
        %v466 = vld [vmem:[%s455 + $0x28] sm:$0xf]
        %v467 = vld [vmem:[%s455 + $0x2c] sm:$0xf]
        %v468 = vld [vmem:[%s455 + $0x30] sm:$0xf]
        %v469 = vld [vmem:[%s455 + $0x34] sm:$0xf]
        %v470 = vld [vmem:[%s455 + $0x38] sm:$0xf]
        %v471 = vld [vmem:[%s455 + $0x3c] sm:$0xf]
        %s472 = scalar_lea.vmem [#allocation9], 192
        %v473 = vld [vmem:[%s472] sm:$0xf]
        %v474 = vld [vmem:[%s472 + $0x4] sm:$0xf]
        %v475 = vld [vmem:[%s472 + $0x8] sm:$0xf]
        %v476 = vld [vmem:[%s472 + $0xc] sm:$0xf]
        %v477 = vld [vmem:[%s472 + $0x10] sm:$0xf]
        %v478 = vld [vmem:[%s472 + $0x14] sm:$0xf]
        %v479 = vld [vmem:[%s472 + $0x18] sm:$0xf]
        %v480 = vld [vmem:[%s472 + $0x1c] sm:$0xf]
        %v481 = vld [vmem:[%s472 + $0x20] sm:$0xf]
        %v482 = vld [vmem:[%s472 + $0x24] sm:$0xf]
        %v483 = vld [vmem:[%s472 + $0x28] sm:$0xf]
        %v484 = vld [vmem:[%s472 + $0x2c] sm:$0xf]
        %v485 = vld [vmem:[%s472 + $0x30] sm:$0xf]
        %v486 = vld [vmem:[%s472 + $0x34] sm:$0xf]
        %v487 = vld [vmem:[%s472 + $0x38] sm:$0xf]
        %v488 = vld [vmem:[%s472 + $0x3c] sm:$0xf]
        %v489 = vld [vmem:[#allocation12 + $0x4] sm:$0x1]
        %v490 = vld [vmem:[#allocation12 + $0x5] sm:$0x1]
        %v491 = vld [vmem:[#allocation12 + $0x6] sm:$0x1]
        %v492 = vld [vmem:[#allocation12 + $0x7] sm:$0x1]
        %v493 = vld [vmem:[#allocation11 + $0xc0] sm:$0xf]
        %v494 = vld [vmem:[#allocation11 + $0xc4] sm:$0xf]
        %v495 = vld [vmem:[#allocation11 + $0xc8] sm:$0xf]
        %v496 = vld [vmem:[#allocation11 + $0xcc] sm:$0xf]
        %v497 = vld [vmem:[#allocation11 + $0xd0] sm:$0xf]
        %v498 = vld [vmem:[#allocation11 + $0xd4] sm:$0xf]
        %v499 = vld [vmem:[#allocation11 + $0xd8] sm:$0xf]
        %v500 = vld [vmem:[#allocation11 + $0xdc] sm:$0xf]
        %v501 = vld [vmem:[#allocation11 + $0xe0] sm:$0xf]
        %v502 = vld [vmem:[#allocation11 + $0xe4] sm:$0xf]
        %v503 = vld [vmem:[#allocation11 + $0xe8] sm:$0xf]
        %v504 = vld [vmem:[#allocation11 + $0xec] sm:$0xf]
        %v505 = vld [vmem:[#allocation11 + $0xf0] sm:$0xf]
        %v506 = vld [vmem:[#allocation11 + $0xf4] sm:$0xf]
        %v507 = vld [vmem:[#allocation11 + $0xf8] sm:$0xf]
        %v508 = vld [vmem:[#allocation11 + $0xfc] sm:$0xf]
        %v509 = vld [vmem:[#allocation8] sm:$0xf]
        %v510 = vld [vmem:[#allocation8 + $0x4] sm:$0xf]
        %v511 = vld [vmem:[#allocation8 + $0x8] sm:$0xf]
        %v512 = vld [vmem:[#allocation8 + $0xc] sm:$0xf]
        %v513 = vld [vmem:[#allocation8 + $0x10] sm:$0xf]
        %v514 = vld [vmem:[#allocation8 + $0x14] sm:$0xf]
        %v515 = vld [vmem:[#allocation8 + $0x18] sm:$0xf]
        %v516 = vld [vmem:[#allocation8 + $0x1c] sm:$0xf]
        %v517 = vld [vmem:[#allocation8 + $0x20] sm:$0xf]
        %v518 = vld [vmem:[#allocation8 + $0x24] sm:$0xf]
        %v519 = vld [vmem:[#allocation8 + $0x28] sm:$0xf]
        %v520 = vld [vmem:[#allocation8 + $0x2c] sm:$0xf]
        %v521 = vld [vmem:[#allocation8 + $0x30] sm:$0xf]
        %v522 = vld [vmem:[#allocation8 + $0x34] sm:$0xf]
        %v523 = vld [vmem:[#allocation8 + $0x38] sm:$0xf]
        %v524 = vld [vmem:[#allocation8 + $0x3c] sm:$0xf]
        %v525 = vld [vmem:[#allocation8 + $0x40] sm:$0xf]
        %v526 = vld [vmem:[#allocation8 + $0x44] sm:$0xf]
        %v527 = vld [vmem:[#allocation8 + $0x48] sm:$0xf]
        %v528 = vld [vmem:[#allocation8 + $0x4c] sm:$0xf]
        %v529 = vld [vmem:[#allocation8 + $0x50] sm:$0xf]
        %v530 = vld [vmem:[#allocation8 + $0x54] sm:$0xf]
        %v531 = vld [vmem:[#allocation8 + $0x58] sm:$0xf]
        %v532 = vld [vmem:[#allocation8 + $0x5c] sm:$0xf]
        %v533 = vld [vmem:[#allocation8 + $0x60] sm:$0xf]
        %v534 = vld [vmem:[#allocation8 + $0x64] sm:$0xf]
        %v535 = vld [vmem:[#allocation8 + $0x68] sm:$0xf]
        %v536 = vld [vmem:[#allocation8 + $0x6c] sm:$0xf]
        %v537 = vld [vmem:[#allocation8 + $0x70] sm:$0xf]
        %v538 = vld [vmem:[#allocation8 + $0x74] sm:$0xf]
        %v539 = vld [vmem:[#allocation8 + $0x78] sm:$0xf]
        %v540 = vld [vmem:[#allocation8 + $0x7c] sm:$0xf]
        %v541 = vld [vmem:[#allocation8 + $0x80] sm:$0xf]
        %v542 = vld [vmem:[#allocation8 + $0x84] sm:$0xf]
        %v543 = vld [vmem:[#allocation8 + $0x88] sm:$0xf]
        %v544 = vld [vmem:[#allocation8 + $0x8c] sm:$0xf]
        %v545 = vld [vmem:[#allocation8 + $0x90] sm:$0xf]
        %v546 = vld [vmem:[#allocation8 + $0x94] sm:$0xf]
        %v547 = vld [vmem:[#allocation8 + $0x98] sm:$0xf]
        %v548 = vld [vmem:[#allocation8 + $0x9c] sm:$0xf]
        %v549 = vld [vmem:[#allocation8 + $0xa0] sm:$0xf]
        %v550 = vld [vmem:[#allocation8 + $0xa4] sm:$0xf]
        %v551 = vld [vmem:[#allocation8 + $0xa8] sm:$0xf]
        %v552 = vld [vmem:[#allocation8 + $0xac] sm:$0xf]
        %v553 = vld [vmem:[#allocation8 + $0xb0] sm:$0xf]
        %v554 = vld [vmem:[#allocation8 + $0xb4] sm:$0xf]
        %v555 = vld [vmem:[#allocation8 + $0xb8] sm:$0xf]
        %v556 = vld [vmem:[#allocation8 + $0xbc] sm:$0xf]
        %v557 = vld [vmem:[#allocation2 + $0xf] sm:$0xff]
        %v558 = vld [vmem:[#allocation2 + $0x17] sm:$0xff]
        %v559 = vpack.c.bf16 %v558, %v557
        %v560 = vld [vmem:[#allocation2 + $0x10] sm:$0xff]
        %v561 = vld [vmem:[#allocation2 + $0x18] sm:$0xff]
        %v562 = vpack.c.bf16 %v561, %v560
        %v579 = vunpack.c.l.b16 %v525
        %v580 = vunpack.c.l.b16 %v526
        %v581 = vunpack.c.l.b16 %v527
        %v582 = vunpack.c.l.b16 %v528
        %v583 = vunpack.c.l.b16 %v529
        %v584 = vunpack.c.l.b16 %v530
        %v585 = vunpack.c.l.b16 %v531
        %v586 = vunpack.c.l.b16 %v532
        %v587 = vunpack.c.l.b16 %v533
        %v588 = vunpack.c.l.b16 %v534
        %v589 = vunpack.c.l.b16 %v535
        %v590 = vunpack.c.l.b16 %v536
        %v591 = vunpack.c.l.b16 %v537
        %v592 = vunpack.c.l.b16 %v538
        %v593 = vunpack.c.l.b16 %v539
        %v594 = vunpack.c.l.b16 %v540
        %v595 = vpack.c.b16 %v580, %v579
        %v596 = vpack.c.b16 %v582, %v581
        %v597 = vpack.c.b16 %v584, %v583
        %v598 = vpack.c.b16 %v586, %v585
        %v599 = vpack.c.b16 %v588, %v587
        %v600 = vpack.c.b16 %v590, %v589
        %v601 = vpack.c.b16 %v592, %v591
        %v602 = vpack.c.b16 %v594, %v593
        %611 = vmatpush.bf16.msra.mxu0 %v602
        %612 = vmatpush.bf16.msra.mxu0 %v601
        %613 = vmatpush.bf16.msra.mxu0 %v600
        %614 = vmatpush.bf16.msra.mxu0 %v599
        %615 = vmatpush.bf16.msra.mxu0 %v598
        %616 = vmatpush.bf16.msra.mxu0 %v597
        %617 = vmatpush.bf16.msra.mxu0 %v596
        %618 = vmatpush.bf16.msra.mxu0 %v595
        %619 = vmatmul.bf16.gmra.mxu0 %v562
        %v620 = vpop.f32.mrf.mxu0
        %v621 = vadd.f32 0.0, %v620
        %v622 = vpop.f32.mrf.mxu0
        %v623 = vadd.f32 0.0, %v622
        %624 = vdwg.mxu0
        %v641 = vunpack.c.l.b16 %v509
        %v642 = vunpack.c.l.b16 %v510
        %v643 = vunpack.c.l.b16 %v511
        %v644 = vunpack.c.l.b16 %v512
        %v645 = vunpack.c.l.b16 %v513
        %v646 = vunpack.c.l.b16 %v514
        %v647 = vunpack.c.l.b16 %v515
        %v648 = vunpack.c.l.b16 %v516
        %v649 = vunpack.c.l.b16 %v517
        %v650 = vunpack.c.l.b16 %v518
        %v651 = vunpack.c.l.b16 %v519
        %v652 = vunpack.c.l.b16 %v520
        %v653 = vunpack.c.l.b16 %v521
        %v654 = vunpack.c.l.b16 %v522
        %v655 = vunpack.c.l.b16 %v523
        %v656 = vunpack.c.l.b16 %v524
        %v657 = vpack.c.b16 %v642, %v641
        %v658 = vpack.c.b16 %v644, %v643
        %v659 = vpack.c.b16 %v646, %v645
        %v660 = vpack.c.b16 %v648, %v647
        %v661 = vpack.c.b16 %v650, %v649
        %v662 = vpack.c.b16 %v652, %v651
        %v663 = vpack.c.b16 %v654, %v653
        %v664 = vpack.c.b16 %v656, %v655
        %673 = vmatpush.bf16.msra.mxu0 %v664
        %674 = vmatpush.bf16.msra.mxu0 %v663
        %675 = vmatpush.bf16.msra.mxu0 %v662
        %676 = vmatpush.bf16.msra.mxu0 %v661
        %677 = vmatpush.bf16.msra.mxu0 %v660
        %678 = vmatpush.bf16.msra.mxu0 %v659
        %679 = vmatpush.bf16.msra.mxu0 %v658
        %680 = vmatpush.bf16.msra.mxu0 %v657
        %681 = vmatmul.bf16.gmra.mxu0 %v559
        %v682 = vpop.f32.mrf.mxu0
        %v683 = vadd.f32 %v621, %v682
        %v684 = vpop.f32.mrf.mxu0
        %v685 = vadd.f32 %v623, %v684
        %686 = vdwg.mxu0
        %v687 = vld [vmem:[#allocation2 + $0x11] sm:$0xff]
        %v688 = vld [vmem:[#allocation2 + $0x19] sm:$0xff]
        %v689 = vpack.c.bf16 %v688, %v687
        %v706 = vunpack.c.l.b16 %v541
        %v707 = vunpack.c.l.b16 %v542
        %v708 = vunpack.c.l.b16 %v543
        %v709 = vunpack.c.l.b16 %v544
        %v710 = vunpack.c.l.b16 %v545
        %v711 = vunpack.c.l.b16 %v546
        %v712 = vunpack.c.l.b16 %v547
        %v713 = vunpack.c.l.b16 %v548
        %v714 = vunpack.c.l.b16 %v549
        %v715 = vunpack.c.l.b16 %v550
        %v716 = vunpack.c.l.b16 %v551
        %v717 = vunpack.c.l.b16 %v552
        %v718 = vunpack.c.l.b16 %v553
        %v719 = vunpack.c.l.b16 %v554
        %v720 = vunpack.c.l.b16 %v555
        %v721 = vunpack.c.l.b16 %v556
        %v722 = vpack.c.b16 %v707, %v706
        %v723 = vpack.c.b16 %v709, %v708
        %v724 = vpack.c.b16 %v711, %v710
        %v725 = vpack.c.b16 %v713, %v712
        %v726 = vpack.c.b16 %v715, %v714
        %v727 = vpack.c.b16 %v717, %v716
        %v728 = vpack.c.b16 %v719, %v718
        %v729 = vpack.c.b16 %v721, %v720
        %738 = vmatpush.bf16.msra.mxu0 %v729
        %739 = vmatpush.bf16.msra.mxu0 %v728
        %740 = vmatpush.bf16.msra.mxu0 %v727
        %741 = vmatpush.bf16.msra.mxu0 %v726
        %742 = vmatpush.bf16.msra.mxu0 %v725
        %743 = vmatpush.bf16.msra.mxu0 %v724
        %744 = vmatpush.bf16.msra.mxu0 %v723
        %745 = vmatpush.bf16.msra.mxu0 %v722
        %746 = vmatmul.bf16.gmra.mxu0 %v689
        %v747 = vpop.f32.mrf.mxu0
        %v748 = vadd.f32 0.0, %v747
        %v749 = vpop.f32.mrf.mxu0
        %v750 = vadd.f32 0.0, %v749
        %751 = vdwg.mxu0
        %v752 = vadd.f32 %v683, %v748
        %v753 = vadd.f32 %v685, %v750
        %v754 = vld [vmem:[#allocation12 + $0x1] sm:$0x1]
        %v755 = vperm.slane %v754, 0
        %v756 = vadd.f32 %v752, %v755
        %v757 = vadd.f32 %v753, %v755
        %v758 = vmax.f32 %v756, 0.0
        %v759 = vmax.f32 %v757, 0.0
        %v760 = vand.u32 2147483647, %v758
        %vm761 = vcmp.le.f32.partialorder %v760, 0.7853982
        %vm762 = vcmp.lt.s32.totalorder %v758, 0
        %v763 = vand.u32 %v758, 2139095040
        %v764 = vshrl.u32 %v763, 23
        %v765 = vsub.s32 %v764, 127
        %v766 = vand.u32 2147483647, %v758
        %v767 = vand.u32 %v766, 8388607
        %v768 = vor.u32 %v767, 8388608
        %v769 = vsub.s32 0, %v768
        %v770 = vadd.s32 %v765, 1
        %vm771 = vcmp.gt.s32.totalorder %v770, 0
        %v772 = vsel %vm771, %v770, 0
        %v773 = vshrl.u32 %v772, 5
        %v774 = vand.u32 %v772, 31
        %v775 = vsub.s32 32, %v774
        %v776 = vshrl.u32 683565275, %v775
        %v777 = vshll.u32 683565275, %v774
        %v778 = vshrl.u32 2475754826, %v775
        %v779 = vor.u32 %v777, %v778
        %v780 = vshll.u32 2475754826, %v774
        %v781 = vshrl.u32 2131351028, %v775
        %v782 = vor.u32 %v780, %v781
        %v783 = vshll.u32 2131351028, %v774
        %v784 = vshrl.u32 2102212464, %v775
        %v785 = vor.u32 %v783, %v784
        %v786 = vshll.u32 2102212464, %v774
        %v787 = vshrl.u32 920167782, %v775
        %v788 = vor.u32 %v786, %v787
        %v789 = vshll.u32 920167782, %v774
        %v790 = vshrl.u32 1326507024, %v775
        %v791 = vor.u32 %v789, %v790
        %vm792 = vcmp.lt.s32.totalorder %v773, 1
        %vm793 = vcmp.lt.s32.totalorder %v773, 2
        %vm794 = vcmp.lt.s32.totalorder %v773, 3
        %vm795 = vcmp.lt.s32.totalorder %v773, 4
        %v796 = vsel %vm792, %v776, %v779
        %v797 = vsel %vm795, %v785, 2102212464
        %v798 = vsel %vm794, %v782, %v797
        %v799 = vsel %vm793, %v796, %v798
        %v800 = vsel %vm792, %v779, %v782
        %v801 = vsel %vm795, %v788, 920167782
        %v802 = vsel %vm794, %v785, %v801
        %v803 = vsel %vm793, %v800, %v802
        %v804 = vsel %vm792, %v782, %v785
        %v805 = vsel %vm795, %v791, 1326507024
        %v806 = vsel %vm794, %v788, %v805
        %v807 = vsel %vm793, %v804, %v806
        %v808 = vshll.u32 %v768, 8
        %v809 = vand.u32 %v808, 65535
        %v810 = vshrl.u32 %v808, 16
        %v811 = vand.u32 %v807, 65535
        %v812 = vshrl.u32 %v807, 16
        %v813 = vmul.u32 %v809, %v811
        %v814 = vmul.u32 %v809, %v812
        %v815 = vmul.u32 %v810, %v811
        %v816 = vmul.u32 %v810, %v812
        %v817 = vshll.u32 %v814, 16
        %v818 = vshrl.u32 %v814, 16
        %v819 = vshll.u32 %v815, 16
        %v820 = vshrl.u32 %v815, 16
        %vm821 = vc.u32 %v813, %v817
        %v822 = vsel %vm821, 1, 0
        %v823 = vadd.s32 %v813, %v817
        %v824 = vadd.s32 %v816, %v822
        %vm825 = vc.u32 %v823, %v819
        %v826 = vsel %vm825, 1, 0
        %v827 = vadd.s32 %v823, %v819
        %v828 = vadd.s32 %v824, %v826
        %v829 = vadd.s32 %v828, %v818
        %v830 = vadd.s32 %v829, %v820
        %v831 = vand.u32 %v808, 65535
        %v832 = vshrl.u32 %v808, 16
        %v833 = vand.u32 %v803, 65535
        %v834 = vshrl.u32 %v803, 16
        %v835 = vmul.u32 %v831, %v833
        %v836 = vmul.u32 %v831, %v834
        %v837 = vmul.u32 %v832, %v833
        %v838 = vmul.u32 %v832, %v834
        %v839 = vshll.u32 %v836, 16
        %v840 = vshrl.u32 %v836, 16
        %v841 = vshll.u32 %v837, 16
        %v842 = vshrl.u32 %v837, 16
        %vm843 = vc.u32 %v835, %v839
        %v844 = vsel %vm843, 1, 0
        %v845 = vadd.s32 %v835, %v839
        %v846 = vadd.s32 %v838, %v844
        %vm847 = vc.u32 %v845, %v841
        %v848 = vsel %vm847, 1, 0
        %v849 = vadd.s32 %v845, %v841
        %v850 = vadd.s32 %v846, %v848
        %v851 = vadd.s32 %v850, %v840
        %v852 = vadd.s32 %v851, %v842
        %v853 = vmul.u32 %v808, %v799
        %v854 = vadd.s32 %v830, %v849
        %vm855 = vc.u32 %v830, %v849
        %v856 = vadd.s32 %v852, 1
        %v857 = vsel %vm855, %v856, %v852
        %v858 = vadd.s32 %v853, %v857
        %v859 = vadd.s32 %v858, 536870912
        %v860 = vshrl.u32 %v859, 30
        %v861 = vshll.u32 %v860, 30
        %v862 = vsub.s32 %v858, %v861
        %vm863 = vcmp.lt.s32.totalorder %v862, 0
        %v864 = vsub.s32 0, %v862
        %v865 = vsel %vm863, %v864, %v862
        %v866 = vclz %v865
        %v867 = vsub.s32 %v866, 2
        %vm868 = vcmp.gt.s32.totalorder 0, %v867
        %v869 = vsel %vm868, 0, %v867
        %v870 = vsub.s32 32, %v869
        %v871 = vshll.u32 %v862, %v869
        %v872 = vshrl.u32 %v854, %v870
        %v873 = vor.u32 %v871, %v872
        %v874 = vsub.s32 4294967266, %v869
        %v875 = vadd.s32 %v874, 127
        %v876 = vshll.u32 %v875, 23
        %v877 = vor.u32 4788187, %v876
        %v878 = vand.u32 2147483647, %v877
        %v880 = vcvt.s32.f32 %v873
        %v881 = vmul.f32 %v880, %v878
        %v882 = vxor.u32 %v881, 2147483648
        %v883 = vsel %vm762, %v882, %v881
        %v884 = vsub.s32 4, %v860
        %v885 = vsel %vm762, %v884, %v860
        %v886 = vsel %vm761, %v758, %v883
        %v887 = vsel %vm761, 0, %v885
        %v888 = vmul.f32 %v886, %v886
        %v889 = vmul.f32 %v888, -0.001358992
        %v890 = vadd.f32 %v889, 0.041655596
        %v891 = vmul.f32 %v888, %v890
        %v892 = vadd.f32 %v891, -0.4999988
        %v893 = vmul.f32 %v888, %v892
        %v894 = vadd.f32 1.0, %v893
        %v895 = vmul.f32 %v886, %v886
        %v896 = vmul.f32 %v895, -0.00019511016
        %v897 = vadd.f32 %v896, 0.008332121
        %v898 = vmul.f32 %v895, %v897
        %v899 = vadd.f32 %v898, -0.16666654
        %v900 = vmul.f32 %v895, %v899
        %v901 = vadd.f32 %v900, 1.0
        %v902 = vmul.f32 %v901, %v886
        %vm903 = vweird.f32 %v758
        %v904 = vand.u32 %v887, 3
        %vm905 = vcmp.lt.s32.totalorder %v904, 2
        %vm906 = vcmp.eq.s32.totalorder %v904, 0
        %v907 = vxor.u32 %v902, 2147483648
        %v908 = vsel %vm906, %v894, %v907
        %vm909 = vcmp.eq.s32.totalorder %v904, 2
        %v910 = vxor.u32 %v894, 2147483648
        %v911 = vsel %vm909, %v910, %v902
        %v912 = vsel %vm905, %v908, %v911
        %v913 = vsel %vm903, nan, %v912
        %v914 = vand.u32 2147483647, %v759
        %vm915 = vcmp.le.f32.partialorder %v914, 0.7853982
        %vm916 = vcmp.lt.s32.totalorder %v759, 0
        %v917 = vand.u32 %v759, 2139095040
        %v918 = vshrl.u32 %v917, 23
        %v919 = vsub.s32 %v918, 127
        %v920 = vand.u32 2147483647, %v759
        %v921 = vand.u32 %v920, 8388607
        %v922 = vor.u32 %v921, 8388608
        %v923 = vsub.s32 0, %v922
        %v924 = vadd.s32 %v919, 1
        %vm925 = vcmp.gt.s32.totalorder %v924, 0
        %v926 = vsel %vm925, %v924, 0
        %v927 = vshrl.u32 %v926, 5
        %v928 = vand.u32 %v926, 31
        %v929 = vsub.s32 32, %v928
        %v930 = vshrl.u32 683565275, %v929
        %v931 = vshll.u32 683565275, %v928
        %v932 = vshrl.u32 2475754826, %v929
        %v933 = vor.u32 %v931, %v932
        %v934 = vshll.u32 2475754826, %v928
        %v935 = vshrl.u32 2131351028, %v929
        %v936 = vor.u32 %v934, %v935
        %v937 = vshll.u32 2131351028, %v928
        %v938 = vshrl.u32 2102212464, %v929
        %v939 = vor.u32 %v937, %v938
        %v940 = vshll.u32 2102212464, %v928
        %v941 = vshrl.u32 920167782, %v929
        %v942 = vor.u32 %v940, %v941
        %v943 = vshll.u32 920167782, %v928
        %v944 = vshrl.u32 1326507024, %v929
        %v945 = vor.u32 %v943, %v944
        %vm946 = vcmp.lt.s32.totalorder %v927, 1
        %vm947 = vcmp.lt.s32.totalorder %v927, 2
        %vm948 = vcmp.lt.s32.totalorder %v927, 3
        %vm949 = vcmp.lt.s32.totalorder %v927, 4
        %v950 = vsel %vm946, %v930, %v933
        %v951 = vsel %vm949, %v939, 2102212464
        %v952 = vsel %vm948, %v936, %v951
        %v953 = vsel %vm947, %v950, %v952
        %v954 = vsel %vm946, %v933, %v936
        %v955 = vsel %vm949, %v942, 920167782
        %v956 = vsel %vm948, %v939, %v955
        %v957 = vsel %vm947, %v954, %v956
        %v958 = vsel %vm946, %v936, %v939
        %v959 = vsel %vm949, %v945, 1326507024
        %v960 = vsel %vm948, %v942, %v959
        %v961 = vsel %vm947, %v958, %v960
        %v962 = vshll.u32 %v922, 8
        %v963 = vand.u32 %v962, 65535
        %v964 = vshrl.u32 %v962, 16
        %v965 = vand.u32 %v961, 65535
        %v966 = vshrl.u32 %v961, 16
        %v967 = vmul.u32 %v963, %v965
        %v968 = vmul.u32 %v963, %v966
        %v969 = vmul.u32 %v964, %v965
        %v970 = vmul.u32 %v964, %v966
        %v971 = vshll.u32 %v968, 16
        %v972 = vshrl.u32 %v968, 16
        %v973 = vshll.u32 %v969, 16
        %v974 = vshrl.u32 %v969, 16
        %vm975 = vc.u32 %v967, %v971
        %v976 = vsel %vm975, 1, 0
        %v977 = vadd.s32 %v967, %v971
        %v978 = vadd.s32 %v970, %v976
        %vm979 = vc.u32 %v977, %v973
        %v980 = vsel %vm979, 1, 0
        %v981 = vadd.s32 %v977, %v973
        %v982 = vadd.s32 %v978, %v980
        %v983 = vadd.s32 %v982, %v972
        %v984 = vadd.s32 %v983, %v974
        %v985 = vand.u32 %v962, 65535
        %v986 = vshrl.u32 %v962, 16
        %v987 = vand.u32 %v957, 65535
        %v988 = vshrl.u32 %v957, 16
        %v989 = vmul.u32 %v985, %v987
        %v990 = vmul.u32 %v985, %v988
        %v991 = vmul.u32 %v986, %v987
        %v992 = vmul.u32 %v986, %v988
        %v993 = vshll.u32 %v990, 16
        %v994 = vshrl.u32 %v990, 16
        %v995 = vshll.u32 %v991, 16
        %v996 = vshrl.u32 %v991, 16
        %vm997 = vc.u32 %v989, %v993
        %v998 = vsel %vm997, 1, 0
        %v999 = vadd.s32 %v989, %v993
        %v1000 = vadd.s32 %v992, %v998
        %vm1001 = vc.u32 %v999, %v995
        %v1002 = vsel %vm1001, 1, 0
        %v1003 = vadd.s32 %v999, %v995
        %v1004 = vadd.s32 %v1000, %v1002
        %v1005 = vadd.s32 %v1004, %v994
        %v1006 = vadd.s32 %v1005, %v996
        %v1007 = vmul.u32 %v962, %v953
        %v1008 = vadd.s32 %v984, %v1003
        %vm1009 = vc.u32 %v984, %v1003
        %v1010 = vadd.s32 %v1006, 1
        %v1011 = vsel %vm1009, %v1010, %v1006
        %v1012 = vadd.s32 %v1007, %v1011
        %v1013 = vadd.s32 %v1012, 536870912
        %v1014 = vshrl.u32 %v1013, 30
        %v1015 = vshll.u32 %v1014, 30
        %v1016 = vsub.s32 %v1012, %v1015
        %vm1017 = vcmp.lt.s32.totalorder %v1016, 0
        %v1018 = vsub.s32 0, %v1016
        %v1019 = vsel %vm1017, %v1018, %v1016
        %v1020 = vclz %v1019
        %v1021 = vsub.s32 %v1020, 2
        %vm1022 = vcmp.gt.s32.totalorder 0, %v1021
        %v1023 = vsel %vm1022, 0, %v1021
        %v1024 = vsub.s32 32, %v1023
        %v1025 = vshll.u32 %v1016, %v1023
        %v1026 = vshrl.u32 %v1008, %v1024
        %v1027 = vor.u32 %v1025, %v1026
        %v1028 = vsub.s32 4294967266, %v1023
        %v1029 = vadd.s32 %v1028, 127
        %v1030 = vshll.u32 %v1029, 23
        %v1031 = vor.u32 4788187, %v1030
        %v1032 = vand.u32 2147483647, %v1031
        %v1034 = vcvt.s32.f32 %v1027
        %v1035 = vmul.f32 %v1034, %v1032
        %v1036 = vxor.u32 %v1035, 2147483648
        %v1037 = vsel %vm916, %v1036, %v1035
        %v1038 = vsub.s32 4, %v1014
        %v1039 = vsel %vm916, %v1038, %v1014
        %v1040 = vsel %vm915, %v759, %v1037
        %v1041 = vsel %vm915, 0, %v1039
        %v1042 = vmul.f32 %v1040, %v1040
        %v1043 = vmul.f32 %v1042, -0.001358992
        %v1044 = vadd.f32 %v1043, 0.041655596
        %v1045 = vmul.f32 %v1042, %v1044
        %v1046 = vadd.f32 %v1045, -0.4999988
        %v1047 = vmul.f32 %v1042, %v1046
        %v1048 = vadd.f32 1.0, %v1047
        %v1049 = vmul.f32 %v1040, %v1040
        %v1050 = vmul.f32 %v1049, -0.00019511016
        %v1051 = vadd.f32 %v1050, 0.008332121
        %v1052 = vmul.f32 %v1049, %v1051
        %v1053 = vadd.f32 %v1052, -0.16666654
        %v1054 = vmul.f32 %v1049, %v1053
        %v1055 = vadd.f32 %v1054, 1.0
        %v1056 = vmul.f32 %v1055, %v1040
        %vm1057 = vweird.f32 %v759
        %v1058 = vand.u32 %v1041, 3
        %vm1059 = vcmp.lt.s32.totalorder %v1058, 2
        %vm1060 = vcmp.eq.s32.totalorder %v1058, 0
        %v1061 = vxor.u32 %v1056, 2147483648
        %v1062 = vsel %vm1060, %v1048, %v1061
        %vm1063 = vcmp.eq.s32.totalorder %v1058, 2
        %v1064 = vxor.u32 %v1048, 2147483648
        %v1065 = vsel %vm1063, %v1064, %v1056
        %v1066 = vsel %vm1059, %v1062, %v1065
        %v1067 = vsel %vm1057, nan, %v1066
        %v1068 = vmul.f32 %v758, %v913
        %v1069 = vmul.f32 %v759, %v1067
        %v1070 = vpack.c.bf16 %v1069, %v1068
        %v1071 = vand.u32 2147483647, %v758
        %vm1072 = vcmp.le.f32.partialorder %v1071, 0.7853982
        %vm1073 = vcmp.lt.s32.totalorder %v758, 0
        %v1074 = vand.u32 %v758, 2139095040
        %v1075 = vshrl.u32 %v1074, 23
        %v1076 = vsub.s32 %v1075, 127
        %v1077 = vand.u32 2147483647, %v758
        %v1078 = vand.u32 %v1077, 8388607
        %v1079 = vor.u32 %v1078, 8388608
        %v1080 = vsub.s32 0, %v1079
        %v1081 = vadd.s32 %v1076, 1
        %vm1082 = vcmp.gt.s32.totalorder %v1081, 0
        %v1083 = vsel %vm1082, %v1081, 0
        %v1084 = vshrl.u32 %v1083, 5
        %v1085 = vand.u32 %v1083, 31
        %v1086 = vsub.s32 32, %v1085
        %v1087 = vshrl.u32 683565275, %v1086
        %v1088 = vshll.u32 683565275, %v1085
        %v1089 = vshrl.u32 2475754826, %v1086
        %v1090 = vor.u32 %v1088, %v1089
        %v1091 = vshll.u32 2475754826, %v1085
        %v1092 = vshrl.u32 2131351028, %v1086
        %v1093 = vor.u32 %v1091, %v1092
        %v1094 = vshll.u32 2131351028, %v1085
        %v1095 = vshrl.u32 2102212464, %v1086
        %v1096 = vor.u32 %v1094, %v1095
        %v1097 = vshll.u32 2102212464, %v1085
        %v1098 = vshrl.u32 920167782, %v1086
        %v1099 = vor.u32 %v1097, %v1098
        %v1100 = vshll.u32 920167782, %v1085
        %v1101 = vshrl.u32 1326507024, %v1086
        %v1102 = vor.u32 %v1100, %v1101
        %vm1103 = vcmp.lt.s32.totalorder %v1084, 1
        %vm1104 = vcmp.lt.s32.totalorder %v1084, 2
        %vm1105 = vcmp.lt.s32.totalorder %v1084, 3
        %vm1106 = vcmp.lt.s32.totalorder %v1084, 4
        %v1107 = vsel %vm1103, %v1087, %v1090
        %v1108 = vsel %vm1106, %v1096, 2102212464
        %v1109 = vsel %vm1105, %v1093, %v1108
        %v1110 = vsel %vm1104, %v1107, %v1109
        %v1111 = vsel %vm1103, %v1090, %v1093
        %v1112 = vsel %vm1106, %v1099, 920167782
        %v1113 = vsel %vm1105, %v1096, %v1112
        %v1114 = vsel %vm1104, %v1111, %v1113
        %v1115 = vsel %vm1103, %v1093, %v1096
        %v1116 = vsel %vm1106, %v1102, 1326507024
        %v1117 = vsel %vm1105, %v1099, %v1116
        %v1118 = vsel %vm1104, %v1115, %v1117
        %v1119 = vshll.u32 %v1079, 8
        %v1120 = vand.u32 %v1119, 65535
        %v1121 = vshrl.u32 %v1119, 16
        %v1122 = vand.u32 %v1118, 65535
        %v1123 = vshrl.u32 %v1118, 16
        %v1124 = vmul.u32 %v1120, %v1122
        %v1125 = vmul.u32 %v1120, %v1123
        %v1126 = vmul.u32 %v1121, %v1122
        %v1127 = vmul.u32 %v1121, %v1123
        %v1128 = vshll.u32 %v1125, 16
        %v1129 = vshrl.u32 %v1125, 16
        %v1130 = vshll.u32 %v1126, 16
        %v1131 = vshrl.u32 %v1126, 16
        %vm1132 = vc.u32 %v1124, %v1128
        %v1133 = vsel %vm1132, 1, 0
        %v1134 = vadd.s32 %v1124, %v1128
        %v1135 = vadd.s32 %v1127, %v1133
        %vm1136 = vc.u32 %v1134, %v1130
        %v1137 = vsel %vm1136, 1, 0
        %v1138 = vadd.s32 %v1134, %v1130
        %v1139 = vadd.s32 %v1135, %v1137
        %v1140 = vadd.s32 %v1139, %v1129
        %v1141 = vadd.s32 %v1140, %v1131
        %v1142 = vand.u32 %v1119, 65535
        %v1143 = vshrl.u32 %v1119, 16
        %v1144 = vand.u32 %v1114, 65535
        %v1145 = vshrl.u32 %v1114, 16
        %v1146 = vmul.u32 %v1142, %v1144
        %v1147 = vmul.u32 %v1142, %v1145
        %v1148 = vmul.u32 %v1143, %v1144
        %v1149 = vmul.u32 %v1143, %v1145
        %v1150 = vshll.u32 %v1147, 16
        %v1151 = vshrl.u32 %v1147, 16
        %v1152 = vshll.u32 %v1148, 16
        %v1153 = vshrl.u32 %v1148, 16
        %vm1154 = vc.u32 %v1146, %v1150
        %v1155 = vsel %vm1154, 1, 0
        %v1156 = vadd.s32 %v1146, %v1150
        %v1157 = vadd.s32 %v1149, %v1155
        %vm1158 = vc.u32 %v1156, %v1152
        %v1159 = vsel %vm1158, 1, 0
        %v1160 = vadd.s32 %v1156, %v1152
        %v1161 = vadd.s32 %v1157, %v1159
        %v1162 = vadd.s32 %v1161, %v1151
        %v1163 = vadd.s32 %v1162, %v1153
        %v1164 = vmul.u32 %v1119, %v1110
        %v1165 = vadd.s32 %v1141, %v1160
        %vm1166 = vc.u32 %v1141, %v1160
        %v1167 = vadd.s32 %v1163, 1
        %v1168 = vsel %vm1166, %v1167, %v1163
        %v1169 = vadd.s32 %v1164, %v1168
        %v1170 = vadd.s32 %v1169, 536870912
        %v1171 = vshrl.u32 %v1170, 30
        %v1172 = vshll.u32 %v1171, 30
        %v1173 = vsub.s32 %v1169, %v1172
        %vm1174 = vcmp.lt.s32.totalorder %v1173, 0
        %v1175 = vsub.s32 0, %v1173
        %v1176 = vsel %vm1174, %v1175, %v1173
        %v1177 = vclz %v1176
        %v1178 = vsub.s32 %v1177, 2
        %vm1179 = vcmp.gt.s32.totalorder 0, %v1178
        %v1180 = vsel %vm1179, 0, %v1178
        %v1181 = vsub.s32 32, %v1180
        %v1182 = vshll.u32 %v1173, %v1180
        %v1183 = vshrl.u32 %v1165, %v1181
        %v1184 = vor.u32 %v1182, %v1183
        %v1185 = vsub.s32 4294967266, %v1180
        %v1186 = vadd.s32 %v1185, 127
        %v1187 = vshll.u32 %v1186, 23
        %v1188 = vor.u32 4788187, %v1187
        %v1189 = vand.u32 2147483647, %v1188
        %v1191 = vcvt.s32.f32 %v1184
        %v1192 = vmul.f32 %v1191, %v1189
        %v1193 = vxor.u32 %v1192, 2147483648
        %v1194 = vsel %vm1073, %v1193, %v1192
        %v1195 = vsub.s32 4, %v1171
        %v1196 = vsel %vm1073, %v1195, %v1171
        %v1197 = vsel %vm1072, %v758, %v1194
        %v1198 = vsel %vm1072, 0, %v1196
        %v1199 = vmul.f32 %v1197, %v1197
        %v1200 = vmul.f32 %v1199, -0.001358992
        %v1201 = vadd.f32 %v1200, 0.041655596
        %v1202 = vmul.f32 %v1199, %v1201
        %v1203 = vadd.f32 %v1202, -0.4999988
        %v1204 = vmul.f32 %v1199, %v1203
        %v1205 = vadd.f32 1.0, %v1204
        %v1206 = vmul.f32 %v1197, %v1197
        %v1207 = vmul.f32 %v1206, -0.00019511016
        %v1208 = vadd.f32 %v1207, 0.008332121
        %v1209 = vmul.f32 %v1206, %v1208
        %v1210 = vadd.f32 %v1209, -0.16666654
        %v1211 = vmul.f32 %v1206, %v1210
        %v1212 = vadd.f32 %v1211, 1.0
        %v1213 = vmul.f32 %v1212, %v1197
        %vm1214 = vweird.f32 %v758
        %v1215 = vadd.s32 %v1198, 3
        %v1216 = vand.u32 %v1215, 3
        %vm1217 = vcmp.lt.s32.totalorder %v1216, 2
        %vm1218 = vcmp.eq.s32.totalorder %v1216, 0
        %v1219 = vxor.u32 %v1213, 2147483648
        %v1220 = vsel %vm1218, %v1205, %v1219
        %vm1221 = vcmp.eq.s32.totalorder %v1216, 2
        %v1222 = vxor.u32 %v1205, 2147483648
        %v1223 = vsel %vm1221, %v1222, %v1213
        %v1224 = vsel %vm1217, %v1220, %v1223
        %v1225 = vsel %vm1214, nan, %v1224
        %v1226 = vand.u32 2147483647, %v759
        %vm1227 = vcmp.le.f32.partialorder %v1226, 0.7853982
        %vm1228 = vcmp.lt.s32.totalorder %v759, 0
        %v1229 = vand.u32 %v759, 2139095040
        %v1230 = vshrl.u32 %v1229, 23
        %v1231 = vsub.s32 %v1230, 127
        %v1232 = vand.u32 2147483647, %v759
        %v1233 = vand.u32 %v1232, 8388607
        %v1234 = vor.u32 %v1233, 8388608
        %v1235 = vsub.s32 0, %v1234
        %v1236 = vadd.s32 %v1231, 1
        %vm1237 = vcmp.gt.s32.totalorder %v1236, 0
        %v1238 = vsel %vm1237, %v1236, 0
        %v1239 = vshrl.u32 %v1238, 5
        %v1240 = vand.u32 %v1238, 31
        %v1241 = vsub.s32 32, %v1240
        %v1242 = vshrl.u32 683565275, %v1241
        %v1243 = vshll.u32 683565275, %v1240
        %v1244 = vshrl.u32 2475754826, %v1241
        %v1245 = vor.u32 %v1243, %v1244
        %v1246 = vshll.u32 2475754826, %v1240
        %v1247 = vshrl.u32 2131351028, %v1241
        %v1248 = vor.u32 %v1246, %v1247
        %v1249 = vshll.u32 2131351028, %v1240
        %v1250 = vshrl.u32 2102212464, %v1241
        %v1251 = vor.u32 %v1249, %v1250
        %v1252 = vshll.u32 2102212464, %v1240
        %v1253 = vshrl.u32 920167782, %v1241
        %v1254 = vor.u32 %v1252, %v1253
        %v1255 = vshll.u32 920167782, %v1240
        %v1256 = vshrl.u32 1326507024, %v1241
        %v1257 = vor.u32 %v1255, %v1256
        %vm1258 = vcmp.lt.s32.totalorder %v1239, 1
        %vm1259 = vcmp.lt.s32.totalorder %v1239, 2
        %vm1260 = vcmp.lt.s32.totalorder %v1239, 3
        %vm1261 = vcmp.lt.s32.totalorder %v1239, 4
        %v1262 = vsel %vm1258, %v1242, %v1245
        %v1263 = vsel %vm1261, %v1251, 2102212464
        %v1264 = vsel %vm1260, %v1248, %v1263
        %v1265 = vsel %vm1259, %v1262, %v1264
        %v1266 = vsel %vm1258, %v1245, %v1248
        %v1267 = vsel %vm1261, %v1254, 920167782
        %v1268 = vsel %vm1260, %v1251, %v1267
        %v1269 = vsel %vm1259, %v1266, %v1268
        %v1270 = vsel %vm1258, %v1248, %v1251
        %v1271 = vsel %vm1261, %v1257, 1326507024
        %v1272 = vsel %vm1260, %v1254, %v1271
        %v1273 = vsel %vm1259, %v1270, %v1272
        %v1274 = vshll.u32 %v1234, 8
        %v1275 = vand.u32 %v1274, 65535
        %v1276 = vshrl.u32 %v1274, 16
        %v1277 = vand.u32 %v1273, 65535
        %v1278 = vshrl.u32 %v1273, 16
        %v1279 = vmul.u32 %v1275, %v1277
        %v1280 = vmul.u32 %v1275, %v1278
        %v1281 = vmul.u32 %v1276, %v1277
        %v1282 = vmul.u32 %v1276, %v1278
        %v1283 = vshll.u32 %v1280, 16
        %v1284 = vshrl.u32 %v1280, 16
        %v1285 = vshll.u32 %v1281, 16
        %v1286 = vshrl.u32 %v1281, 16
        %vm1287 = vc.u32 %v1279, %v1283
        %v1288 = vsel %vm1287, 1, 0
        %v1289 = vadd.s32 %v1279, %v1283
        %v1290 = vadd.s32 %v1282, %v1288
        %vm1291 = vc.u32 %v1289, %v1285
        %v1292 = vsel %vm1291, 1, 0
        %v1293 = vadd.s32 %v1289, %v1285
        %v1294 = vadd.s32 %v1290, %v1292
        %v1295 = vadd.s32 %v1294, %v1284
        %v1296 = vadd.s32 %v1295, %v1286
        %v1297 = vand.u32 %v1274, 65535
        %v1298 = vshrl.u32 %v1274, 16
        %v1299 = vand.u32 %v1269, 65535
        %v1300 = vshrl.u32 %v1269, 16
        %v1301 = vmul.u32 %v1297, %v1299
        %v1302 = vmul.u32 %v1297, %v1300
        %v1303 = vmul.u32 %v1298, %v1299
        %v1304 = vmul.u32 %v1298, %v1300
        %v1305 = vshll.u32 %v1302, 16
        %v1306 = vshrl.u32 %v1302, 16
        %v1307 = vshll.u32 %v1303, 16
        %v1308 = vshrl.u32 %v1303, 16
        %vm1309 = vc.u32 %v1301, %v1305
        %v1310 = vsel %vm1309, 1, 0
        %v1311 = vadd.s32 %v1301, %v1305
        %v1312 = vadd.s32 %v1304, %v1310
        %vm1313 = vc.u32 %v1311, %v1307
        %v1314 = vsel %vm1313, 1, 0
        %v1315 = vadd.s32 %v1311, %v1307
        %v1316 = vadd.s32 %v1312, %v1314
        %v1317 = vadd.s32 %v1316, %v1306
        %v1318 = vadd.s32 %v1317, %v1308
        %v1319 = vmul.u32 %v1274, %v1265
        %v1320 = vadd.s32 %v1296, %v1315
        %vm1321 = vc.u32 %v1296, %v1315
        %v1322 = vadd.s32 %v1318, 1
        %v1323 = vsel %vm1321, %v1322, %v1318
        %v1324 = vadd.s32 %v1319, %v1323
        %v1325 = vadd.s32 %v1324, 536870912
        %v1326 = vshrl.u32 %v1325, 30
        %v1327 = vshll.u32 %v1326, 30
        %v1328 = vsub.s32 %v1324, %v1327
        %vm1329 = vcmp.lt.s32.totalorder %v1328, 0
        %v1330 = vsub.s32 0, %v1328
        %v1331 = vsel %vm1329, %v1330, %v1328
        %v1332 = vclz %v1331
        %v1333 = vsub.s32 %v1332, 2
        %vm1334 = vcmp.gt.s32.totalorder 0, %v1333
        %v1335 = vsel %vm1334, 0, %v1333
        %v1336 = vsub.s32 32, %v1335
        %v1337 = vshll.u32 %v1328, %v1335
        %v1338 = vshrl.u32 %v1320, %v1336
        %v1339 = vor.u32 %v1337, %v1338
        %v1340 = vsub.s32 4294967266, %v1335
        %v1341 = vadd.s32 %v1340, 127
        %v1342 = vshll.u32 %v1341, 23
        %v1343 = vor.u32 4788187, %v1342
        %v1344 = vand.u32 2147483647, %v1343
        %v1346 = vcvt.s32.f32 %v1339
        %v1347 = vmul.f32 %v1346, %v1344
        %v1348 = vxor.u32 %v1347, 2147483648
        %v1349 = vsel %vm1228, %v1348, %v1347
        %v1350 = vsub.s32 4, %v1326
        %v1351 = vsel %vm1228, %v1350, %v1326
        %v1352 = vsel %vm1227, %v759, %v1349
        %v1353 = vsel %vm1227, 0, %v1351
        %v1354 = vmul.f32 %v1352, %v1352
        %v1355 = vmul.f32 %v1354, -0.001358992
        %v1356 = vadd.f32 %v1355, 0.041655596
        %v1357 = vmul.f32 %v1354, %v1356
        %v1358 = vadd.f32 %v1357, -0.4999988
        %v1359 = vmul.f32 %v1354, %v1358
        %v1360 = vadd.f32 1.0, %v1359
        %v1361 = vmul.f32 %v1352, %v1352
        %v1362 = vmul.f32 %v1361, -0.00019511016
        %v1363 = vadd.f32 %v1362, 0.008332121
        %v1364 = vmul.f32 %v1361, %v1363
        %v1365 = vadd.f32 %v1364, -0.16666654
        %v1366 = vmul.f32 %v1361, %v1365
        %v1367 = vadd.f32 %v1366, 1.0
        %v1368 = vmul.f32 %v1367, %v1352
        %vm1369 = vweird.f32 %v759
        %v1370 = vadd.s32 %v1353, 3
        %v1371 = vand.u32 %v1370, 3
        %vm1372 = vcmp.lt.s32.totalorder %v1371, 2
        %vm1373 = vcmp.eq.s32.totalorder %v1371, 0
        %v1374 = vxor.u32 %v1368, 2147483648
        %v1375 = vsel %vm1373, %v1360, %v1374
        %vm1376 = vcmp.eq.s32.totalorder %v1371, 2
        %v1377 = vxor.u32 %v1360, 2147483648
        %v1378 = vsel %vm1376, %v1377, %v1368
        %v1379 = vsel %vm1372, %v1375, %v1378
        %v1380 = vsel %vm1369, nan, %v1379
        %v1381 = vmul.f32 %v758, %v1225
        %v1382 = vmul.f32 %v759, %v1380
        %v1383 = vpack.c.bf16 %v1382, %v1381
        %v1384 = vperm.slane %v489, 0
        %v1401 = vunpack.c.l.b16 %v422
        %v1402 = vunpack.c.l.b16 %v423
        %v1403 = vunpack.c.l.b16 %v424
        %v1404 = vunpack.c.l.b16 %v425
        %v1405 = vunpack.c.l.b16 %v426
        %v1406 = vunpack.c.l.b16 %v427
        %v1407 = vunpack.c.l.b16 %v428
        %v1408 = vunpack.c.l.b16 %v429
        %v1409 = vunpack.c.l.b16 %v430
        %v1410 = vunpack.c.l.b16 %v431
        %v1411 = vunpack.c.l.b16 %v432
        %v1412 = vunpack.c.l.b16 %v433
        %v1413 = vunpack.c.l.b16 %v434
        %v1414 = vunpack.c.l.b16 %v435
        %v1415 = vunpack.c.l.b16 %v436
        %v1416 = vunpack.c.l.b16 %v437
        %v1417 = vpack.c.b16 %v1402, %v1401
        %v1418 = vpack.c.b16 %v1404, %v1403
        %v1419 = vpack.c.b16 %v1406, %v1405
        %v1420 = vpack.c.b16 %v1408, %v1407
        %v1421 = vpack.c.b16 %v1410, %v1409
        %v1422 = vpack.c.b16 %v1412, %v1411
        %v1423 = vpack.c.b16 %v1414, %v1413
        %v1424 = vpack.c.b16 %v1416, %v1415
        %1433 = vmatpush.bf16.msra.mxu0 %v1424
        %1434 = vmatpush.bf16.msra.mxu0 %v1423
        %1435 = vmatpush.bf16.msra.mxu0 %v1422
        %1436 = vmatpush.bf16.msra.mxu0 %v1421
        %1437 = vmatpush.bf16.msra.mxu0 %v1420
        %1438 = vmatpush.bf16.msra.mxu0 %v1419
        %1439 = vmatpush.bf16.msra.mxu0 %v1418
        %1440 = vmatpush.bf16.msra.mxu0 %v1417
        %1441 = vmatmul.bf16.gmra.mxu0 %v1070
        %v1442 = vpop.f32.mrf.mxu0
        %v1443 = vadd.f32 %v1384, %v1442
        %v1444 = vpop.f32.mrf.mxu0
        %v1445 = vadd.f32 %v1384, %v1444
        %1446 = vdwg.mxu0
        %v1447 = vmax.f32 %v1443, 0.0
        %v1448 = vmax.f32 %v1445, 0.0
        %v1449 = vperm.slane %v490, 0
        %v1466 = vunpack.c.l.b16 %v439
        %v1467 = vunpack.c.l.b16 %v440
        %v1468 = vunpack.c.l.b16 %v441
        %v1469 = vunpack.c.l.b16 %v442
        %v1470 = vunpack.c.l.b16 %v443
        %v1471 = vunpack.c.l.b16 %v444
        %v1472 = vunpack.c.l.b16 %v445
        %v1473 = vunpack.c.l.b16 %v446
        %v1474 = vunpack.c.l.b16 %v447
        %v1475 = vunpack.c.l.b16 %v448
        %v1476 = vunpack.c.l.b16 %v449
        %v1477 = vunpack.c.l.b16 %v450
        %v1478 = vunpack.c.l.b16 %v451
        %v1479 = vunpack.c.l.b16 %v452
        %v1480 = vunpack.c.l.b16 %v453
        %v1481 = vunpack.c.l.b16 %v454
        %v1482 = vpack.c.b16 %v1467, %v1466
        %v1483 = vpack.c.b16 %v1469, %v1468
        %v1484 = vpack.c.b16 %v1471, %v1470
        %v1485 = vpack.c.b16 %v1473, %v1472
        %v1486 = vpack.c.b16 %v1475, %v1474
        %v1487 = vpack.c.b16 %v1477, %v1476
        %v1488 = vpack.c.b16 %v1479, %v1478
        %v1489 = vpack.c.b16 %v1481, %v1480
        %1498 = vmatpush.bf16.msra.mxu0 %v1489
        %1499 = vmatpush.bf16.msra.mxu0 %v1488
        %1500 = vmatpush.bf16.msra.mxu0 %v1487
        %1501 = vmatpush.bf16.msra.mxu0 %v1486
        %1502 = vmatpush.bf16.msra.mxu0 %v1485
        %1503 = vmatpush.bf16.msra.mxu0 %v1484
        %1504 = vmatpush.bf16.msra.mxu0 %v1483
        %1505 = vmatpush.bf16.msra.mxu0 %v1482
        %1506 = vmatmul.bf16.gmra.mxu0 %v1383
        %v1507 = vpop.f32.mrf.mxu0
        %v1508 = vadd.f32 %v1449, %v1507
        %v1509 = vpop.f32.mrf.mxu0
        %v1510 = vadd.f32 %v1449, %v1509
        %1511 = vdwg.mxu0
        %v1512 = vmax.f32 %v1508, 0.0
        %v1513 = vmax.f32 %v1510, 0.0
        %v1514 = vmul.f32 %v1512, %v1447
        %v1515 = vmul.f32 %v1513, %v1448
        %v1516 = vpack.c.bf16 %v1515, %v1514
        %v1517 = vperm.slane %v491, 0
        %v1534 = vunpack.c.l.b16 %v456
        %v1535 = vunpack.c.l.b16 %v457
        %v1536 = vunpack.c.l.b16 %v458
        %v1537 = vunpack.c.l.b16 %v459
        %v1538 = vunpack.c.l.b16 %v460
        %v1539 = vunpack.c.l.b16 %v461
        %v1540 = vunpack.c.l.b16 %v462
        %v1541 = vunpack.c.l.b16 %v463
        %v1542 = vunpack.c.l.b16 %v464
        %v1543 = vunpack.c.l.b16 %v465
        %v1544 = vunpack.c.l.b16 %v466
        %v1545 = vunpack.c.l.b16 %v467
        %v1546 = vunpack.c.l.b16 %v468
        %v1547 = vunpack.c.l.b16 %v469
        %v1548 = vunpack.c.l.b16 %v470
        %v1549 = vunpack.c.l.b16 %v471
        %v1550 = vpack.c.b16 %v1535, %v1534
        %v1551 = vpack.c.b16 %v1537, %v1536
        %v1552 = vpack.c.b16 %v1539, %v1538
        %v1553 = vpack.c.b16 %v1541, %v1540
        %v1554 = vpack.c.b16 %v1543, %v1542
        %v1555 = vpack.c.b16 %v1545, %v1544
        %v1556 = vpack.c.b16 %v1547, %v1546
        %v1557 = vpack.c.b16 %v1549, %v1548
        %1566 = vmatpush.bf16.msra.mxu0 %v1557
        %1567 = vmatpush.bf16.msra.mxu0 %v1556
        %1568 = vmatpush.bf16.msra.mxu0 %v1555
        %1569 = vmatpush.bf16.msra.mxu0 %v1554
        %1570 = vmatpush.bf16.msra.mxu0 %v1553
        %1571 = vmatpush.bf16.msra.mxu0 %v1552
        %1572 = vmatpush.bf16.msra.mxu0 %v1551
        %1573 = vmatpush.bf16.msra.mxu0 %v1550
        %1574 = vmatmul.bf16.gmra.mxu0 %v1516
        %v1575 = vpop.f32.mrf.mxu0
        %v1576 = vadd.f32 %v1517, %v1575
        %v1577 = vpop.f32.mrf.mxu0
        %v1578 = vadd.f32 %v1517, %v1577
        %1579 = vdwg.mxu0
        %v1580 = vmax.f32 %v1576, 0.0
        %v1581 = vmax.f32 %v1578, 0.0
        %v1582 = vadd.f32 %v1512, %v1447
        %v1583 = vadd.f32 %v1513, %v1448
        %v1584 = vpack.c.bf16 %v1583, %v1582
        %v1585 = vperm.slane %v492, 0
        %v1602 = vunpack.c.l.b16 %v473
        %v1603 = vunpack.c.l.b16 %v474
        %v1604 = vunpack.c.l.b16 %v475
        %v1605 = vunpack.c.l.b16 %v476
        %v1606 = vunpack.c.l.b16 %v477
        %v1607 = vunpack.c.l.b16 %v478
        %v1608 = vunpack.c.l.b16 %v479
        %v1609 = vunpack.c.l.b16 %v480
        %v1610 = vunpack.c.l.b16 %v481
        %v1611 = vunpack.c.l.b16 %v482
        %v1612 = vunpack.c.l.b16 %v483
        %v1613 = vunpack.c.l.b16 %v484
        %v1614 = vunpack.c.l.b16 %v485
        %v1615 = vunpack.c.l.b16 %v486
        %v1616 = vunpack.c.l.b16 %v487
        %v1617 = vunpack.c.l.b16 %v488
        %v1618 = vpack.c.b16 %v1603, %v1602
        %v1619 = vpack.c.b16 %v1605, %v1604
        %v1620 = vpack.c.b16 %v1607, %v1606
        %v1621 = vpack.c.b16 %v1609, %v1608
        %v1622 = vpack.c.b16 %v1611, %v1610
        %v1623 = vpack.c.b16 %v1613, %v1612
        %v1624 = vpack.c.b16 %v1615, %v1614
        %v1625 = vpack.c.b16 %v1617, %v1616
        %1634 = vmatpush.bf16.msra.mxu0 %v1625
        %1635 = vmatpush.bf16.msra.mxu0 %v1624
        %1636 = vmatpush.bf16.msra.mxu0 %v1623
        %1637 = vmatpush.bf16.msra.mxu0 %v1622
        %1638 = vmatpush.bf16.msra.mxu0 %v1621
        %1639 = vmatpush.bf16.msra.mxu0 %v1620
        %1640 = vmatpush.bf16.msra.mxu0 %v1619
        %1641 = vmatpush.bf16.msra.mxu0 %v1618
        %1642 = vmatmul.bf16.gmra.mxu0 %v1584
        %v1643 = vpop.f32.mrf.mxu0
        %v1644 = vadd.f32 %v1585, %v1643
        %v1645 = vpop.f32.mrf.mxu0
        %v1646 = vadd.f32 %v1585, %v1645
        %1647 = vdwg.mxu0
        %v1648 = vmax.f32 %v1644, 0.0
        %v1649 = vmax.f32 %v1646, 0.0
        %v1650 = vadd.f32 %v1648, %v1580
        %v1651 = vadd.f32 %v1649, %v1581
        %v1652 = vpack.c.bf16 %v1651, %v1650
        %v1653 = vld [vmem:[#allocation11] sm:$0xf]
        %v1654 = vld [vmem:[#allocation11 + $0x4] sm:$0xf]
        %v1655 = vld [vmem:[#allocation11 + $0x8] sm:$0xf]
        %v1656 = vld [vmem:[#allocation11 + $0xc] sm:$0xf]
        %v1657 = vld [vmem:[#allocation11 + $0x10] sm:$0xf]
        %v1658 = vld [vmem:[#allocation11 + $0x14] sm:$0xf]
        %v1659 = vld [vmem:[#allocation11 + $0x18] sm:$0xf]
        %v1660 = vld [vmem:[#allocation11 + $0x1c] sm:$0xf]
        %v1661 = vld [vmem:[#allocation11 + $0x20] sm:$0xf]
        %v1662 = vld [vmem:[#allocation11 + $0x24] sm:$0xf]
        %v1663 = vld [vmem:[#allocation11 + $0x28] sm:$0xf]
        %v1664 = vld [vmem:[#allocation11 + $0x2c] sm:$0xf]
        %v1665 = vld [vmem:[#allocation11 + $0x30] sm:$0xf]
        %v1666 = vld [vmem:[#allocation11 + $0x34] sm:$0xf]
        %v1667 = vld [vmem:[#allocation11 + $0x38] sm:$0xf]
        %v1668 = vld [vmem:[#allocation11 + $0x3c] sm:$0xf]
        %v1685 = vunpack.c.l.b16 %v1653
        %v1686 = vunpack.c.l.b16 %v1654
        %v1687 = vunpack.c.l.b16 %v1655
        %v1688 = vunpack.c.l.b16 %v1656
        %v1689 = vunpack.c.l.b16 %v1657
        %v1690 = vunpack.c.l.b16 %v1658
        %v1691 = vunpack.c.l.b16 %v1659
        %v1692 = vunpack.c.l.b16 %v1660
        %v1693 = vunpack.c.l.b16 %v1661
        %v1694 = vunpack.c.l.b16 %v1662
        %v1695 = vunpack.c.l.b16 %v1663
        %v1696 = vunpack.c.l.b16 %v1664
        %v1697 = vunpack.c.l.b16 %v1665
        %v1698 = vunpack.c.l.b16 %v1666
        %v1699 = vunpack.c.l.b16 %v1667
        %v1700 = vunpack.c.l.b16 %v1668
        %v1701 = vpack.c.b16 %v1686, %v1685
        %v1702 = vpack.c.b16 %v1688, %v1687
        %v1703 = vpack.c.b16 %v1690, %v1689
        %v1704 = vpack.c.b16 %v1692, %v1691
        %v1705 = vpack.c.b16 %v1694, %v1693
        %v1706 = vpack.c.b16 %v1696, %v1695
        %v1707 = vpack.c.b16 %v1698, %v1697
        %v1708 = vpack.c.b16 %v1700, %v1699
        %1717 = vmatpush.bf16.msra.mxu0 %v1708
        %1718 = vmatpush.bf16.msra.mxu0 %v1707
        %1719 = vmatpush.bf16.msra.mxu0 %v1706
        %1720 = vmatpush.bf16.msra.mxu0 %v1705
        %1721 = vmatpush.bf16.msra.mxu0 %v1704
        %1722 = vmatpush.bf16.msra.mxu0 %v1703
        %1723 = vmatpush.bf16.msra.mxu0 %v1702
        %1724 = vmatpush.bf16.msra.mxu0 %v1701
        %1725 = vmatmul.bf16.gmra.mxu0 %v1652
        %v1726 = vpop.f32.mrf.mxu0
        %v1727 = vadd.f32 0.0, %v1726
        %v1728 = vpop.f32.mrf.mxu0
        %v1729 = vadd.f32 0.0, %v1728
        %1730 = vdwg.mxu0
        %v1747 = vunpack.c.l.b16 %v493
        %v1748 = vunpack.c.l.b16 %v494
        %v1749 = vunpack.c.l.b16 %v495
        %v1750 = vunpack.c.l.b16 %v496
        %v1751 = vunpack.c.l.b16 %v497
        %v1752 = vunpack.c.l.b16 %v498
        %v1753 = vunpack.c.l.b16 %v499
        %v1754 = vunpack.c.l.b16 %v500
        %v1755 = vunpack.c.l.b16 %v501
        %v1756 = vunpack.c.l.b16 %v502
        %v1757 = vunpack.c.l.b16 %v503
        %v1758 = vunpack.c.l.b16 %v504
        %v1759 = vunpack.c.l.b16 %v505
        %v1760 = vunpack.c.l.b16 %v506
        %v1761 = vunpack.c.l.b16 %v507
        %v1762 = vunpack.c.l.b16 %v508
        %v1763 = vpack.c.b16 %v1748, %v1747
        %v1764 = vpack.c.b16 %v1750, %v1749
        %v1765 = vpack.c.b16 %v1752, %v1751
        %v1766 = vpack.c.b16 %v1754, %v1753
        %v1767 = vpack.c.b16 %v1756, %v1755
        %v1768 = vpack.c.b16 %v1758, %v1757
        %v1769 = vpack.c.b16 %v1760, %v1759
        %v1770 = vpack.c.b16 %v1762, %v1761
        %1779 = vmatpush.bf16.msra.mxu0 %v1770
        %1780 = vmatpush.bf16.msra.mxu0 %v1769
        %1781 = vmatpush.bf16.msra.mxu0 %v1768
        %1782 = vmatpush.bf16.msra.mxu0 %v1767
        %1783 = vmatpush.bf16.msra.mxu0 %v1766
        %1784 = vmatpush.bf16.msra.mxu0 %v1765
        %1785 = vmatpush.bf16.msra.mxu0 %v1764
        %1786 = vmatpush.bf16.msra.mxu0 %v1763
        %1787 = vmatmul.bf16.gmra.mxu0 %v421
        %v1788 = vpop.f32.mrf.mxu0
        %v1789 = vadd.f32 %v1727, %v1788
        %v1790 = vpop.f32.mrf.mxu0
        %v1791 = vadd.f32 %v1729, %v1790
        %1792 = vdwg.mxu0
        %s1793 = scalar_lea.vmem [#allocation8], 192
        %v1794 = vld [vmem:[%s1793] sm:$0xf]
        %v1795 = vld [vmem:[%s1793 + $0x4] sm:$0xf]
        %v1796 = vld [vmem:[%s1793 + $0x8] sm:$0xf]
        %v1797 = vld [vmem:[%s1793 + $0xc] sm:$0xf]
        %v1798 = vld [vmem:[%s1793 + $0x10] sm:$0xf]
        %v1799 = vld [vmem:[%s1793 + $0x14] sm:$0xf]
        %v1800 = vld [vmem:[%s1793 + $0x18] sm:$0xf]
        %v1801 = vld [vmem:[%s1793 + $0x1c] sm:$0xf]
        %v1802 = vld [vmem:[%s1793 + $0x20] sm:$0xf]
        %v1803 = vld [vmem:[%s1793 + $0x24] sm:$0xf]
        %v1804 = vld [vmem:[%s1793 + $0x28] sm:$0xf]
        %v1805 = vld [vmem:[%s1793 + $0x2c] sm:$0xf]
        %v1806 = vld [vmem:[%s1793 + $0x30] sm:$0xf]
        %v1807 = vld [vmem:[%s1793 + $0x34] sm:$0xf]
        %v1808 = vld [vmem:[%s1793 + $0x38] sm:$0xf]
        %v1809 = vld [vmem:[%s1793 + $0x3c] sm:$0xf]
        %v1810 = vld [vmem:[%s1793 + $0x40] sm:$0xf]
        %v1811 = vld [vmem:[%s1793 + $0x44] sm:$0xf]
        %v1812 = vld [vmem:[%s1793 + $0x48] sm:$0xf]
        %v1813 = vld [vmem:[%s1793 + $0x4c] sm:$0xf]
        %v1814 = vld [vmem:[%s1793 + $0x50] sm:$0xf]
        %v1815 = vld [vmem:[%s1793 + $0x54] sm:$0xf]
        %v1816 = vld [vmem:[%s1793 + $0x58] sm:$0xf]
        %v1817 = vld [vmem:[%s1793 + $0x5c] sm:$0xf]
        %v1818 = vld [vmem:[%s1793 + $0x60] sm:$0xf]
        %v1819 = vld [vmem:[%s1793 + $0x64] sm:$0xf]
        %v1820 = vld [vmem:[%s1793 + $0x68] sm:$0xf]
        %v1821 = vld [vmem:[%s1793 + $0x6c] sm:$0xf]
        %v1822 = vld [vmem:[%s1793 + $0x70] sm:$0xf]
        %v1823 = vld [vmem:[%s1793 + $0x74] sm:$0xf]
        %v1824 = vld [vmem:[%s1793 + $0x78] sm:$0xf]
        %v1825 = vld [vmem:[%s1793 + $0x7c] sm:$0xf]
        %v1826 = vld [vmem:[%s1793 + $0x80] sm:$0xf]
        %v1827 = vld [vmem:[%s1793 + $0x84] sm:$0xf]
        %v1828 = vld [vmem:[%s1793 + $0x88] sm:$0xf]
        %v1829 = vld [vmem:[%s1793 + $0x8c] sm:$0xf]
        %v1830 = vld [vmem:[%s1793 + $0x90] sm:$0xf]
        %v1831 = vld [vmem:[%s1793 + $0x94] sm:$0xf]
        %v1832 = vld [vmem:[%s1793 + $0x98] sm:$0xf]
        %v1833 = vld [vmem:[%s1793 + $0x9c] sm:$0xf]
        %v1834 = vld [vmem:[%s1793 + $0xa0] sm:$0xf]
        %v1835 = vld [vmem:[%s1793 + $0xa4] sm:$0xf]
        %v1836 = vld [vmem:[%s1793 + $0xa8] sm:$0xf]
        %v1837 = vld [vmem:[%s1793 + $0xac] sm:$0xf]
        %v1838 = vld [vmem:[%s1793 + $0xb0] sm:$0xf]
        %v1839 = vld [vmem:[%s1793 + $0xb4] sm:$0xf]
        %v1840 = vld [vmem:[%s1793 + $0xb8] sm:$0xf]
        %v1841 = vld [vmem:[%s1793 + $0xbc] sm:$0xf]
        %v1842 = vld [vmem:[#allocation2 + $0xa] sm:$0xff]
        %v1843 = vld [vmem:[#allocation2 + $0x12] sm:$0xff]
        %v1844 = vpack.c.bf16 %v1843, %v1842
        %v1861 = vunpack.c.l.b16 %v1810
        %v1862 = vunpack.c.l.b16 %v1811
        %v1863 = vunpack.c.l.b16 %v1812
        %v1864 = vunpack.c.l.b16 %v1813
        %v1865 = vunpack.c.l.b16 %v1814
        %v1866 = vunpack.c.l.b16 %v1815
        %v1867 = vunpack.c.l.b16 %v1816
        %v1868 = vunpack.c.l.b16 %v1817
        %v1869 = vunpack.c.l.b16 %v1818
        %v1870 = vunpack.c.l.b16 %v1819
        %v1871 = vunpack.c.l.b16 %v1820
        %v1872 = vunpack.c.l.b16 %v1821
        %v1873 = vunpack.c.l.b16 %v1822
        %v1874 = vunpack.c.l.b16 %v1823
        %v1875 = vunpack.c.l.b16 %v1824
        %v1876 = vunpack.c.l.b16 %v1825
        %v1877 = vpack.c.b16 %v1862, %v1861
        %v1878 = vpack.c.b16 %v1864, %v1863
        %v1879 = vpack.c.b16 %v1866, %v1865
        %v1880 = vpack.c.b16 %v1868, %v1867
        %v1881 = vpack.c.b16 %v1870, %v1869
        %v1882 = vpack.c.b16 %v1872, %v1871
        %v1883 = vpack.c.b16 %v1874, %v1873
        %v1884 = vpack.c.b16 %v1876, %v1875
        %1893 = vmatpush.bf16.msra.mxu0 %v1884
        %1894 = vmatpush.bf16.msra.mxu0 %v1883
        %1895 = vmatpush.bf16.msra.mxu0 %v1882
        %1896 = vmatpush.bf16.msra.mxu0 %v1881
        %1897 = vmatpush.bf16.msra.mxu0 %v1880
        %1898 = vmatpush.bf16.msra.mxu0 %v1879
        %1899 = vmatpush.bf16.msra.mxu0 %v1878
        %1900 = vmatpush.bf16.msra.mxu0 %v1877
        %1901 = vmatmul.bf16.gmra.mxu0 %v562
        %v1902 = vpop.f32.mrf.mxu0
        %v1903 = vadd.f32 0.0, %v1902
        %v1904 = vpop.f32.mrf.mxu0
        %v1905 = vadd.f32 0.0, %v1904
        %1906 = vdwg.mxu0
        %v1923 = vunpack.c.l.b16 %v1794
        %v1924 = vunpack.c.l.b16 %v1795
        %v1925 = vunpack.c.l.b16 %v1796
        %v1926 = vunpack.c.l.b16 %v1797
        %v1927 = vunpack.c.l.b16 %v1798
        %v1928 = vunpack.c.l.b16 %v1799
        %v1929 = vunpack.c.l.b16 %v1800
        %v1930 = vunpack.c.l.b16 %v1801
        %v1931 = vunpack.c.l.b16 %v1802
        %v1932 = vunpack.c.l.b16 %v1803
        %v1933 = vunpack.c.l.b16 %v1804
        %v1934 = vunpack.c.l.b16 %v1805
        %v1935 = vunpack.c.l.b16 %v1806
        %v1936 = vunpack.c.l.b16 %v1807
        %v1937 = vunpack.c.l.b16 %v1808
        %v1938 = vunpack.c.l.b16 %v1809
        %v1939 = vpack.c.b16 %v1924, %v1923
        %v1940 = vpack.c.b16 %v1926, %v1925
        %v1941 = vpack.c.b16 %v1928, %v1927
        %v1942 = vpack.c.b16 %v1930, %v1929
        %v1943 = vpack.c.b16 %v1932, %v1931
        %v1944 = vpack.c.b16 %v1934, %v1933
        %v1945 = vpack.c.b16 %v1936, %v1935
        %v1946 = vpack.c.b16 %v1938, %v1937
        %1955 = vmatpush.bf16.msra.mxu0 %v1946
        %1956 = vmatpush.bf16.msra.mxu0 %v1945
        %1957 = vmatpush.bf16.msra.mxu0 %v1944
        %1958 = vmatpush.bf16.msra.mxu0 %v1943
        %1959 = vmatpush.bf16.msra.mxu0 %v1942
        %1960 = vmatpush.bf16.msra.mxu0 %v1941
        %1961 = vmatpush.bf16.msra.mxu0 %v1940
        %1962 = vmatpush.bf16.msra.mxu0 %v1939
        %1963 = vmatmul.bf16.gmra.mxu0 %v1844
        %v1964 = vpop.f32.mrf.mxu0
        %v1965 = vadd.f32 %v1903, %v1964
        %v1966 = vpop.f32.mrf.mxu0
        %v1967 = vadd.f32 %v1905, %v1966
        %1968 = vdwg.mxu0
        %v1969 = vld [vmem:[#allocation2 + $0x16] sm:$0xff]
        %v1970 = vld [vmem:[#allocation2 + $0x1e] sm:$0xff]
        %v1971 = vpack.c.bf16 %v1970, %v1969
        %v1988 = vunpack.c.l.b16 %v1826
        %v1989 = vunpack.c.l.b16 %v1827
        %v1990 = vunpack.c.l.b16 %v1828
        %v1991 = vunpack.c.l.b16 %v1829
        %v1992 = vunpack.c.l.b16 %v1830
        %v1993 = vunpack.c.l.b16 %v1831
        %v1994 = vunpack.c.l.b16 %v1832
        %v1995 = vunpack.c.l.b16 %v1833
        %v1996 = vunpack.c.l.b16 %v1834
        %v1997 = vunpack.c.l.b16 %v1835
        %v1998 = vunpack.c.l.b16 %v1836
        %v1999 = vunpack.c.l.b16 %v1837
        %v2000 = vunpack.c.l.b16 %v1838
        %v2001 = vunpack.c.l.b16 %v1839
        %v2002 = vunpack.c.l.b16 %v1840
        %v2003 = vunpack.c.l.b16 %v1841
        %v2004 = vpack.c.b16 %v1989, %v1988
        %v2005 = vpack.c.b16 %v1991, %v1990
        %v2006 = vpack.c.b16 %v1993, %v1992
        %v2007 = vpack.c.b16 %v1995, %v1994
        %v2008 = vpack.c.b16 %v1997, %v1996
        %v2009 = vpack.c.b16 %v1999, %v1998
        %v2010 = vpack.c.b16 %v2001, %v2000
        %v2011 = vpack.c.b16 %v2003, %v2002
        %2020 = vmatpush.bf16.msra.mxu0 %v2011
        %2021 = vmatpush.bf16.msra.mxu0 %v2010
        %2022 = vmatpush.bf16.msra.mxu0 %v2009
        %2023 = vmatpush.bf16.msra.mxu0 %v2008
        %2024 = vmatpush.bf16.msra.mxu0 %v2007
        %2025 = vmatpush.bf16.msra.mxu0 %v2006
        %2026 = vmatpush.bf16.msra.mxu0 %v2005
        %2027 = vmatpush.bf16.msra.mxu0 %v2004
        %2028 = vmatmul.bf16.gmra.mxu0 %v1971
        %v2029 = vpop.f32.mrf.mxu0
        %v2030 = vadd.f32 0.0, %v2029
        %v2031 = vpop.f32.mrf.mxu0
        %v2032 = vadd.f32 0.0, %v2031
        %2033 = vdwg.mxu0
        %v2034 = vadd.f32 %v1965, %v2030
        %v2035 = vadd.f32 %v1967, %v2032
        %v2036 = vld [vmem:[#allocation12 + $0x2] sm:$0x1]
        %v2037 = vperm.slane %v2036, 0
        %v2038 = vadd.f32 %v2034, %v2037
        %v2039 = vadd.f32 %v2035, %v2037
        %v2040 = vmax.f32 %v2038, 0.0
        %v2041 = vmax.f32 %v2039, 0.0
        %v2042 = vand.u32 2147483647, %v2040
        %vm2043 = vcmp.le.f32.partialorder %v2042, 0.7853982
        %vm2044 = vcmp.lt.s32.totalorder %v2040, 0
        %v2045 = vand.u32 %v2040, 2139095040
        %v2046 = vshrl.u32 %v2045, 23
        %v2047 = vsub.s32 %v2046, 127
        %v2048 = vand.u32 2147483647, %v2040
        %v2049 = vand.u32 %v2048, 8388607
        %v2050 = vor.u32 %v2049, 8388608
        %v2051 = vsub.s32 0, %v2050
        %v2052 = vadd.s32 %v2047, 1
        %vm2053 = vcmp.gt.s32.totalorder %v2052, 0
        %v2054 = vsel %vm2053, %v2052, 0
        %v2055 = vshrl.u32 %v2054, 5
        %v2056 = vand.u32 %v2054, 31
        %v2057 = vsub.s32 32, %v2056
        %v2058 = vshrl.u32 683565275, %v2057
        %v2059 = vshll.u32 683565275, %v2056
        %v2060 = vshrl.u32 2475754826, %v2057
        %v2061 = vor.u32 %v2059, %v2060
        %v2062 = vshll.u32 2475754826, %v2056
        %v2063 = vshrl.u32 2131351028, %v2057
        %v2064 = vor.u32 %v2062, %v2063
        %v2065 = vshll.u32 2131351028, %v2056
        %v2066 = vshrl.u32 2102212464, %v2057
        %v2067 = vor.u32 %v2065, %v2066
        %v2068 = vshll.u32 2102212464, %v2056
        %v2069 = vshrl.u32 920167782, %v2057
        %v2070 = vor.u32 %v2068, %v2069
        %v2071 = vshll.u32 920167782, %v2056
        %v2072 = vshrl.u32 1326507024, %v2057
        %v2073 = vor.u32 %v2071, %v2072
        %vm2074 = vcmp.lt.s32.totalorder %v2055, 1
        %vm2075 = vcmp.lt.s32.totalorder %v2055, 2
        %vm2076 = vcmp.lt.s32.totalorder %v2055, 3
        %vm2077 = vcmp.lt.s32.totalorder %v2055, 4
        %v2078 = vsel %vm2074, %v2058, %v2061
        %v2079 = vsel %vm2077, %v2067, 2102212464
        %v2080 = vsel %vm2076, %v2064, %v2079
        %v2081 = vsel %vm2075, %v2078, %v2080
        %v2082 = vsel %vm2074, %v2061, %v2064
        %v2083 = vsel %vm2077, %v2070, 920167782
        %v2084 = vsel %vm2076, %v2067, %v2083
        %v2085 = vsel %vm2075, %v2082, %v2084
        %v2086 = vsel %vm2074, %v2064, %v2067
        %v2087 = vsel %vm2077, %v2073, 1326507024
        %v2088 = vsel %vm2076, %v2070, %v2087
        %v2089 = vsel %vm2075, %v2086, %v2088
        %v2090 = vshll.u32 %v2050, 8
        %v2091 = vand.u32 %v2090, 65535
        %v2092 = vshrl.u32 %v2090, 16
        %v2093 = vand.u32 %v2089, 65535
        %v2094 = vshrl.u32 %v2089, 16
        %v2095 = vmul.u32 %v2091, %v2093
        %v2096 = vmul.u32 %v2091, %v2094
        %v2097 = vmul.u32 %v2092, %v2093
        %v2098 = vmul.u32 %v2092, %v2094
        %v2099 = vshll.u32 %v2096, 16
        %v2100 = vshrl.u32 %v2096, 16
        %v2101 = vshll.u32 %v2097, 16
        %v2102 = vshrl.u32 %v2097, 16
        %vm2103 = vc.u32 %v2095, %v2099
        %v2104 = vsel %vm2103, 1, 0
        %v2105 = vadd.s32 %v2095, %v2099
        %v2106 = vadd.s32 %v2098, %v2104
        %vm2107 = vc.u32 %v2105, %v2101
        %v2108 = vsel %vm2107, 1, 0
        %v2109 = vadd.s32 %v2105, %v2101
        %v2110 = vadd.s32 %v2106, %v2108
        %v2111 = vadd.s32 %v2110, %v2100
        %v2112 = vadd.s32 %v2111, %v2102
        %v2113 = vand.u32 %v2090, 65535
        %v2114 = vshrl.u32 %v2090, 16
        %v2115 = vand.u32 %v2085, 65535
        %v2116 = vshrl.u32 %v2085, 16
        %v2117 = vmul.u32 %v2113, %v2115
        %v2118 = vmul.u32 %v2113, %v2116
        %v2119 = vmul.u32 %v2114, %v2115
        %v2120 = vmul.u32 %v2114, %v2116
        %v2121 = vshll.u32 %v2118, 16
        %v2122 = vshrl.u32 %v2118, 16
        %v2123 = vshll.u32 %v2119, 16
        %v2124 = vshrl.u32 %v2119, 16
        %vm2125 = vc.u32 %v2117, %v2121
        %v2126 = vsel %vm2125, 1, 0
        %v2127 = vadd.s32 %v2117, %v2121
        %v2128 = vadd.s32 %v2120, %v2126
        %vm2129 = vc.u32 %v2127, %v2123
        %v2130 = vsel %vm2129, 1, 0
        %v2131 = vadd.s32 %v2127, %v2123
        %v2132 = vadd.s32 %v2128, %v2130
        %v2133 = vadd.s32 %v2132, %v2122
        %v2134 = vadd.s32 %v2133, %v2124
        %v2135 = vmul.u32 %v2090, %v2081
        %v2136 = vadd.s32 %v2112, %v2131
        %vm2137 = vc.u32 %v2112, %v2131
        %v2138 = vadd.s32 %v2134, 1
        %v2139 = vsel %vm2137, %v2138, %v2134
        %v2140 = vadd.s32 %v2135, %v2139
        %v2141 = vadd.s32 %v2140, 536870912
        %v2142 = vshrl.u32 %v2141, 30
        %v2143 = vshll.u32 %v2142, 30
        %v2144 = vsub.s32 %v2140, %v2143
        %vm2145 = vcmp.lt.s32.totalorder %v2144, 0
        %v2146 = vsub.s32 0, %v2144
        %v2147 = vsel %vm2145, %v2146, %v2144
        %v2148 = vclz %v2147
        %v2149 = vsub.s32 %v2148, 2
        %vm2150 = vcmp.gt.s32.totalorder 0, %v2149
        %v2151 = vsel %vm2150, 0, %v2149
        %v2152 = vsub.s32 32, %v2151
        %v2153 = vshll.u32 %v2144, %v2151
        %v2154 = vshrl.u32 %v2136, %v2152
        %v2155 = vor.u32 %v2153, %v2154
        %v2156 = vsub.s32 4294967266, %v2151
        %v2157 = vadd.s32 %v2156, 127
        %v2158 = vshll.u32 %v2157, 23
        %v2159 = vor.u32 4788187, %v2158
        %v2160 = vand.u32 2147483647, %v2159
        %v2162 = vcvt.s32.f32 %v2155
        %v2163 = vmul.f32 %v2162, %v2160
        %v2164 = vxor.u32 %v2163, 2147483648
        %v2165 = vsel %vm2044, %v2164, %v2163
        %v2166 = vsub.s32 4, %v2142
        %v2167 = vsel %vm2044, %v2166, %v2142
        %v2168 = vsel %vm2043, %v2040, %v2165
        %v2169 = vsel %vm2043, 0, %v2167
        %v2170 = vmul.f32 %v2168, %v2168
        %v2171 = vmul.f32 %v2170, -0.001358992
        %v2172 = vadd.f32 %v2171, 0.041655596
        %v2173 = vmul.f32 %v2170, %v2172
        %v2174 = vadd.f32 %v2173, -0.4999988
        %v2175 = vmul.f32 %v2170, %v2174
        %v2176 = vadd.f32 1.0, %v2175
        %v2177 = vmul.f32 %v2168, %v2168
        %v2178 = vmul.f32 %v2177, -0.00019511016
        %v2179 = vadd.f32 %v2178, 0.008332121
        %v2180 = vmul.f32 %v2177, %v2179
        %v2181 = vadd.f32 %v2180, -0.16666654
        %v2182 = vmul.f32 %v2177, %v2181
        %v2183 = vadd.f32 %v2182, 1.0
        %v2184 = vmul.f32 %v2183, %v2168
        %vm2185 = vweird.f32 %v2040
        %v2186 = vand.u32 %v2169, 3
        %vm2187 = vcmp.lt.s32.totalorder %v2186, 2
        %vm2188 = vcmp.eq.s32.totalorder %v2186, 0
        %v2189 = vxor.u32 %v2184, 2147483648
        %v2190 = vsel %vm2188, %v2176, %v2189
        %vm2191 = vcmp.eq.s32.totalorder %v2186, 2
        %v2192 = vxor.u32 %v2176, 2147483648
        %v2193 = vsel %vm2191, %v2192, %v2184
        %v2194 = vsel %vm2187, %v2190, %v2193
        %v2195 = vsel %vm2185, nan, %v2194
        %v2196 = vand.u32 2147483647, %v2041
        %vm2197 = vcmp.le.f32.partialorder %v2196, 0.7853982
        %vm2198 = vcmp.lt.s32.totalorder %v2041, 0
        %v2199 = vand.u32 %v2041, 2139095040
        %v2200 = vshrl.u32 %v2199, 23
        %v2201 = vsub.s32 %v2200, 127
        %v2202 = vand.u32 2147483647, %v2041
        %v2203 = vand.u32 %v2202, 8388607
        %v2204 = vor.u32 %v2203, 8388608
        %v2205 = vsub.s32 0, %v2204
        %v2206 = vadd.s32 %v2201, 1
        %vm2207 = vcmp.gt.s32.totalorder %v2206, 0
        %v2208 = vsel %vm2207, %v2206, 0
        %v2209 = vshrl.u32 %v2208, 5
        %v2210 = vand.u32 %v2208, 31
        %v2211 = vsub.s32 32, %v2210
        %v2212 = vshrl.u32 683565275, %v2211
        %v2213 = vshll.u32 683565275, %v2210
        %v2214 = vshrl.u32 2475754826, %v2211
        %v2215 = vor.u32 %v2213, %v2214
        %v2216 = vshll.u32 2475754826, %v2210
        %v2217 = vshrl.u32 2131351028, %v2211
        %v2218 = vor.u32 %v2216, %v2217
        %v2219 = vshll.u32 2131351028, %v2210
        %v2220 = vshrl.u32 2102212464, %v2211
        %v2221 = vor.u32 %v2219, %v2220
        %v2222 = vshll.u32 2102212464, %v2210
        %v2223 = vshrl.u32 920167782, %v2211
        %v2224 = vor.u32 %v2222, %v2223
        %v2225 = vshll.u32 920167782, %v2210
        %v2226 = vshrl.u32 1326507024, %v2211
        %v2227 = vor.u32 %v2225, %v2226
        %vm2228 = vcmp.lt.s32.totalorder %v2209, 1
        %vm2229 = vcmp.lt.s32.totalorder %v2209, 2
        %vm2230 = vcmp.lt.s32.totalorder %v2209, 3
        %vm2231 = vcmp.lt.s32.totalorder %v2209, 4
        %v2232 = vsel %vm2228, %v2212, %v2215
        %v2233 = vsel %vm2231, %v2221, 2102212464
        %v2234 = vsel %vm2230, %v2218, %v2233
        %v2235 = vsel %vm2229, %v2232, %v2234
        %v2236 = vsel %vm2228, %v2215, %v2218
        %v2237 = vsel %vm2231, %v2224, 920167782
        %v2238 = vsel %vm2230, %v2221, %v2237
        %v2239 = vsel %vm2229, %v2236, %v2238
        %v2240 = vsel %vm2228, %v2218, %v2221
        %v2241 = vsel %vm2231, %v2227, 1326507024
        %v2242 = vsel %vm2230, %v2224, %v2241
        %v2243 = vsel %vm2229, %v2240, %v2242
        %v2244 = vshll.u32 %v2204, 8
        %v2245 = vand.u32 %v2244, 65535
        %v2246 = vshrl.u32 %v2244, 16
        %v2247 = vand.u32 %v2243, 65535
        %v2248 = vshrl.u32 %v2243, 16
        %v2249 = vmul.u32 %v2245, %v2247
        %v2250 = vmul.u32 %v2245, %v2248
        %v2251 = vmul.u32 %v2246, %v2247
        %v2252 = vmul.u32 %v2246, %v2248
        %v2253 = vshll.u32 %v2250, 16
        %v2254 = vshrl.u32 %v2250, 16
        %v2255 = vshll.u32 %v2251, 16
        %v2256 = vshrl.u32 %v2251, 16
        %vm2257 = vc.u32 %v2249, %v2253
        %v2258 = vsel %vm2257, 1, 0
        %v2259 = vadd.s32 %v2249, %v2253
        %v2260 = vadd.s32 %v2252, %v2258
        %vm2261 = vc.u32 %v2259, %v2255
        %v2262 = vsel %vm2261, 1, 0
        %v2263 = vadd.s32 %v2259, %v2255
        %v2264 = vadd.s32 %v2260, %v2262
        %v2265 = vadd.s32 %v2264, %v2254
        %v2266 = vadd.s32 %v2265, %v2256
        %v2267 = vand.u32 %v2244, 65535
        %v2268 = vshrl.u32 %v2244, 16
        %v2269 = vand.u32 %v2239, 65535
        %v2270 = vshrl.u32 %v2239, 16
        %v2271 = vmul.u32 %v2267, %v2269
        %v2272 = vmul.u32 %v2267, %v2270
        %v2273 = vmul.u32 %v2268, %v2269
        %v2274 = vmul.u32 %v2268, %v2270
        %v2275 = vshll.u32 %v2272, 16
        %v2276 = vshrl.u32 %v2272, 16
        %v2277 = vshll.u32 %v2273, 16
        %v2278 = vshrl.u32 %v2273, 16
        %vm2279 = vc.u32 %v2271, %v2275
        %v2280 = vsel %vm2279, 1, 0
        %v2281 = vadd.s32 %v2271, %v2275
        %v2282 = vadd.s32 %v2274, %v2280
        %vm2283 = vc.u32 %v2281, %v2277
        %v2284 = vsel %vm2283, 1, 0
        %v2285 = vadd.s32 %v2281, %v2277
        %v2286 = vadd.s32 %v2282, %v2284
        %v2287 = vadd.s32 %v2286, %v2276
        %v2288 = vadd.s32 %v2287, %v2278
        %v2289 = vmul.u32 %v2244, %v2235
        %v2290 = vadd.s32 %v2266, %v2285
        %vm2291 = vc.u32 %v2266, %v2285
        %v2292 = vadd.s32 %v2288, 1
        %v2293 = vsel %vm2291, %v2292, %v2288
        %v2294 = vadd.s32 %v2289, %v2293
        %v2295 = vadd.s32 %v2294, 536870912
        %v2296 = vshrl.u32 %v2295, 30
        %v2297 = vshll.u32 %v2296, 30
        %v2298 = vsub.s32 %v2294, %v2297
        %vm2299 = vcmp.lt.s32.totalorder %v2298, 0
        %v2300 = vsub.s32 0, %v2298
        %v2301 = vsel %vm2299, %v2300, %v2298
        %v2302 = vclz %v2301
        %v2303 = vsub.s32 %v2302, 2
        %vm2304 = vcmp.gt.s32.totalorder 0, %v2303
        %v2305 = vsel %vm2304, 0, %v2303
        %v2306 = vsub.s32 32, %v2305
        %v2307 = vshll.u32 %v2298, %v2305
        %v2308 = vshrl.u32 %v2290, %v2306
        %v2309 = vor.u32 %v2307, %v2308
        %v2310 = vsub.s32 4294967266, %v2305
        %v2311 = vadd.s32 %v2310, 127
        %v2312 = vshll.u32 %v2311, 23
        %v2313 = vor.u32 4788187, %v2312
        %v2314 = vand.u32 2147483647, %v2313
        %v2316 = vcvt.s32.f32 %v2309
        %v2317 = vmul.f32 %v2316, %v2314
        %v2318 = vxor.u32 %v2317, 2147483648
        %v2319 = vsel %vm2198, %v2318, %v2317
        %v2320 = vsub.s32 4, %v2296
        %v2321 = vsel %vm2198, %v2320, %v2296
        %v2322 = vsel %vm2197, %v2041, %v2319
        %v2323 = vsel %vm2197, 0, %v2321
        %v2324 = vmul.f32 %v2322, %v2322
        %v2325 = vmul.f32 %v2324, -0.001358992
        %v2326 = vadd.f32 %v2325, 0.041655596
        %v2327 = vmul.f32 %v2324, %v2326
        %v2328 = vadd.f32 %v2327, -0.4999988
        %v2329 = vmul.f32 %v2324, %v2328
        %v2330 = vadd.f32 1.0, %v2329
        %v2331 = vmul.f32 %v2322, %v2322
        %v2332 = vmul.f32 %v2331, -0.00019511016
        %v2333 = vadd.f32 %v2332, 0.008332121
        %v2334 = vmul.f32 %v2331, %v2333
        %v2335 = vadd.f32 %v2334, -0.16666654
        %v2336 = vmul.f32 %v2331, %v2335
        %v2337 = vadd.f32 %v2336, 1.0
        %v2338 = vmul.f32 %v2337, %v2322
        %vm2339 = vweird.f32 %v2041
        %v2340 = vand.u32 %v2323, 3
        %vm2341 = vcmp.lt.s32.totalorder %v2340, 2
        %vm2342 = vcmp.eq.s32.totalorder %v2340, 0
        %v2343 = vxor.u32 %v2338, 2147483648
        %v2344 = vsel %vm2342, %v2330, %v2343
        %vm2345 = vcmp.eq.s32.totalorder %v2340, 2
        %v2346 = vxor.u32 %v2330, 2147483648
        %v2347 = vsel %vm2345, %v2346, %v2338
        %v2348 = vsel %vm2341, %v2344, %v2347
        %v2349 = vsel %vm2339, nan, %v2348
        %v2350 = vmul.f32 %v2040, %v2195
        %v2351 = vmul.f32 %v2041, %v2349
        %v2352 = vpack.c.bf16 %v2351, %v2350
        %v2353 = vand.u32 2147483647, %v2040
        %vm2354 = vcmp.le.f32.partialorder %v2353, 0.7853982
        %vm2355 = vcmp.lt.s32.totalorder %v2040, 0
        %v2356 = vand.u32 %v2040, 2139095040
        %v2357 = vshrl.u32 %v2356, 23
        %v2358 = vsub.s32 %v2357, 127
        %v2359 = vand.u32 2147483647, %v2040
        %v2360 = vand.u32 %v2359, 8388607
        %v2361 = vor.u32 %v2360, 8388608
        %v2362 = vsub.s32 0, %v2361
        %v2363 = vadd.s32 %v2358, 1
        %vm2364 = vcmp.gt.s32.totalorder %v2363, 0
        %v2365 = vsel %vm2364, %v2363, 0
        %v2366 = vshrl.u32 %v2365, 5
        %v2367 = vand.u32 %v2365, 31
        %v2368 = vsub.s32 32, %v2367
        %v2369 = vshrl.u32 683565275, %v2368
        %v2370 = vshll.u32 683565275, %v2367
        %v2371 = vshrl.u32 2475754826, %v2368
        %v2372 = vor.u32 %v2370, %v2371
        %v2373 = vshll.u32 2475754826, %v2367
        %v2374 = vshrl.u32 2131351028, %v2368
        %v2375 = vor.u32 %v2373, %v2374
        %v2376 = vshll.u32 2131351028, %v2367
        %v2377 = vshrl.u32 2102212464, %v2368
        %v2378 = vor.u32 %v2376, %v2377
        %v2379 = vshll.u32 2102212464, %v2367
        %v2380 = vshrl.u32 920167782, %v2368
        %v2381 = vor.u32 %v2379, %v2380
        %v2382 = vshll.u32 920167782, %v2367
        %v2383 = vshrl.u32 1326507024, %v2368
        %v2384 = vor.u32 %v2382, %v2383
        %vm2385 = vcmp.lt.s32.totalorder %v2366, 1
        %vm2386 = vcmp.lt.s32.totalorder %v2366, 2
        %vm2387 = vcmp.lt.s32.totalorder %v2366, 3
        %vm2388 = vcmp.lt.s32.totalorder %v2366, 4
        %v2389 = vsel %vm2385, %v2369, %v2372
        %v2390 = vsel %vm2388, %v2378, 2102212464
        %v2391 = vsel %vm2387, %v2375, %v2390
        %v2392 = vsel %vm2386, %v2389, %v2391
        %v2393 = vsel %vm2385, %v2372, %v2375
        %v2394 = vsel %vm2388, %v2381, 920167782
        %v2395 = vsel %vm2387, %v2378, %v2394
        %v2396 = vsel %vm2386, %v2393, %v2395
        %v2397 = vsel %vm2385, %v2375, %v2378
        %v2398 = vsel %vm2388, %v2384, 1326507024
        %v2399 = vsel %vm2387, %v2381, %v2398
        %v2400 = vsel %vm2386, %v2397, %v2399
        %v2401 = vshll.u32 %v2361, 8
        %v2402 = vand.u32 %v2401, 65535
        %v2403 = vshrl.u32 %v2401, 16
        %v2404 = vand.u32 %v2400, 65535
        %v2405 = vshrl.u32 %v2400, 16
        %v2406 = vmul.u32 %v2402, %v2404
        %v2407 = vmul.u32 %v2402, %v2405
        %v2408 = vmul.u32 %v2403, %v2404
        %v2409 = vmul.u32 %v2403, %v2405
        %v2410 = vshll.u32 %v2407, 16
        %v2411 = vshrl.u32 %v2407, 16
        %v2412 = vshll.u32 %v2408, 16
        %v2413 = vshrl.u32 %v2408, 16
        %vm2414 = vc.u32 %v2406, %v2410
        %v2415 = vsel %vm2414, 1, 0
        %v2416 = vadd.s32 %v2406, %v2410
        %v2417 = vadd.s32 %v2409, %v2415
        %vm2418 = vc.u32 %v2416, %v2412
        %v2419 = vsel %vm2418, 1, 0
        %v2420 = vadd.s32 %v2416, %v2412
        %v2421 = vadd.s32 %v2417, %v2419
        %v2422 = vadd.s32 %v2421, %v2411
        %v2423 = vadd.s32 %v2422, %v2413
        %v2424 = vand.u32 %v2401, 65535
        %v2425 = vshrl.u32 %v2401, 16
        %v2426 = vand.u32 %v2396, 65535
        %v2427 = vshrl.u32 %v2396, 16
        %v2428 = vmul.u32 %v2424, %v2426
        %v2429 = vmul.u32 %v2424, %v2427
        %v2430 = vmul.u32 %v2425, %v2426
        %v2431 = vmul.u32 %v2425, %v2427
        %v2432 = vshll.u32 %v2429, 16
        %v2433 = vshrl.u32 %v2429, 16
        %v2434 = vshll.u32 %v2430, 16
        %v2435 = vshrl.u32 %v2430, 16
        %vm2436 = vc.u32 %v2428, %v2432
        %v2437 = vsel %vm2436, 1, 0
        %v2438 = vadd.s32 %v2428, %v2432
        %v2439 = vadd.s32 %v2431, %v2437
        %vm2440 = vc.u32 %v2438, %v2434
        %v2441 = vsel %vm2440, 1, 0
        %v2442 = vadd.s32 %v2438, %v2434
        %v2443 = vadd.s32 %v2439, %v2441
        %v2444 = vadd.s32 %v2443, %v2433
        %v2445 = vadd.s32 %v2444, %v2435
        %v2446 = vmul.u32 %v2401, %v2392
        %v2447 = vadd.s32 %v2423, %v2442
        %vm2448 = vc.u32 %v2423, %v2442
        %v2449 = vadd.s32 %v2445, 1
        %v2450 = vsel %vm2448, %v2449, %v2445
        %v2451 = vadd.s32 %v2446, %v2450
        %v2452 = vadd.s32 %v2451, 536870912
        %v2453 = vshrl.u32 %v2452, 30
        %v2454 = vshll.u32 %v2453, 30
        %v2455 = vsub.s32 %v2451, %v2454
        %vm2456 = vcmp.lt.s32.totalorder %v2455, 0
        %v2457 = vsub.s32 0, %v2455
        %v2458 = vsel %vm2456, %v2457, %v2455
        %v2459 = vclz %v2458
        %v2460 = vsub.s32 %v2459, 2
        %vm2461 = vcmp.gt.s32.totalorder 0, %v2460
        %v2462 = vsel %vm2461, 0, %v2460
        %v2463 = vsub.s32 32, %v2462
        %v2464 = vshll.u32 %v2455, %v2462
        %v2465 = vshrl.u32 %v2447, %v2463
        %v2466 = vor.u32 %v2464, %v2465
        %v2467 = vsub.s32 4294967266, %v2462
        %v2468 = vadd.s32 %v2467, 127
        %v2469 = vshll.u32 %v2468, 23
        %v2470 = vor.u32 4788187, %v2469
        %v2471 = vand.u32 2147483647, %v2470
        %v2473 = vcvt.s32.f32 %v2466
        %v2474 = vmul.f32 %v2473, %v2471
        %v2475 = vxor.u32 %v2474, 2147483648
        %v2476 = vsel %vm2355, %v2475, %v2474
        %v2477 = vsub.s32 4, %v2453
        %v2478 = vsel %vm2355, %v2477, %v2453
        %v2479 = vsel %vm2354, %v2040, %v2476
        %v2480 = vsel %vm2354, 0, %v2478
        %v2481 = vmul.f32 %v2479, %v2479
        %v2482 = vmul.f32 %v2481, -0.001358992
        %v2483 = vadd.f32 %v2482, 0.041655596
        %v2484 = vmul.f32 %v2481, %v2483
        %v2485 = vadd.f32 %v2484, -0.4999988
        %v2486 = vmul.f32 %v2481, %v2485
        %v2487 = vadd.f32 1.0, %v2486
        %v2488 = vmul.f32 %v2479, %v2479
        %v2489 = vmul.f32 %v2488, -0.00019511016
        %v2490 = vadd.f32 %v2489, 0.008332121
        %v2491 = vmul.f32 %v2488, %v2490
        %v2492 = vadd.f32 %v2491, -0.16666654
        %v2493 = vmul.f32 %v2488, %v2492
        %v2494 = vadd.f32 %v2493, 1.0
        %v2495 = vmul.f32 %v2494, %v2479
        %vm2496 = vweird.f32 %v2040
        %v2497 = vadd.s32 %v2480, 3
        %v2498 = vand.u32 %v2497, 3
        %vm2499 = vcmp.lt.s32.totalorder %v2498, 2
        %vm2500 = vcmp.eq.s32.totalorder %v2498, 0
        %v2501 = vxor.u32 %v2495, 2147483648
        %v2502 = vsel %vm2500, %v2487, %v2501
        %vm2503 = vcmp.eq.s32.totalorder %v2498, 2
        %v2504 = vxor.u32 %v2487, 2147483648
        %v2505 = vsel %vm2503, %v2504, %v2495
        %v2506 = vsel %vm2499, %v2502, %v2505
        %v2507 = vsel %vm2496, nan, %v2506
        %v2508 = vand.u32 2147483647, %v2041
        %vm2509 = vcmp.le.f32.partialorder %v2508, 0.7853982
        %vm2510 = vcmp.lt.s32.totalorder %v2041, 0
        %v2511 = vand.u32 %v2041, 2139095040
        %v2512 = vshrl.u32 %v2511, 23
        %v2513 = vsub.s32 %v2512, 127
        %v2514 = vand.u32 2147483647, %v2041
        %v2515 = vand.u32 %v2514, 8388607
        %v2516 = vor.u32 %v2515, 8388608
        %v2517 = vsub.s32 0, %v2516
        %v2518 = vadd.s32 %v2513, 1
        %vm2519 = vcmp.gt.s32.totalorder %v2518, 0
        %v2520 = vsel %vm2519, %v2518, 0
        %v2521 = vshrl.u32 %v2520, 5
        %v2522 = vand.u32 %v2520, 31
        %v2523 = vsub.s32 32, %v2522
        %v2524 = vshrl.u32 683565275, %v2523
        %v2525 = vshll.u32 683565275, %v2522
        %v2526 = vshrl.u32 2475754826, %v2523
        %v2527 = vor.u32 %v2525, %v2526
        %v2528 = vshll.u32 2475754826, %v2522
        %v2529 = vshrl.u32 2131351028, %v2523
        %v2530 = vor.u32 %v2528, %v2529
        %v2531 = vshll.u32 2131351028, %v2522
        %v2532 = vshrl.u32 2102212464, %v2523
        %v2533 = vor.u32 %v2531, %v2532
        %v2534 = vshll.u32 2102212464, %v2522
        %v2535 = vshrl.u32 920167782, %v2523
        %v2536 = vor.u32 %v2534, %v2535
        %v2537 = vshll.u32 920167782, %v2522
        %v2538 = vshrl.u32 1326507024, %v2523
        %v2539 = vor.u32 %v2537, %v2538
        %vm2540 = vcmp.lt.s32.totalorder %v2521, 1
        %vm2541 = vcmp.lt.s32.totalorder %v2521, 2
        %vm2542 = vcmp.lt.s32.totalorder %v2521, 3
        %vm2543 = vcmp.lt.s32.totalorder %v2521, 4
        %v2544 = vsel %vm2540, %v2524, %v2527
        %v2545 = vsel %vm2543, %v2533, 2102212464
        %v2546 = vsel %vm2542, %v2530, %v2545
        %v2547 = vsel %vm2541, %v2544, %v2546
        %v2548 = vsel %vm2540, %v2527, %v2530
        %v2549 = vsel %vm2543, %v2536, 920167782
        %v2550 = vsel %vm2542, %v2533, %v2549
        %v2551 = vsel %vm2541, %v2548, %v2550
        %v2552 = vsel %vm2540, %v2530, %v2533
        %v2553 = vsel %vm2543, %v2539, 1326507024
        %v2554 = vsel %vm2542, %v2536, %v2553
        %v2555 = vsel %vm2541, %v2552, %v2554
        %v2556 = vshll.u32 %v2516, 8
        %v2557 = vand.u32 %v2556, 65535
        %v2558 = vshrl.u32 %v2556, 16
        %v2559 = vand.u32 %v2555, 65535
        %v2560 = vshrl.u32 %v2555, 16
        %v2561 = vmul.u32 %v2557, %v2559
        %v2562 = vmul.u32 %v2557, %v2560
        %v2563 = vmul.u32 %v2558, %v2559
        %v2564 = vmul.u32 %v2558, %v2560
        %v2565 = vshll.u32 %v2562, 16
        %v2566 = vshrl.u32 %v2562, 16
        %v2567 = vshll.u32 %v2563, 16
        %v2568 = vshrl.u32 %v2563, 16
        %vm2569 = vc.u32 %v2561, %v2565
        %v2570 = vsel %vm2569, 1, 0
        %v2571 = vadd.s32 %v2561, %v2565
        %v2572 = vadd.s32 %v2564, %v2570
        %vm2573 = vc.u32 %v2571, %v2567
        %v2574 = vsel %vm2573, 1, 0
        %v2575 = vadd.s32 %v2571, %v2567
        %v2576 = vadd.s32 %v2572, %v2574
        %v2577 = vadd.s32 %v2576, %v2566
        %v2578 = vadd.s32 %v2577, %v2568
        %v2579 = vand.u32 %v2556, 65535
        %v2580 = vshrl.u32 %v2556, 16
        %v2581 = vand.u32 %v2551, 65535
        %v2582 = vshrl.u32 %v2551, 16
        %v2583 = vmul.u32 %v2579, %v2581
        %v2584 = vmul.u32 %v2579, %v2582
        %v2585 = vmul.u32 %v2580, %v2581
        %v2586 = vmul.u32 %v2580, %v2582
        %v2587 = vshll.u32 %v2584, 16
        %v2588 = vshrl.u32 %v2584, 16
        %v2589 = vshll.u32 %v2585, 16
        %v2590 = vshrl.u32 %v2585, 16
        %vm2591 = vc.u32 %v2583, %v2587
        %v2592 = vsel %vm2591, 1, 0
        %v2593 = vadd.s32 %v2583, %v2587
        %v2594 = vadd.s32 %v2586, %v2592
        %vm2595 = vc.u32 %v2593, %v2589
        %v2596 = vsel %vm2595, 1, 0
        %v2597 = vadd.s32 %v2593, %v2589
        %v2598 = vadd.s32 %v2594, %v2596
        %v2599 = vadd.s32 %v2598, %v2588
        %v2600 = vadd.s32 %v2599, %v2590
        %v2601 = vmul.u32 %v2556, %v2547
        %v2602 = vadd.s32 %v2578, %v2597
        %vm2603 = vc.u32 %v2578, %v2597
        %v2604 = vadd.s32 %v2600, 1
        %v2605 = vsel %vm2603, %v2604, %v2600
        %v2606 = vadd.s32 %v2601, %v2605
        %v2607 = vadd.s32 %v2606, 536870912
        %v2608 = vshrl.u32 %v2607, 30
        %v2609 = vshll.u32 %v2608, 30
        %v2610 = vsub.s32 %v2606, %v2609
        %vm2611 = vcmp.lt.s32.totalorder %v2610, 0
        %v2612 = vsub.s32 0, %v2610
        %v2613 = vsel %vm2611, %v2612, %v2610
        %v2614 = vclz %v2613
        %v2615 = vsub.s32 %v2614, 2
        %vm2616 = vcmp.gt.s32.totalorder 0, %v2615
        %v2617 = vsel %vm2616, 0, %v2615
        %v2618 = vsub.s32 32, %v2617
        %v2619 = vshll.u32 %v2610, %v2617
        %v2620 = vshrl.u32 %v2602, %v2618
        %v2621 = vor.u32 %v2619, %v2620
        %v2622 = vsub.s32 4294967266, %v2617
        %v2623 = vadd.s32 %v2622, 127
        %v2624 = vshll.u32 %v2623, 23
        %v2625 = vor.u32 4788187, %v2624
        %v2626 = vand.u32 2147483647, %v2625
        %v2628 = vcvt.s32.f32 %v2621
        %v2629 = vmul.f32 %v2628, %v2626
        %v2630 = vxor.u32 %v2629, 2147483648
        %v2631 = vsel %vm2510, %v2630, %v2629
        %v2632 = vsub.s32 4, %v2608
        %v2633 = vsel %vm2510, %v2632, %v2608
        %v2634 = vsel %vm2509, %v2041, %v2631
        %v2635 = vsel %vm2509, 0, %v2633
        %v2636 = vmul.f32 %v2634, %v2634
        %v2637 = vmul.f32 %v2636, -0.001358992
        %v2638 = vadd.f32 %v2637, 0.041655596
        %v2639 = vmul.f32 %v2636, %v2638
        %v2640 = vadd.f32 %v2639, -0.4999988
        %v2641 = vmul.f32 %v2636, %v2640
        %v2642 = vadd.f32 1.0, %v2641
        %v2643 = vmul.f32 %v2634, %v2634
        %v2644 = vmul.f32 %v2643, -0.00019511016
        %v2645 = vadd.f32 %v2644, 0.008332121
        %v2646 = vmul.f32 %v2643, %v2645
        %v2647 = vadd.f32 %v2646, -0.16666654
        %v2648 = vmul.f32 %v2643, %v2647
        %v2649 = vadd.f32 %v2648, 1.0
        %v2650 = vmul.f32 %v2649, %v2634
        %vm2651 = vweird.f32 %v2041
        %v2652 = vadd.s32 %v2635, 3
        %v2653 = vand.u32 %v2652, 3
        %vm2654 = vcmp.lt.s32.totalorder %v2653, 2
        %vm2655 = vcmp.eq.s32.totalorder %v2653, 0
        %v2656 = vxor.u32 %v2650, 2147483648
        %v2657 = vsel %vm2655, %v2642, %v2656
        %vm2658 = vcmp.eq.s32.totalorder %v2653, 2
        %v2659 = vxor.u32 %v2642, 2147483648
        %v2660 = vsel %vm2658, %v2659, %v2650
        %v2661 = vsel %vm2654, %v2657, %v2660
        %v2662 = vsel %vm2651, nan, %v2661
        %v2663 = vmul.f32 %v2040, %v2507
        %v2664 = vmul.f32 %v2041, %v2662
        %v2665 = vpack.c.bf16 %v2664, %v2663
        %2666 = vmatpush.bf16.msra.mxu0 %v1424
        %2667 = vmatpush.bf16.msra.mxu0 %v1423
        %2668 = vmatpush.bf16.msra.mxu0 %v1422
        %2669 = vmatpush.bf16.msra.mxu0 %v1421
        %2670 = vmatpush.bf16.msra.mxu0 %v1420
        %2671 = vmatpush.bf16.msra.mxu0 %v1419
        %2672 = vmatpush.bf16.msra.mxu0 %v1418
        %2673 = vmatpush.bf16.msra.mxu0 %v1417
        %2674 = vmatmul.bf16.gmra.mxu0 %v2352
        %v2675 = vpop.f32.mrf.mxu0
        %v2676 = vadd.f32 %v1384, %v2675
        %v2677 = vpop.f32.mrf.mxu0
        %v2678 = vadd.f32 %v1384, %v2677
        %2679 = vdwg.mxu0
        %v2680 = vmax.f32 %v2676, 0.0
        %v2681 = vmax.f32 %v2678, 0.0
        %2682 = vmatpush.bf16.msra.mxu0 %v1489
        %2683 = vmatpush.bf16.msra.mxu0 %v1488
        %2684 = vmatpush.bf16.msra.mxu0 %v1487
        %2685 = vmatpush.bf16.msra.mxu0 %v1486
        %2686 = vmatpush.bf16.msra.mxu0 %v1485
        %2687 = vmatpush.bf16.msra.mxu0 %v1484
        %2688 = vmatpush.bf16.msra.mxu0 %v1483
        %2689 = vmatpush.bf16.msra.mxu0 %v1482
        %2690 = vmatmul.bf16.gmra.mxu0 %v2665
        %v2691 = vpop.f32.mrf.mxu0
        %v2692 = vadd.f32 %v1449, %v2691
        %v2693 = vpop.f32.mrf.mxu0
        %v2694 = vadd.f32 %v1449, %v2693
        %2695 = vdwg.mxu0
        %v2696 = vmax.f32 %v2692, 0.0
        %v2697 = vmax.f32 %v2694, 0.0
        %v2698 = vmul.f32 %v2696, %v2680
        %v2699 = vmul.f32 %v2697, %v2681
        %v2700 = vpack.c.bf16 %v2699, %v2698
        %2701 = vmatpush.bf16.msra.mxu0 %v1557
        %2702 = vmatpush.bf16.msra.mxu0 %v1556
        %2703 = vmatpush.bf16.msra.mxu0 %v1555
        %2704 = vmatpush.bf16.msra.mxu0 %v1554
        %2705 = vmatpush.bf16.msra.mxu0 %v1553
        %2706 = vmatpush.bf16.msra.mxu0 %v1552
        %2707 = vmatpush.bf16.msra.mxu0 %v1551
        %2708 = vmatpush.bf16.msra.mxu0 %v1550
        %2709 = vmatmul.bf16.gmra.mxu0 %v2700
        %v2710 = vpop.f32.mrf.mxu0
        %v2711 = vadd.f32 %v1517, %v2710
        %v2712 = vpop.f32.mrf.mxu0
        %v2713 = vadd.f32 %v1517, %v2712
        %2714 = vdwg.mxu0
        %v2715 = vmax.f32 %v2711, 0.0
        %v2716 = vmax.f32 %v2713, 0.0
        %v2717 = vadd.f32 %v2696, %v2680
        %v2718 = vadd.f32 %v2697, %v2681
        %v2719 = vpack.c.bf16 %v2718, %v2717
        %2720 = vmatpush.bf16.msra.mxu0 %v1625
        %2721 = vmatpush.bf16.msra.mxu0 %v1624
        %2722 = vmatpush.bf16.msra.mxu0 %v1623
        %2723 = vmatpush.bf16.msra.mxu0 %v1622
        %2724 = vmatpush.bf16.msra.mxu0 %v1621
        %2725 = vmatpush.bf16.msra.mxu0 %v1620
        %2726 = vmatpush.bf16.msra.mxu0 %v1619
        %2727 = vmatpush.bf16.msra.mxu0 %v1618
        %2728 = vmatmul.bf16.gmra.mxu0 %v2719
        %v2729 = vpop.f32.mrf.mxu0
        %v2730 = vadd.f32 %v1585, %v2729
        %v2731 = vpop.f32.mrf.mxu0
        %v2732 = vadd.f32 %v1585, %v2731
        %2733 = vdwg.mxu0
        %v2734 = vmax.f32 %v2730, 0.0
        %v2735 = vmax.f32 %v2732, 0.0
        %v2736 = vadd.f32 %v2734, %v2715
        %v2737 = vadd.f32 %v2735, %v2716
        %v2738 = vpack.c.bf16 %v2737, %v2736
        %v2739 = vld [vmem:[#allocation11 + $0x40] sm:$0xf]
        %v2740 = vld [vmem:[#allocation11 + $0x44] sm:$0xf]
        %v2741 = vld [vmem:[#allocation11 + $0x48] sm:$0xf]
        %v2742 = vld [vmem:[#allocation11 + $0x4c] sm:$0xf]
        %v2743 = vld [vmem:[#allocation11 + $0x50] sm:$0xf]
        %v2744 = vld [vmem:[#allocation11 + $0x54] sm:$0xf]
        %v2745 = vld [vmem:[#allocation11 + $0x58] sm:$0xf]
        %v2746 = vld [vmem:[#allocation11 + $0x5c] sm:$0xf]
        %v2747 = vld [vmem:[#allocation11 + $0x60] sm:$0xf]
        %v2748 = vld [vmem:[#allocation11 + $0x64] sm:$0xf]
        %v2749 = vld [vmem:[#allocation11 + $0x68] sm:$0xf]
        %v2750 = vld [vmem:[#allocation11 + $0x6c] sm:$0xf]
        %v2751 = vld [vmem:[#allocation11 + $0x70] sm:$0xf]
        %v2752 = vld [vmem:[#allocation11 + $0x74] sm:$0xf]
        %v2753 = vld [vmem:[#allocation11 + $0x78] sm:$0xf]
        %v2754 = vld [vmem:[#allocation11 + $0x7c] sm:$0xf]
        %v2771 = vunpack.c.l.b16 %v2739
        %v2772 = vunpack.c.l.b16 %v2740
        %v2773 = vunpack.c.l.b16 %v2741
        %v2774 = vunpack.c.l.b16 %v2742
        %v2775 = vunpack.c.l.b16 %v2743
        %v2776 = vunpack.c.l.b16 %v2744
        %v2777 = vunpack.c.l.b16 %v2745
        %v2778 = vunpack.c.l.b16 %v2746
        %v2779 = vunpack.c.l.b16 %v2747
        %v2780 = vunpack.c.l.b16 %v2748
        %v2781 = vunpack.c.l.b16 %v2749
        %v2782 = vunpack.c.l.b16 %v2750
        %v2783 = vunpack.c.l.b16 %v2751
        %v2784 = vunpack.c.l.b16 %v2752
        %v2785 = vunpack.c.l.b16 %v2753
        %v2786 = vunpack.c.l.b16 %v2754
        %v2787 = vpack.c.b16 %v2772, %v2771
        %v2788 = vpack.c.b16 %v2774, %v2773
        %v2789 = vpack.c.b16 %v2776, %v2775
        %v2790 = vpack.c.b16 %v2778, %v2777
        %v2791 = vpack.c.b16 %v2780, %v2779
        %v2792 = vpack.c.b16 %v2782, %v2781
        %v2793 = vpack.c.b16 %v2784, %v2783
        %v2794 = vpack.c.b16 %v2786, %v2785
        %2803 = vmatpush.bf16.msra.mxu0 %v2794
        %2804 = vmatpush.bf16.msra.mxu0 %v2793
        %2805 = vmatpush.bf16.msra.mxu0 %v2792
        %2806 = vmatpush.bf16.msra.mxu0 %v2791
        %2807 = vmatpush.bf16.msra.mxu0 %v2790
        %2808 = vmatpush.bf16.msra.mxu0 %v2789
        %2809 = vmatpush.bf16.msra.mxu0 %v2788
        %2810 = vmatpush.bf16.msra.mxu0 %v2787
        %2811 = vmatmul.bf16.gmra.mxu0 %v2738
        %v2812 = vpop.f32.mrf.mxu0
        %v2813 = vadd.f32 0.0, %v2812
        %v2814 = vpop.f32.mrf.mxu0
        %v2815 = vadd.f32 0.0, %v2814
        %2816 = vdwg.mxu0
        %v2817 = vadd.f32 %v1789, %v2813
        %v2818 = vadd.f32 %v1791, %v2815
        %s2819 = scalar_lea.vmem [#allocation8], 384
        %v2820 = vld [vmem:[%s2819] sm:$0xf]
        %v2821 = vld [vmem:[%s2819 + $0x4] sm:$0xf]
        %v2822 = vld [vmem:[%s2819 + $0x8] sm:$0xf]
        %v2823 = vld [vmem:[%s2819 + $0xc] sm:$0xf]
        %v2824 = vld [vmem:[%s2819 + $0x10] sm:$0xf]
        %v2825 = vld [vmem:[%s2819 + $0x14] sm:$0xf]
        %v2826 = vld [vmem:[%s2819 + $0x18] sm:$0xf]
        %v2827 = vld [vmem:[%s2819 + $0x1c] sm:$0xf]
        %v2828 = vld [vmem:[%s2819 + $0x20] sm:$0xf]
        %v2829 = vld [vmem:[%s2819 + $0x24] sm:$0xf]
        %v2830 = vld [vmem:[%s2819 + $0x28] sm:$0xf]
        %v2831 = vld [vmem:[%s2819 + $0x2c] sm:$0xf]
        %v2832 = vld [vmem:[%s2819 + $0x30] sm:$0xf]
        %v2833 = vld [vmem:[%s2819 + $0x34] sm:$0xf]
        %v2834 = vld [vmem:[%s2819 + $0x38] sm:$0xf]
        %v2835 = vld [vmem:[%s2819 + $0x3c] sm:$0xf]
        %v2836 = vld [vmem:[%s2819 + $0x40] sm:$0xf]
        %v2837 = vld [vmem:[%s2819 + $0x44] sm:$0xf]
        %v2838 = vld [vmem:[%s2819 + $0x48] sm:$0xf]
        %v2839 = vld [vmem:[%s2819 + $0x4c] sm:$0xf]
        %v2840 = vld [vmem:[%s2819 + $0x50] sm:$0xf]
        %v2841 = vld [vmem:[%s2819 + $0x54] sm:$0xf]
        %v2842 = vld [vmem:[%s2819 + $0x58] sm:$0xf]
        %v2843 = vld [vmem:[%s2819 + $0x5c] sm:$0xf]
        %v2844 = vld [vmem:[%s2819 + $0x60] sm:$0xf]
        %v2845 = vld [vmem:[%s2819 + $0x64] sm:$0xf]
        %v2846 = vld [vmem:[%s2819 + $0x68] sm:$0xf]
        %v2847 = vld [vmem:[%s2819 + $0x6c] sm:$0xf]
        %v2848 = vld [vmem:[%s2819 + $0x70] sm:$0xf]
        %v2849 = vld [vmem:[%s2819 + $0x74] sm:$0xf]
        %v2850 = vld [vmem:[%s2819 + $0x78] sm:$0xf]
        %v2851 = vld [vmem:[%s2819 + $0x7c] sm:$0xf]
        %v2852 = vld [vmem:[%s2819 + $0x80] sm:$0xf]
        %v2853 = vld [vmem:[%s2819 + $0x84] sm:$0xf]
        %v2854 = vld [vmem:[%s2819 + $0x88] sm:$0xf]
        %v2855 = vld [vmem:[%s2819 + $0x8c] sm:$0xf]
        %v2856 = vld [vmem:[%s2819 + $0x90] sm:$0xf]
        %v2857 = vld [vmem:[%s2819 + $0x94] sm:$0xf]
        %v2858 = vld [vmem:[%s2819 + $0x98] sm:$0xf]
        %v2859 = vld [vmem:[%s2819 + $0x9c] sm:$0xf]
        %v2860 = vld [vmem:[%s2819 + $0xa0] sm:$0xf]
        %v2861 = vld [vmem:[%s2819 + $0xa4] sm:$0xf]
        %v2862 = vld [vmem:[%s2819 + $0xa8] sm:$0xf]
        %v2863 = vld [vmem:[%s2819 + $0xac] sm:$0xf]
        %v2864 = vld [vmem:[%s2819 + $0xb0] sm:$0xf]
        %v2865 = vld [vmem:[%s2819 + $0xb4] sm:$0xf]
        %v2866 = vld [vmem:[%s2819 + $0xb8] sm:$0xf]
        %v2867 = vld [vmem:[%s2819 + $0xbc] sm:$0xf]
        %v2868 = vld [vmem:[#allocation2 + $0x4] sm:$0xff]
        %v2869 = vld [vmem:[#allocation2 + $0xc] sm:$0xff]
        %v2870 = vpack.c.bf16 %v2869, %v2868
        %v2887 = vunpack.c.l.b16 %v2836
        %v2888 = vunpack.c.l.b16 %v2837
        %v2889 = vunpack.c.l.b16 %v2838
        %v2890 = vunpack.c.l.b16 %v2839
        %v2891 = vunpack.c.l.b16 %v2840
        %v2892 = vunpack.c.l.b16 %v2841
        %v2893 = vunpack.c.l.b16 %v2842
        %v2894 = vunpack.c.l.b16 %v2843
        %v2895 = vunpack.c.l.b16 %v2844
        %v2896 = vunpack.c.l.b16 %v2845
        %v2897 = vunpack.c.l.b16 %v2846
        %v2898 = vunpack.c.l.b16 %v2847
        %v2899 = vunpack.c.l.b16 %v2848
        %v2900 = vunpack.c.l.b16 %v2849
        %v2901 = vunpack.c.l.b16 %v2850
        %v2902 = vunpack.c.l.b16 %v2851
        %v2903 = vpack.c.b16 %v2888, %v2887
        %v2904 = vpack.c.b16 %v2890, %v2889
        %v2905 = vpack.c.b16 %v2892, %v2891
        %v2906 = vpack.c.b16 %v2894, %v2893
        %v2907 = vpack.c.b16 %v2896, %v2895
        %v2908 = vpack.c.b16 %v2898, %v2897
        %v2909 = vpack.c.b16 %v2900, %v2899
        %v2910 = vpack.c.b16 %v2902, %v2901
        %2919 = vmatpush.bf16.msra.mxu0 %v2910
        %2920 = vmatpush.bf16.msra.mxu0 %v2909
        %2921 = vmatpush.bf16.msra.mxu0 %v2908
        %2922 = vmatpush.bf16.msra.mxu0 %v2907
        %2923 = vmatpush.bf16.msra.mxu0 %v2906
        %2924 = vmatpush.bf16.msra.mxu0 %v2905
        %2925 = vmatpush.bf16.msra.mxu0 %v2904
        %2926 = vmatpush.bf16.msra.mxu0 %v2903
        %2927 = vmatmul.bf16.gmra.mxu0 %v562
        %v2928 = vpop.f32.mrf.mxu0
        %v2929 = vadd.f32 0.0, %v2928
        %v2930 = vpop.f32.mrf.mxu0
        %v2931 = vadd.f32 0.0, %v2930
        %2932 = vdwg.mxu0
        %v2949 = vunpack.c.l.b16 %v2820
        %v2950 = vunpack.c.l.b16 %v2821
        %v2951 = vunpack.c.l.b16 %v2822
        %v2952 = vunpack.c.l.b16 %v2823
        %v2953 = vunpack.c.l.b16 %v2824
        %v2954 = vunpack.c.l.b16 %v2825
        %v2955 = vunpack.c.l.b16 %v2826
        %v2956 = vunpack.c.l.b16 %v2827
        %v2957 = vunpack.c.l.b16 %v2828
        %v2958 = vunpack.c.l.b16 %v2829
        %v2959 = vunpack.c.l.b16 %v2830
        %v2960 = vunpack.c.l.b16 %v2831
        %v2961 = vunpack.c.l.b16 %v2832
        %v2962 = vunpack.c.l.b16 %v2833
        %v2963 = vunpack.c.l.b16 %v2834
        %v2964 = vunpack.c.l.b16 %v2835
        %v2965 = vpack.c.b16 %v2950, %v2949
        %v2966 = vpack.c.b16 %v2952, %v2951
        %v2967 = vpack.c.b16 %v2954, %v2953
        %v2968 = vpack.c.b16 %v2956, %v2955
        %v2969 = vpack.c.b16 %v2958, %v2957
        %v2970 = vpack.c.b16 %v2960, %v2959
        %v2971 = vpack.c.b16 %v2962, %v2961
        %v2972 = vpack.c.b16 %v2964, %v2963
        %2981 = vmatpush.bf16.msra.mxu0 %v2972
        %2982 = vmatpush.bf16.msra.mxu0 %v2971
        %2983 = vmatpush.bf16.msra.mxu0 %v2970
        %2984 = vmatpush.bf16.msra.mxu0 %v2969
        %2985 = vmatpush.bf16.msra.mxu0 %v2968
        %2986 = vmatpush.bf16.msra.mxu0 %v2967
        %2987 = vmatpush.bf16.msra.mxu0 %v2966
        %2988 = vmatpush.bf16.msra.mxu0 %v2965
        %2989 = vmatmul.bf16.gmra.mxu0 %v2870
        %v2990 = vpop.f32.mrf.mxu0
        %v2991 = vadd.f32 %v2929, %v2990
        %v2992 = vpop.f32.mrf.mxu0
        %v2993 = vadd.f32 %v2931, %v2992
        %2994 = vdwg.mxu0
        %v2995 = vld [vmem:[#allocation2 + $0x1c] sm:$0xff]
        %v2996 = vld [vmem:[#allocation2 + $0x24] sm:$0xff]
        %v2997 = vpack.c.bf16 %v2996, %v2995
        %v3014 = vunpack.c.l.b16 %v2852
        %v3015 = vunpack.c.l.b16 %v2853
        %v3016 = vunpack.c.l.b16 %v2854
        %v3017 = vunpack.c.l.b16 %v2855
        %v3018 = vunpack.c.l.b16 %v2856
        %v3019 = vunpack.c.l.b16 %v2857
        %v3020 = vunpack.c.l.b16 %v2858
        %v3021 = vunpack.c.l.b16 %v2859
        %v3022 = vunpack.c.l.b16 %v2860
        %v3023 = vunpack.c.l.b16 %v2861
        %v3024 = vunpack.c.l.b16 %v2862
        %v3025 = vunpack.c.l.b16 %v2863
        %v3026 = vunpack.c.l.b16 %v2864
        %v3027 = vunpack.c.l.b16 %v2865
        %v3028 = vunpack.c.l.b16 %v2866
        %v3029 = vunpack.c.l.b16 %v2867
        %v3030 = vpack.c.b16 %v3015, %v3014
        %v3031 = vpack.c.b16 %v3017, %v3016
        %v3032 = vpack.c.b16 %v3019, %v3018
        %v3033 = vpack.c.b16 %v3021, %v3020
        %v3034 = vpack.c.b16 %v3023, %v3022
        %v3035 = vpack.c.b16 %v3025, %v3024
        %v3036 = vpack.c.b16 %v3027, %v3026
        %v3037 = vpack.c.b16 %v3029, %v3028
        %3046 = vmatpush.bf16.msra.mxu0 %v3037
        %3047 = vmatpush.bf16.msra.mxu0 %v3036
        %3048 = vmatpush.bf16.msra.mxu0 %v3035
        %3049 = vmatpush.bf16.msra.mxu0 %v3034
        %3050 = vmatpush.bf16.msra.mxu0 %v3033
        %3051 = vmatpush.bf16.msra.mxu0 %v3032
        %3052 = vmatpush.bf16.msra.mxu0 %v3031
        %3053 = vmatpush.bf16.msra.mxu0 %v3030
        %3054 = vmatmul.bf16.gmra.mxu0 %v2997
        %v3055 = vpop.f32.mrf.mxu0
        %v3056 = vadd.f32 0.0, %v3055
        %v3057 = vpop.f32.mrf.mxu0
        %v3058 = vadd.f32 0.0, %v3057
        %3059 = vdwg.mxu0
        %v3060 = vadd.f32 %v2991, %v3056
        %v3061 = vadd.f32 %v2993, %v3058
        %v3062 = vld [vmem:[#allocation12 + $0x3] sm:$0x1]
        %v3063 = vperm.slane %v3062, 0
        %v3064 = vadd.f32 %v3060, %v3063
        %v3065 = vadd.f32 %v3061, %v3063
        %v3066 = vmax.f32 %v3064, 0.0
        %v3067 = vmax.f32 %v3065, 0.0
        %v3068 = vand.u32 2147483647, %v3066
        %vm3069 = vcmp.le.f32.partialorder %v3068, 0.7853982
        %vm3070 = vcmp.lt.s32.totalorder %v3066, 0
        %v3071 = vand.u32 %v3066, 2139095040
        %v3072 = vshrl.u32 %v3071, 23
        %v3073 = vsub.s32 %v3072, 127
        %v3074 = vand.u32 2147483647, %v3066
        %v3075 = vand.u32 %v3074, 8388607
        %v3076 = vor.u32 %v3075, 8388608
        %v3077 = vsub.s32 0, %v3076
        %v3078 = vadd.s32 %v3073, 1
        %vm3079 = vcmp.gt.s32.totalorder %v3078, 0
        %v3080 = vsel %vm3079, %v3078, 0
        %v3081 = vshrl.u32 %v3080, 5
        %v3082 = vand.u32 %v3080, 31
        %v3083 = vsub.s32 32, %v3082
        %v3084 = vshrl.u32 683565275, %v3083
        %v3085 = vshll.u32 683565275, %v3082
        %v3086 = vshrl.u32 2475754826, %v3083
        %v3087 = vor.u32 %v3085, %v3086
        %v3088 = vshll.u32 2475754826, %v3082
        %v3089 = vshrl.u32 2131351028, %v3083
        %v3090 = vor.u32 %v3088, %v3089
        %v3091 = vshll.u32 2131351028, %v3082
        %v3092 = vshrl.u32 2102212464, %v3083
        %v3093 = vor.u32 %v3091, %v3092
        %v3094 = vshll.u32 2102212464, %v3082
        %v3095 = vshrl.u32 920167782, %v3083
        %v3096 = vor.u32 %v3094, %v3095
        %v3097 = vshll.u32 920167782, %v3082
        %v3098 = vshrl.u32 1326507024, %v3083
        %v3099 = vor.u32 %v3097, %v3098
        %vm3100 = vcmp.lt.s32.totalorder %v3081, 1
        %vm3101 = vcmp.lt.s32.totalorder %v3081, 2
        %vm3102 = vcmp.lt.s32.totalorder %v3081, 3
        %vm3103 = vcmp.lt.s32.totalorder %v3081, 4
        %v3104 = vsel %vm3100, %v3084, %v3087
        %v3105 = vsel %vm3103, %v3093, 2102212464
        %v3106 = vsel %vm3102, %v3090, %v3105
        %v3107 = vsel %vm3101, %v3104, %v3106
        %v3108 = vsel %vm3100, %v3087, %v3090
        %v3109 = vsel %vm3103, %v3096, 920167782
        %v3110 = vsel %vm3102, %v3093, %v3109
        %v3111 = vsel %vm3101, %v3108, %v3110
        %v3112 = vsel %vm3100, %v3090, %v3093
        %v3113 = vsel %vm3103, %v3099, 1326507024
        %v3114 = vsel %vm3102, %v3096, %v3113
        %v3115 = vsel %vm3101, %v3112, %v3114
        %v3116 = vshll.u32 %v3076, 8
        %v3117 = vand.u32 %v3116, 65535
        %v3118 = vshrl.u32 %v3116, 16
        %v3119 = vand.u32 %v3115, 65535
        %v3120 = vshrl.u32 %v3115, 16
        %v3121 = vmul.u32 %v3117, %v3119
        %v3122 = vmul.u32 %v3117, %v3120
        %v3123 = vmul.u32 %v3118, %v3119
        %v3124 = vmul.u32 %v3118, %v3120
        %v3125 = vshll.u32 %v3122, 16
        %v3126 = vshrl.u32 %v3122, 16
        %v3127 = vshll.u32 %v3123, 16
        %v3128 = vshrl.u32 %v3123, 16
        %vm3129 = vc.u32 %v3121, %v3125
        %v3130 = vsel %vm3129, 1, 0
        %v3131 = vadd.s32 %v3121, %v3125
        %v3132 = vadd.s32 %v3124, %v3130
        %vm3133 = vc.u32 %v3131, %v3127
        %v3134 = vsel %vm3133, 1, 0
        %v3135 = vadd.s32 %v3131, %v3127
        %v3136 = vadd.s32 %v3132, %v3134
        %v3137 = vadd.s32 %v3136, %v3126
        %v3138 = vadd.s32 %v3137, %v3128
        %v3139 = vand.u32 %v3116, 65535
        %v3140 = vshrl.u32 %v3116, 16
        %v3141 = vand.u32 %v3111, 65535
        %v3142 = vshrl.u32 %v3111, 16
        %v3143 = vmul.u32 %v3139, %v3141
        %v3144 = vmul.u32 %v3139, %v3142
        %v3145 = vmul.u32 %v3140, %v3141
        %v3146 = vmul.u32 %v3140, %v3142
        %v3147 = vshll.u32 %v3144, 16
        %v3148 = vshrl.u32 %v3144, 16
        %v3149 = vshll.u32 %v3145, 16
        %v3150 = vshrl.u32 %v3145, 16
        %vm3151 = vc.u32 %v3143, %v3147
        %v3152 = vsel %vm3151, 1, 0
        %v3153 = vadd.s32 %v3143, %v3147
        %v3154 = vadd.s32 %v3146, %v3152
        %vm3155 = vc.u32 %v3153, %v3149
        %v3156 = vsel %vm3155, 1, 0
        %v3157 = vadd.s32 %v3153, %v3149
        %v3158 = vadd.s32 %v3154, %v3156
        %v3159 = vadd.s32 %v3158, %v3148
        %v3160 = vadd.s32 %v3159, %v3150
        %v3161 = vmul.u32 %v3116, %v3107
        %v3162 = vadd.s32 %v3138, %v3157
        %vm3163 = vc.u32 %v3138, %v3157
        %v3164 = vadd.s32 %v3160, 1
        %v3165 = vsel %vm3163, %v3164, %v3160
        %v3166 = vadd.s32 %v3161, %v3165
        %v3167 = vadd.s32 %v3166, 536870912
        %v3168 = vshrl.u32 %v3167, 30
        %v3169 = vshll.u32 %v3168, 30
        %v3170 = vsub.s32 %v3166, %v3169
        %vm3171 = vcmp.lt.s32.totalorder %v3170, 0
        %v3172 = vsub.s32 0, %v3170
        %v3173 = vsel %vm3171, %v3172, %v3170
        %v3174 = vclz %v3173
        %v3175 = vsub.s32 %v3174, 2
        %vm3176 = vcmp.gt.s32.totalorder 0, %v3175
        %v3177 = vsel %vm3176, 0, %v3175
        %v3178 = vsub.s32 32, %v3177
        %v3179 = vshll.u32 %v3170, %v3177
        %v3180 = vshrl.u32 %v3162, %v3178
        %v3181 = vor.u32 %v3179, %v3180
        %v3182 = vsub.s32 4294967266, %v3177
        %v3183 = vadd.s32 %v3182, 127
        %v3184 = vshll.u32 %v3183, 23
        %v3185 = vor.u32 4788187, %v3184
        %v3186 = vand.u32 2147483647, %v3185
        %v3188 = vcvt.s32.f32 %v3181
        %v3189 = vmul.f32 %v3188, %v3186
        %v3190 = vxor.u32 %v3189, 2147483648
        %v3191 = vsel %vm3070, %v3190, %v3189
        %v3192 = vsub.s32 4, %v3168
        %v3193 = vsel %vm3070, %v3192, %v3168
        %v3194 = vsel %vm3069, %v3066, %v3191
        %v3195 = vsel %vm3069, 0, %v3193
        %v3196 = vmul.f32 %v3194, %v3194
        %v3197 = vmul.f32 %v3196, -0.001358992
        %v3198 = vadd.f32 %v3197, 0.041655596
        %v3199 = vmul.f32 %v3196, %v3198
        %v3200 = vadd.f32 %v3199, -0.4999988
        %v3201 = vmul.f32 %v3196, %v3200
        %v3202 = vadd.f32 1.0, %v3201
        %v3203 = vmul.f32 %v3194, %v3194
        %v3204 = vmul.f32 %v3203, -0.00019511016
        %v3205 = vadd.f32 %v3204, 0.008332121
        %v3206 = vmul.f32 %v3203, %v3205
        %v3207 = vadd.f32 %v3206, -0.16666654
        %v3208 = vmul.f32 %v3203, %v3207
        %v3209 = vadd.f32 %v3208, 1.0
        %v3210 = vmul.f32 %v3209, %v3194
        %vm3211 = vweird.f32 %v3066
        %v3212 = vand.u32 %v3195, 3
        %vm3213 = vcmp.lt.s32.totalorder %v3212, 2
        %vm3214 = vcmp.eq.s32.totalorder %v3212, 0
        %v3215 = vxor.u32 %v3210, 2147483648
        %v3216 = vsel %vm3214, %v3202, %v3215
        %vm3217 = vcmp.eq.s32.totalorder %v3212, 2
        %v3218 = vxor.u32 %v3202, 2147483648
        %v3219 = vsel %vm3217, %v3218, %v3210
        %v3220 = vsel %vm3213, %v3216, %v3219
        %v3221 = vsel %vm3211, nan, %v3220
        %v3222 = vand.u32 2147483647, %v3067
        %vm3223 = vcmp.le.f32.partialorder %v3222, 0.7853982
        %vm3224 = vcmp.lt.s32.totalorder %v3067, 0
        %v3225 = vand.u32 %v3067, 2139095040
        %v3226 = vshrl.u32 %v3225, 23
        %v3227 = vsub.s32 %v3226, 127
        %v3228 = vand.u32 2147483647, %v3067
        %v3229 = vand.u32 %v3228, 8388607
        %v3230 = vor.u32 %v3229, 8388608
        %v3231 = vsub.s32 0, %v3230
        %v3232 = vadd.s32 %v3227, 1
        %vm3233 = vcmp.gt.s32.totalorder %v3232, 0
        %v3234 = vsel %vm3233, %v3232, 0
        %v3235 = vshrl.u32 %v3234, 5
        %v3236 = vand.u32 %v3234, 31
        %v3237 = vsub.s32 32, %v3236
        %v3238 = vshrl.u32 683565275, %v3237
        %v3239 = vshll.u32 683565275, %v3236
        %v3240 = vshrl.u32 2475754826, %v3237
        %v3241 = vor.u32 %v3239, %v3240
        %v3242 = vshll.u32 2475754826, %v3236
        %v3243 = vshrl.u32 2131351028, %v3237
        %v3244 = vor.u32 %v3242, %v3243
        %v3245 = vshll.u32 2131351028, %v3236
        %v3246 = vshrl.u32 2102212464, %v3237
        %v3247 = vor.u32 %v3245, %v3246
        %v3248 = vshll.u32 2102212464, %v3236
        %v3249 = vshrl.u32 920167782, %v3237
        %v3250 = vor.u32 %v3248, %v3249
        %v3251 = vshll.u32 920167782, %v3236
        %v3252 = vshrl.u32 1326507024, %v3237
        %v3253 = vor.u32 %v3251, %v3252
        %vm3254 = vcmp.lt.s32.totalorder %v3235, 1
        %vm3255 = vcmp.lt.s32.totalorder %v3235, 2
        %vm3256 = vcmp.lt.s32.totalorder %v3235, 3
        %vm3257 = vcmp.lt.s32.totalorder %v3235, 4
        %v3258 = vsel %vm3254, %v3238, %v3241
        %v3259 = vsel %vm3257, %v3247, 2102212464
        %v3260 = vsel %vm3256, %v3244, %v3259
        %v3261 = vsel %vm3255, %v3258, %v3260
        %v3262 = vsel %vm3254, %v3241, %v3244
        %v3263 = vsel %vm3257, %v3250, 920167782
        %v3264 = vsel %vm3256, %v3247, %v3263
        %v3265 = vsel %vm3255, %v3262, %v3264
        %v3266 = vsel %vm3254, %v3244, %v3247
        %v3267 = vsel %vm3257, %v3253, 1326507024
        %v3268 = vsel %vm3256, %v3250, %v3267
        %v3269 = vsel %vm3255, %v3266, %v3268
        %v3270 = vshll.u32 %v3230, 8
        %v3271 = vand.u32 %v3270, 65535
        %v3272 = vshrl.u32 %v3270, 16
        %v3273 = vand.u32 %v3269, 65535
        %v3274 = vshrl.u32 %v3269, 16
        %v3275 = vmul.u32 %v3271, %v3273
        %v3276 = vmul.u32 %v3271, %v3274
        %v3277 = vmul.u32 %v3272, %v3273
        %v3278 = vmul.u32 %v3272, %v3274
        %v3279 = vshll.u32 %v3276, 16
        %v3280 = vshrl.u32 %v3276, 16
        %v3281 = vshll.u32 %v3277, 16
        %v3282 = vshrl.u32 %v3277, 16
        %vm3283 = vc.u32 %v3275, %v3279
        %v3284 = vsel %vm3283, 1, 0
        %v3285 = vadd.s32 %v3275, %v3279
        %v3286 = vadd.s32 %v3278, %v3284
        %vm3287 = vc.u32 %v3285, %v3281
        %v3288 = vsel %vm3287, 1, 0
        %v3289 = vadd.s32 %v3285, %v3281
        %v3290 = vadd.s32 %v3286, %v3288
        %v3291 = vadd.s32 %v3290, %v3280
        %v3292 = vadd.s32 %v3291, %v3282
        %v3293 = vand.u32 %v3270, 65535
        %v3294 = vshrl.u32 %v3270, 16
        %v3295 = vand.u32 %v3265, 65535
        %v3296 = vshrl.u32 %v3265, 16
        %v3297 = vmul.u32 %v3293, %v3295
        %v3298 = vmul.u32 %v3293, %v3296
        %v3299 = vmul.u32 %v3294, %v3295
        %v3300 = vmul.u32 %v3294, %v3296
        %v3301 = vshll.u32 %v3298, 16
        %v3302 = vshrl.u32 %v3298, 16
        %v3303 = vshll.u32 %v3299, 16
        %v3304 = vshrl.u32 %v3299, 16
        %vm3305 = vc.u32 %v3297, %v3301
        %v3306 = vsel %vm3305, 1, 0
        %v3307 = vadd.s32 %v3297, %v3301
        %v3308 = vadd.s32 %v3300, %v3306
        %vm3309 = vc.u32 %v3307, %v3303
        %v3310 = vsel %vm3309, 1, 0
        %v3311 = vadd.s32 %v3307, %v3303
        %v3312 = vadd.s32 %v3308, %v3310
        %v3313 = vadd.s32 %v3312, %v3302
        %v3314 = vadd.s32 %v3313, %v3304
        %v3315 = vmul.u32 %v3270, %v3261
        %v3316 = vadd.s32 %v3292, %v3311
        %vm3317 = vc.u32 %v3292, %v3311
        %v3318 = vadd.s32 %v3314, 1
        %v3319 = vsel %vm3317, %v3318, %v3314
        %v3320 = vadd.s32 %v3315, %v3319
        %v3321 = vadd.s32 %v3320, 536870912
        %v3322 = vshrl.u32 %v3321, 30
        %v3323 = vshll.u32 %v3322, 30
        %v3324 = vsub.s32 %v3320, %v3323
        %vm3325 = vcmp.lt.s32.totalorder %v3324, 0
        %v3326 = vsub.s32 0, %v3324
        %v3327 = vsel %vm3325, %v3326, %v3324
        %v3328 = vclz %v3327
        %v3329 = vsub.s32 %v3328, 2
        %vm3330 = vcmp.gt.s32.totalorder 0, %v3329
        %v3331 = vsel %vm3330, 0, %v3329
        %v3332 = vsub.s32 32, %v3331
        %v3333 = vshll.u32 %v3324, %v3331
        %v3334 = vshrl.u32 %v3316, %v3332
        %v3335 = vor.u32 %v3333, %v3334
        %v3336 = vsub.s32 4294967266, %v3331
        %v3337 = vadd.s32 %v3336, 127
        %v3338 = vshll.u32 %v3337, 23
        %v3339 = vor.u32 4788187, %v3338
        %v3340 = vand.u32 2147483647, %v3339
        %v3342 = vcvt.s32.f32 %v3335
        %v3343 = vmul.f32 %v3342, %v3340
        %v3344 = vxor.u32 %v3343, 2147483648
        %v3345 = vsel %vm3224, %v3344, %v3343
        %v3346 = vsub.s32 4, %v3322
        %v3347 = vsel %vm3224, %v3346, %v3322
        %v3348 = vsel %vm3223, %v3067, %v3345
        %v3349 = vsel %vm3223, 0, %v3347
        %v3350 = vmul.f32 %v3348, %v3348
        %v3351 = vmul.f32 %v3350, -0.001358992
        %v3352 = vadd.f32 %v3351, 0.041655596
        %v3353 = vmul.f32 %v3350, %v3352
        %v3354 = vadd.f32 %v3353, -0.4999988
        %v3355 = vmul.f32 %v3350, %v3354
        %v3356 = vadd.f32 1.0, %v3355
        %v3357 = vmul.f32 %v3348, %v3348
        %v3358 = vmul.f32 %v3357, -0.00019511016
        %v3359 = vadd.f32 %v3358, 0.008332121
        %v3360 = vmul.f32 %v3357, %v3359
        %v3361 = vadd.f32 %v3360, -0.16666654
        %v3362 = vmul.f32 %v3357, %v3361
        %v3363 = vadd.f32 %v3362, 1.0
        %v3364 = vmul.f32 %v3363, %v3348
        %vm3365 = vweird.f32 %v3067
        %v3366 = vand.u32 %v3349, 3
        %vm3367 = vcmp.lt.s32.totalorder %v3366, 2
        %vm3368 = vcmp.eq.s32.totalorder %v3366, 0
        %v3369 = vxor.u32 %v3364, 2147483648
        %v3370 = vsel %vm3368, %v3356, %v3369
        %vm3371 = vcmp.eq.s32.totalorder %v3366, 2
        %v3372 = vxor.u32 %v3356, 2147483648
        %v3373 = vsel %vm3371, %v3372, %v3364
        %v3374 = vsel %vm3367, %v3370, %v3373
        %v3375 = vsel %vm3365, nan, %v3374
        %v3376 = vmul.f32 %v3066, %v3221
        %v3377 = vmul.f32 %v3067, %v3375
        %v3378 = vpack.c.bf16 %v3377, %v3376
        %v3379 = vand.u32 2147483647, %v3066
        %vm3380 = vcmp.le.f32.partialorder %v3379, 0.7853982
        %vm3381 = vcmp.lt.s32.totalorder %v3066, 0
        %v3382 = vand.u32 %v3066, 2139095040
        %v3383 = vshrl.u32 %v3382, 23
        %v3384 = vsub.s32 %v3383, 127
        %v3385 = vand.u32 2147483647, %v3066
        %v3386 = vand.u32 %v3385, 8388607
        %v3387 = vor.u32 %v3386, 8388608
        %v3388 = vsub.s32 0, %v3387
        %v3389 = vadd.s32 %v3384, 1
        %vm3390 = vcmp.gt.s32.totalorder %v3389, 0
        %v3391 = vsel %vm3390, %v3389, 0
        %v3392 = vshrl.u32 %v3391, 5
        %v3393 = vand.u32 %v3391, 31
        %v3394 = vsub.s32 32, %v3393
        %v3395 = vshrl.u32 683565275, %v3394
        %v3396 = vshll.u32 683565275, %v3393
        %v3397 = vshrl.u32 2475754826, %v3394
        %v3398 = vor.u32 %v3396, %v3397
        %v3399 = vshll.u32 2475754826, %v3393
        %v3400 = vshrl.u32 2131351028, %v3394
        %v3401 = vor.u32 %v3399, %v3400
        %v3402 = vshll.u32 2131351028, %v3393
        %v3403 = vshrl.u32 2102212464, %v3394
        %v3404 = vor.u32 %v3402, %v3403
        %v3405 = vshll.u32 2102212464, %v3393
        %v3406 = vshrl.u32 920167782, %v3394
        %v3407 = vor.u32 %v3405, %v3406
        %v3408 = vshll.u32 920167782, %v3393
        %v3409 = vshrl.u32 1326507024, %v3394
        %v3410 = vor.u32 %v3408, %v3409
        %vm3411 = vcmp.lt.s32.totalorder %v3392, 1
        %vm3412 = vcmp.lt.s32.totalorder %v3392, 2
        %vm3413 = vcmp.lt.s32.totalorder %v3392, 3
        %vm3414 = vcmp.lt.s32.totalorder %v3392, 4
        %v3415 = vsel %vm3411, %v3395, %v3398
        %v3416 = vsel %vm3414, %v3404, 2102212464
        %v3417 = vsel %vm3413, %v3401, %v3416
        %v3418 = vsel %vm3412, %v3415, %v3417
        %v3419 = vsel %vm3411, %v3398, %v3401
        %v3420 = vsel %vm3414, %v3407, 920167782
        %v3421 = vsel %vm3413, %v3404, %v3420
        %v3422 = vsel %vm3412, %v3419, %v3421
        %v3423 = vsel %vm3411, %v3401, %v3404
        %v3424 = vsel %vm3414, %v3410, 1326507024
        %v3425 = vsel %vm3413, %v3407, %v3424
        %v3426 = vsel %vm3412, %v3423, %v3425
        %v3427 = vshll.u32 %v3387, 8
        %v3428 = vand.u32 %v3427, 65535
        %v3429 = vshrl.u32 %v3427, 16
        %v3430 = vand.u32 %v3426, 65535
        %v3431 = vshrl.u32 %v3426, 16
        %v3432 = vmul.u32 %v3428, %v3430
        %v3433 = vmul.u32 %v3428, %v3431
        %v3434 = vmul.u32 %v3429, %v3430
        %v3435 = vmul.u32 %v3429, %v3431
        %v3436 = vshll.u32 %v3433, 16
        %v3437 = vshrl.u32 %v3433, 16
        %v3438 = vshll.u32 %v3434, 16
        %v3439 = vshrl.u32 %v3434, 16
        %vm3440 = vc.u32 %v3432, %v3436
        %v3441 = vsel %vm3440, 1, 0
        %v3442 = vadd.s32 %v3432, %v3436
        %v3443 = vadd.s32 %v3435, %v3441
        %vm3444 = vc.u32 %v3442, %v3438
        %v3445 = vsel %vm3444, 1, 0
        %v3446 = vadd.s32 %v3442, %v3438
        %v3447 = vadd.s32 %v3443, %v3445
        %v3448 = vadd.s32 %v3447, %v3437
        %v3449 = vadd.s32 %v3448, %v3439
        %v3450 = vand.u32 %v3427, 65535
        %v3451 = vshrl.u32 %v3427, 16
        %v3452 = vand.u32 %v3422, 65535
        %v3453 = vshrl.u32 %v3422, 16
        %v3454 = vmul.u32 %v3450, %v3452
        %v3455 = vmul.u32 %v3450, %v3453
        %v3456 = vmul.u32 %v3451, %v3452
        %v3457 = vmul.u32 %v3451, %v3453
        %v3458 = vshll.u32 %v3455, 16
        %v3459 = vshrl.u32 %v3455, 16
        %v3460 = vshll.u32 %v3456, 16
        %v3461 = vshrl.u32 %v3456, 16
        %vm3462 = vc.u32 %v3454, %v3458
        %v3463 = vsel %vm3462, 1, 0
        %v3464 = vadd.s32 %v3454, %v3458
        %v3465 = vadd.s32 %v3457, %v3463
        %vm3466 = vc.u32 %v3464, %v3460
        %v3467 = vsel %vm3466, 1, 0
        %v3468 = vadd.s32 %v3464, %v3460
        %v3469 = vadd.s32 %v3465, %v3467
        %v3470 = vadd.s32 %v3469, %v3459
        %v3471 = vadd.s32 %v3470, %v3461
        %v3472 = vmul.u32 %v3427, %v3418
        %v3473 = vadd.s32 %v3449, %v3468
        %vm3474 = vc.u32 %v3449, %v3468
        %v3475 = vadd.s32 %v3471, 1
        %v3476 = vsel %vm3474, %v3475, %v3471
        %v3477 = vadd.s32 %v3472, %v3476
        %v3478 = vadd.s32 %v3477, 536870912
        %v3479 = vshrl.u32 %v3478, 30
        %v3480 = vshll.u32 %v3479, 30
        %v3481 = vsub.s32 %v3477, %v3480
        %vm3482 = vcmp.lt.s32.totalorder %v3481, 0
        %v3483 = vsub.s32 0, %v3481
        %v3484 = vsel %vm3482, %v3483, %v3481
        %v3485 = vclz %v3484
        %v3486 = vsub.s32 %v3485, 2
        %vm3487 = vcmp.gt.s32.totalorder 0, %v3486
        %v3488 = vsel %vm3487, 0, %v3486
        %v3489 = vsub.s32 32, %v3488
        %v3490 = vshll.u32 %v3481, %v3488
        %v3491 = vshrl.u32 %v3473, %v3489
        %v3492 = vor.u32 %v3490, %v3491
        %v3493 = vsub.s32 4294967266, %v3488
        %v3494 = vadd.s32 %v3493, 127
        %v3495 = vshll.u32 %v3494, 23
        %v3496 = vor.u32 4788187, %v3495
        %v3497 = vand.u32 2147483647, %v3496
        %v3499 = vcvt.s32.f32 %v3492
        %v3500 = vmul.f32 %v3499, %v3497
        %v3501 = vxor.u32 %v3500, 2147483648
        %v3502 = vsel %vm3381, %v3501, %v3500
        %v3503 = vsub.s32 4, %v3479
        %v3504 = vsel %vm3381, %v3503, %v3479
        %v3505 = vsel %vm3380, %v3066, %v3502
        %v3506 = vsel %vm3380, 0, %v3504
        %v3507 = vmul.f32 %v3505, %v3505
        %v3508 = vmul.f32 %v3507, -0.001358992
        %v3509 = vadd.f32 %v3508, 0.041655596
        %v3510 = vmul.f32 %v3507, %v3509
        %v3511 = vadd.f32 %v3510, -0.4999988
        %v3512 = vmul.f32 %v3507, %v3511
        %v3513 = vadd.f32 1.0, %v3512
        %v3514 = vmul.f32 %v3505, %v3505
        %v3515 = vmul.f32 %v3514, -0.00019511016
        %v3516 = vadd.f32 %v3515, 0.008332121
        %v3517 = vmul.f32 %v3514, %v3516
        %v3518 = vadd.f32 %v3517, -0.16666654
        %v3519 = vmul.f32 %v3514, %v3518
        %v3520 = vadd.f32 %v3519, 1.0
        %v3521 = vmul.f32 %v3520, %v3505
        %vm3522 = vweird.f32 %v3066
        %v3523 = vadd.s32 %v3506, 3
        %v3524 = vand.u32 %v3523, 3
        %vm3525 = vcmp.lt.s32.totalorder %v3524, 2
        %vm3526 = vcmp.eq.s32.totalorder %v3524, 0
        %v3527 = vxor.u32 %v3521, 2147483648
        %v3528 = vsel %vm3526, %v3513, %v3527
        %vm3529 = vcmp.eq.s32.totalorder %v3524, 2
        %v3530 = vxor.u32 %v3513, 2147483648
        %v3531 = vsel %vm3529, %v3530, %v3521
        %v3532 = vsel %vm3525, %v3528, %v3531
        %v3533 = vsel %vm3522, nan, %v3532
        %v3534 = vand.u32 2147483647, %v3067
        %vm3535 = vcmp.le.f32.partialorder %v3534, 0.7853982
        %vm3536 = vcmp.lt.s32.totalorder %v3067, 0
        %v3537 = vand.u32 %v3067, 2139095040
        %v3538 = vshrl.u32 %v3537, 23
        %v3539 = vsub.s32 %v3538, 127
        %v3540 = vand.u32 2147483647, %v3067
        %v3541 = vand.u32 %v3540, 8388607
        %v3542 = vor.u32 %v3541, 8388608
        %v3543 = vsub.s32 0, %v3542
        %v3544 = vadd.s32 %v3539, 1
        %vm3545 = vcmp.gt.s32.totalorder %v3544, 0
        %v3546 = vsel %vm3545, %v3544, 0
        %v3547 = vshrl.u32 %v3546, 5
        %v3548 = vand.u32 %v3546, 31
        %v3549 = vsub.s32 32, %v3548
        %v3550 = vshrl.u32 683565275, %v3549
        %v3551 = vshll.u32 683565275, %v3548
        %v3552 = vshrl.u32 2475754826, %v3549
        %v3553 = vor.u32 %v3551, %v3552
        %v3554 = vshll.u32 2475754826, %v3548
        %v3555 = vshrl.u32 2131351028, %v3549
        %v3556 = vor.u32 %v3554, %v3555
        %v3557 = vshll.u32 2131351028, %v3548
        %v3558 = vshrl.u32 2102212464, %v3549
        %v3559 = vor.u32 %v3557, %v3558
        %v3560 = vshll.u32 2102212464, %v3548
        %v3561 = vshrl.u32 920167782, %v3549
        %v3562 = vor.u32 %v3560, %v3561
        %v3563 = vshll.u32 920167782, %v3548
        %v3564 = vshrl.u32 1326507024, %v3549
        %v3565 = vor.u32 %v3563, %v3564
        %vm3566 = vcmp.lt.s32.totalorder %v3547, 1
        %vm3567 = vcmp.lt.s32.totalorder %v3547, 2
        %vm3568 = vcmp.lt.s32.totalorder %v3547, 3
        %vm3569 = vcmp.lt.s32.totalorder %v3547, 4
        %v3570 = vsel %vm3566, %v3550, %v3553
        %v3571 = vsel %vm3569, %v3559, 2102212464
        %v3572 = vsel %vm3568, %v3556, %v3571
        %v3573 = vsel %vm3567, %v3570, %v3572
        %v3574 = vsel %vm3566, %v3553, %v3556
        %v3575 = vsel %vm3569, %v3562, 920167782
        %v3576 = vsel %vm3568, %v3559, %v3575
        %v3577 = vsel %vm3567, %v3574, %v3576
        %v3578 = vsel %vm3566, %v3556, %v3559
        %v3579 = vsel %vm3569, %v3565, 1326507024
        %v3580 = vsel %vm3568, %v3562, %v3579
        %v3581 = vsel %vm3567, %v3578, %v3580
        %v3582 = vshll.u32 %v3542, 8
        %v3583 = vand.u32 %v3582, 65535
        %v3584 = vshrl.u32 %v3582, 16
        %v3585 = vand.u32 %v3581, 65535
        %v3586 = vshrl.u32 %v3581, 16
        %v3587 = vmul.u32 %v3583, %v3585
        %v3588 = vmul.u32 %v3583, %v3586
        %v3589 = vmul.u32 %v3584, %v3585
        %v3590 = vmul.u32 %v3584, %v3586
        %v3591 = vshll.u32 %v3588, 16
        %v3592 = vshrl.u32 %v3588, 16
        %v3593 = vshll.u32 %v3589, 16
        %v3594 = vshrl.u32 %v3589, 16
        %vm3595 = vc.u32 %v3587, %v3591
        %v3596 = vsel %vm3595, 1, 0
        %v3597 = vadd.s32 %v3587, %v3591
        %v3598 = vadd.s32 %v3590, %v3596
        %vm3599 = vc.u32 %v3597, %v3593
        %v3600 = vsel %vm3599, 1, 0
        %v3601 = vadd.s32 %v3597, %v3593
        %v3602 = vadd.s32 %v3598, %v3600
        %v3603 = vadd.s32 %v3602, %v3592
        %v3604 = vadd.s32 %v3603, %v3594
        %v3605 = vand.u32 %v3582, 65535
        %v3606 = vshrl.u32 %v3582, 16
        %v3607 = vand.u32 %v3577, 65535
        %v3608 = vshrl.u32 %v3577, 16
        %v3609 = vmul.u32 %v3605, %v3607
        %v3610 = vmul.u32 %v3605, %v3608
        %v3611 = vmul.u32 %v3606, %v3607
        %v3612 = vmul.u32 %v3606, %v3608
        %v3613 = vshll.u32 %v3610, 16
        %v3614 = vshrl.u32 %v3610, 16
        %v3615 = vshll.u32 %v3611, 16
        %v3616 = vshrl.u32 %v3611, 16
        %vm3617 = vc.u32 %v3609, %v3613
        %v3618 = vsel %vm3617, 1, 0
        %v3619 = vadd.s32 %v3609, %v3613
        %v3620 = vadd.s32 %v3612, %v3618
        %vm3621 = vc.u32 %v3619, %v3615
        %v3622 = vsel %vm3621, 1, 0
        %v3623 = vadd.s32 %v3619, %v3615
        %v3624 = vadd.s32 %v3620, %v3622
        %v3625 = vadd.s32 %v3624, %v3614
        %v3626 = vadd.s32 %v3625, %v3616
        %v3627 = vmul.u32 %v3582, %v3573
        %v3628 = vadd.s32 %v3604, %v3623
        %vm3629 = vc.u32 %v3604, %v3623
        %v3630 = vadd.s32 %v3626, 1
        %v3631 = vsel %vm3629, %v3630, %v3626
        %v3632 = vadd.s32 %v3627, %v3631
        %v3633 = vadd.s32 %v3632, 536870912
        %v3634 = vshrl.u32 %v3633, 30
        %v3635 = vshll.u32 %v3634, 30
        %v3636 = vsub.s32 %v3632, %v3635
        %vm3637 = vcmp.lt.s32.totalorder %v3636, 0
        %v3638 = vsub.s32 0, %v3636
        %v3639 = vsel %vm3637, %v3638, %v3636
        %v3640 = vclz %v3639
        %v3641 = vsub.s32 %v3640, 2
        %vm3642 = vcmp.gt.s32.totalorder 0, %v3641
        %v3643 = vsel %vm3642, 0, %v3641
        %v3644 = vsub.s32 32, %v3643
        %v3645 = vshll.u32 %v3636, %v3643
        %v3646 = vshrl.u32 %v3628, %v3644
        %v3647 = vor.u32 %v3645, %v3646
        %v3648 = vsub.s32 4294967266, %v3643
        %v3649 = vadd.s32 %v3648, 127
        %v3650 = vshll.u32 %v3649, 23
        %v3651 = vor.u32 4788187, %v3650
        %v3652 = vand.u32 2147483647, %v3651
        %v3654 = vcvt.s32.f32 %v3647
        %v3655 = vmul.f32 %v3654, %v3652
        %v3656 = vxor.u32 %v3655, 2147483648
        %v3657 = vsel %vm3536, %v3656, %v3655
        %v3658 = vsub.s32 4, %v3634
        %v3659 = vsel %vm3536, %v3658, %v3634
        %v3660 = vsel %vm3535, %v3067, %v3657
        %v3661 = vsel %vm3535, 0, %v3659
        %v3662 = vmul.f32 %v3660, %v3660
        %v3663 = vmul.f32 %v3662, -0.001358992
        %v3664 = vadd.f32 %v3663, 0.041655596
        %v3665 = vmul.f32 %v3662, %v3664
        %v3666 = vadd.f32 %v3665, -0.4999988
        %v3667 = vmul.f32 %v3662, %v3666
        %v3668 = vadd.f32 1.0, %v3667
        %v3669 = vmul.f32 %v3660, %v3660
        %v3670 = vmul.f32 %v3669, -0.00019511016
        %v3671 = vadd.f32 %v3670, 0.008332121
        %v3672 = vmul.f32 %v3669, %v3671
        %v3673 = vadd.f32 %v3672, -0.16666654
        %v3674 = vmul.f32 %v3669, %v3673
        %v3675 = vadd.f32 %v3674, 1.0
        %v3676 = vmul.f32 %v3675, %v3660
        %vm3677 = vweird.f32 %v3067
        %v3678 = vadd.s32 %v3661, 3
        %v3679 = vand.u32 %v3678, 3
        %vm3680 = vcmp.lt.s32.totalorder %v3679, 2
        %vm3681 = vcmp.eq.s32.totalorder %v3679, 0
        %v3682 = vxor.u32 %v3676, 2147483648
        %v3683 = vsel %vm3681, %v3668, %v3682
        %vm3684 = vcmp.eq.s32.totalorder %v3679, 2
        %v3685 = vxor.u32 %v3668, 2147483648
        %v3686 = vsel %vm3684, %v3685, %v3676
        %v3687 = vsel %vm3680, %v3683, %v3686
        %v3688 = vsel %vm3677, nan, %v3687
        %v3689 = vmul.f32 %v3066, %v3533
        %v3690 = vmul.f32 %v3067, %v3688
        %v3691 = vpack.c.bf16 %v3690, %v3689
        %3692 = vmatpush.bf16.msra.mxu0 %v1424
        %3693 = vmatpush.bf16.msra.mxu0 %v1423
        %3694 = vmatpush.bf16.msra.mxu0 %v1422
        %3695 = vmatpush.bf16.msra.mxu0 %v1421
        %3696 = vmatpush.bf16.msra.mxu0 %v1420
        %3697 = vmatpush.bf16.msra.mxu0 %v1419
        %3698 = vmatpush.bf16.msra.mxu0 %v1418
        %3699 = vmatpush.bf16.msra.mxu0 %v1417
        %3700 = vmatmul.bf16.gmra.mxu0 %v3378
        %v3701 = vpop.f32.mrf.mxu0
        %v3702 = vadd.f32 %v1384, %v3701
        %v3703 = vpop.f32.mrf.mxu0
        %v3704 = vadd.f32 %v1384, %v3703
        %3705 = vdwg.mxu0
        %v3706 = vmax.f32 %v3702, 0.0
        %v3707 = vmax.f32 %v3704, 0.0
        %3708 = vmatpush.bf16.msra.mxu0 %v1489
        %3709 = vmatpush.bf16.msra.mxu0 %v1488
        %3710 = vmatpush.bf16.msra.mxu0 %v1487
        %3711 = vmatpush.bf16.msra.mxu0 %v1486
        %3712 = vmatpush.bf16.msra.mxu0 %v1485
        %3713 = vmatpush.bf16.msra.mxu0 %v1484
        %3714 = vmatpush.bf16.msra.mxu0 %v1483
        %3715 = vmatpush.bf16.msra.mxu0 %v1482
        %3716 = vmatmul.bf16.gmra.mxu0 %v3691
        %v3717 = vpop.f32.mrf.mxu0
        %v3718 = vadd.f32 %v1449, %v3717
        %v3719 = vpop.f32.mrf.mxu0
        %v3720 = vadd.f32 %v1449, %v3719
        %3721 = vdwg.mxu0
        %v3722 = vmax.f32 %v3718, 0.0
        %v3723 = vmax.f32 %v3720, 0.0
        %v3724 = vmul.f32 %v3722, %v3706
        %v3725 = vmul.f32 %v3723, %v3707
        %v3726 = vpack.c.bf16 %v3725, %v3724
        %3727 = vmatpush.bf16.msra.mxu0 %v1557
        %3728 = vmatpush.bf16.msra.mxu0 %v1556
        %3729 = vmatpush.bf16.msra.mxu0 %v1555
        %3730 = vmatpush.bf16.msra.mxu0 %v1554
        %3731 = vmatpush.bf16.msra.mxu0 %v1553
        %3732 = vmatpush.bf16.msra.mxu0 %v1552
        %3733 = vmatpush.bf16.msra.mxu0 %v1551
        %3734 = vmatpush.bf16.msra.mxu0 %v1550
        %3735 = vmatmul.bf16.gmra.mxu0 %v3726
        %v3736 = vpop.f32.mrf.mxu0
        %v3737 = vadd.f32 %v1517, %v3736
        %v3738 = vpop.f32.mrf.mxu0
        %v3739 = vadd.f32 %v1517, %v3738
        %3740 = vdwg.mxu0
        %v3741 = vmax.f32 %v3737, 0.0
        %v3742 = vmax.f32 %v3739, 0.0
        %v3743 = vadd.f32 %v3722, %v3706
        %v3744 = vadd.f32 %v3723, %v3707
        %v3745 = vpack.c.bf16 %v3744, %v3743
        %3746 = vmatpush.bf16.msra.mxu0 %v1625
        %3747 = vmatpush.bf16.msra.mxu0 %v1624
        %3748 = vmatpush.bf16.msra.mxu0 %v1623
        %3749 = vmatpush.bf16.msra.mxu0 %v1622
        %3750 = vmatpush.bf16.msra.mxu0 %v1621
        %3751 = vmatpush.bf16.msra.mxu0 %v1620
        %3752 = vmatpush.bf16.msra.mxu0 %v1619
        %3753 = vmatpush.bf16.msra.mxu0 %v1618
        %3754 = vmatmul.bf16.gmra.mxu0 %v3745
        %v3755 = vpop.f32.mrf.mxu0
        %v3756 = vadd.f32 %v1585, %v3755
        %v3757 = vpop.f32.mrf.mxu0
        %v3758 = vadd.f32 %v1585, %v3757
        %3759 = vdwg.mxu0
        %v3760 = vmax.f32 %v3756, 0.0
        %v3761 = vmax.f32 %v3758, 0.0
        %v3762 = vadd.f32 %v3760, %v3741
        %v3763 = vadd.f32 %v3761, %v3742
        %v3764 = vpack.c.bf16 %v3763, %v3762
        %v3765 = vld [vmem:[#allocation11 + $0x80] sm:$0xf]
        %v3766 = vld [vmem:[#allocation11 + $0x84] sm:$0xf]
        %v3767 = vld [vmem:[#allocation11 + $0x88] sm:$0xf]
        %v3768 = vld [vmem:[#allocation11 + $0x8c] sm:$0xf]
        %v3769 = vld [vmem:[#allocation11 + $0x90] sm:$0xf]
        %v3770 = vld [vmem:[#allocation11 + $0x94] sm:$0xf]
        %v3771 = vld [vmem:[#allocation11 + $0x98] sm:$0xf]
        %v3772 = vld [vmem:[#allocation11 + $0x9c] sm:$0xf]
        %v3773 = vld [vmem:[#allocation11 + $0xa0] sm:$0xf]
        %v3774 = vld [vmem:[#allocation11 + $0xa4] sm:$0xf]
        %v3775 = vld [vmem:[#allocation11 + $0xa8] sm:$0xf]
        %v3776 = vld [vmem:[#allocation11 + $0xac] sm:$0xf]
        %v3777 = vld [vmem:[#allocation11 + $0xb0] sm:$0xf]
        %v3778 = vld [vmem:[#allocation11 + $0xb4] sm:$0xf]
        %v3779 = vld [vmem:[#allocation11 + $0xb8] sm:$0xf]
        %v3780 = vld [vmem:[#allocation11 + $0xbc] sm:$0xf]
        %v3797 = vunpack.c.l.b16 %v3765
        %v3798 = vunpack.c.l.b16 %v3766
        %v3799 = vunpack.c.l.b16 %v3767
        %v3800 = vunpack.c.l.b16 %v3768
        %v3801 = vunpack.c.l.b16 %v3769
        %v3802 = vunpack.c.l.b16 %v3770
        %v3803 = vunpack.c.l.b16 %v3771
        %v3804 = vunpack.c.l.b16 %v3772
        %v3805 = vunpack.c.l.b16 %v3773
        %v3806 = vunpack.c.l.b16 %v3774
        %v3807 = vunpack.c.l.b16 %v3775
        %v3808 = vunpack.c.l.b16 %v3776
        %v3809 = vunpack.c.l.b16 %v3777
        %v3810 = vunpack.c.l.b16 %v3778
        %v3811 = vunpack.c.l.b16 %v3779
        %v3812 = vunpack.c.l.b16 %v3780
        %v3813 = vpack.c.b16 %v3798, %v3797
        %v3814 = vpack.c.b16 %v3800, %v3799
        %v3815 = vpack.c.b16 %v3802, %v3801
        %v3816 = vpack.c.b16 %v3804, %v3803
        %v3817 = vpack.c.b16 %v3806, %v3805
        %v3818 = vpack.c.b16 %v3808, %v3807
        %v3819 = vpack.c.b16 %v3810, %v3809
        %v3820 = vpack.c.b16 %v3812, %v3811
        %3829 = vmatpush.bf16.msra.mxu0 %v3820
        %3830 = vmatpush.bf16.msra.mxu0 %v3819
        %3831 = vmatpush.bf16.msra.mxu0 %v3818
        %3832 = vmatpush.bf16.msra.mxu0 %v3817
        %3833 = vmatpush.bf16.msra.mxu0 %v3816
        %3834 = vmatpush.bf16.msra.mxu0 %v3815
        %3835 = vmatpush.bf16.msra.mxu0 %v3814
        %3836 = vmatpush.bf16.msra.mxu0 %v3813
        %3837 = vmatmul.bf16.gmra.mxu0 %v3764
        %v3838 = vpop.f32.mrf.mxu0
        %v3839 = vadd.f32 0.0, %v3838
        %v3840 = vpop.f32.mrf.mxu0
        %v3841 = vadd.f32 0.0, %v3840
        %3842 = vdwg.mxu0
        %v3843 = vadd.f32 %v2817, %v3839
        %v3844 = vadd.f32 %v2818, %v3841
        %v3845 = vld [vmem:[#allocation12 + $0x8] sm:$0x1]
        %v3846 = vperm.slane %v3845, 0
        %v3847 = vadd.f32 %v3843, %v3846
        %v3848 = vadd.f32 %v3844, %v3846
        %v3849 = vmax.f32 %v3847, 0.0
        %v3850 = vmax.f32 %v3848, 0.0
        %3851 = vst [vmem:[%s354] sm:$0xff] %v3849
        %3852 = vst [vmem:[%s354 + $0x8] sm:$0xff] %v3850
        %s3853 = sand.u32 %s165, 1
        %s3854 = scalar_lea.sflag [#allocation5], %s3853
        %s3855 = sand.u32 %s165, 1
        %s3856 = smul.addr %s3855, 16
        %s3857 = scalar_lea.vmem [#allocation14], %s3856
        // Predicated region
        $region69: #{tpu_custom_call.1} parent=43 // pred_check
          %p3858 = pneg %p175
        $region70: #{tpu_custom_call.1} parent=43 // pred_check_branch
          %3860 = sbr.rel (%p3858) target = $region72
        $region71: #{tpu_custom_call.1} parent=43 // pred_region
          %s3861 = smul.u32 2, %s26
          %3863 = vsyncadd %s3854, 0
          %s3864 = smul.addr %s3861, 8
          %s3865 = scalar_lea.hbm %s6, %s3864
          %s3866 = sshll.u32 %s3857, 4
          %s3867 = int_to_ptr.vmem [resolvable:$true] %s3866
          %s3868 = sshll.u32 %s3865, 4
          %s3869 = int_to_ptr.hbm [resolvable:$true] %s3868
          %3874 = dma.vmem_to_hbm [thread:$0]  %s3867, 256, %s3869, %s3854, 128, 128, 8
        $region72: #{tpu_custom_call.1} parent=43 // pred_fallthru
          _
      $region44: #{tpu_custom_call.1} parent=5 // pred_fallthru
        _
      %p3875 = scmp.le.s32.totalorder 2, %s21
      // Predicated region
      $region73: #{tpu_custom_call.1} parent=5 // pred_check
        %p3876 = pneg %p3875
      $region74: #{tpu_custom_call.1} parent=5 // pred_check_branch
        %3878 = sbr.rel (%p3876) target = $region76
      $region75: #{tpu_custom_call.1} parent=5 // pred_region
        %s3879 = ssub.s32 %s21, 2
        // Predicated region
        $region77: #{tpu_custom_call.1} parent=75 // pred_check
          %p3880 = pneg %p181
        $region78: #{tpu_custom_call.1} parent=75 // pred_check_branch
          %3882 = sbr.rel (%p3880) target = $region80
        $region79: #{tpu_custom_call.1} parent=75 // pred_region
          %s3883 = sand.u32 %s166, 1
          %s3884 = scalar_lea.sflag [#allocation5], %s3883
          %s3885 = sand.u32 %s166, 1
          %s3886 = smul.addr %s3885, 16
          %s3887 = scalar_lea.vmem [#allocation14], %s3886
          %3889 = dma.done %s3884, 256
        $region80: #{tpu_custom_call.1} parent=75 // pred_fallthru
          _
      $region76: #{tpu_custom_call.1} parent=5 // pred_fallthru
        _
    $region6: #{tpu_custom_call.1} parent=1 // loop_footer
      %s25 = sadd.s32 1, %s21
    $region7: #{tpu_custom_call.1} parent=1 // loop_footer_branch
      %20 = sbr.rel target = $region3
    $region8: #{tpu_custom_call.1} parent=1 // loop_exit
      _
    %3890 = vsyncpa [#allocation4], 1
    %s3891 = scalar_lea.sflag [#allocation4], 1
    %3892 = vsyncpa %s3891, 1
    %3893 = vsyncpa [#allocation7], 1
    %3894 = vsyncpa [#allocation10], 1
    %3895 = vsyncpa [#allocation13], 1
    %3896 = vsyncpa [#allocation5], 1
    %s3897 = scalar_lea.sflag [#allocation5], 1
    %3898 = vsyncpa %s3897, 1

</llo_original>
